<compile_context>
chip_gen: v6e
topology: v6e:2x2x1
jax: 0.10.0
libtpu: 0.0.40
codegen_flags: <defaults>
</compile_context>

<pallas_src>
import math

import jax
import jax.numpy as jnp
from jax.experimental import pallas as pl
from jax.experimental.pallas import tpu as pltpu


# ----------------------------- model dims -----------------------------------
DIM = 32          # embedding dim
DEPTH = 2         # number of transformer blocks
HEADS = 4
DIM_HEAD = 8
INNER = HEADS * DIM_HEAD          # 32
MLP_DIM = 64
SEQ = 16          # tokens per sequence
BATCH = 2
SCALE = DIM_HEAD ** -0.5
LN_EPS = 1e-5

# rows-per-layer in the stacked small-vector array:
#   [ln1_g, ln1_b, attn_out_bias, ln2_g, ln2_b, ffn_out_bias]
_VEC_ROWS_PER_LAYER = 6


# ----------------------------- kernel helpers --------------------------------
def _layernorm(x, gamma, beta):
    # x: (M, D); gamma/beta: (1, D). Biased variance, eps=1e-5 (torch default).
    mean = jnp.mean(x, axis=-1, keepdims=True)
    xc = x - mean
    var = jnp.mean(xc * xc, axis=-1, keepdims=True)
    inv = jax.lax.rsqrt(var + LN_EPS)
    return xc * inv * gamma + beta


def _gelu_exact(x):
    # torch nn.GELU default: exact erf formulation.
    return 0.5 * x * (1.0 + jax.lax.erf(x * (1.0 / math.sqrt(2.0))))


# ----------------------------- wrapper + fused kernel ------------------------
def transformer_forward(x, params):
    B, N, D = x.shape
    BN = B * N
    G = HEADS * B                 # merged (head, batch) dim, g = h*B + b
    TDH = 3 * DIM_HEAD            # q|k|v chunk per head in the fused QKV output
    assert params["wout"].shape[1] == G, "wout must be replicated over batch"

    def kernel(x_ref, wqkv_ref, wout_ref, w1_ref, w2_ref, vec_ref, b1_ref, o_ref):
        x2 = x_ref[...].astype(jnp.float32)                      # (BN, D)

        for l in range(DEPTH):                                   # static unroll
            base = _VEC_ROWS_PER_LAYER * l

            # ---------------- PreNorm + multi-head attention ----------------
            h = _layernorm(x2,
                           vec_ref[base + 0:base + 1, :],
                           vec_ref[base + 1:base + 2, :])        # (BN, D) f32
            # single fused, lane-dense QKV projection: (BN, D) @ (D, 3*INNER)
            qkv = jnp.dot(h.astype(jnp.bfloat16), wqkv_ref[l],
                          preferred_element_type=jnp.float32)    # (BN, 96)
            # split heads (columns are laid out [head][q|k|v][dh]); merging the
            # (H, B) leading dims is a pure reshape -> g = h*B + b, no transposes.
            ph = jnp.stack([qkv[:, hh * TDH:(hh + 1) * TDH] for hh in range(HEADS)],
                           axis=0)                               # (H, BN, 3*Dh)
            ph = ph.reshape(G, N, TDH).astype(jnp.bfloat16)      # (G, N, 3*Dh)
            q = ph[:, :, 0:DIM_HEAD]
            k = ph[:, :, DIM_HEAD:2 * DIM_HEAD]
            v = ph[:, :, 2 * DIM_HEAD:3 * DIM_HEAD]

            dots = jnp.einsum('gqd,gkd->gqk', q, k,
                              preferred_element_type=jnp.float32) * SCALE   # (G,N,N)
            dots = dots - jnp.max(dots, axis=-1, keepdims=True)
            e = jnp.exp(dots)
            attn = e / jnp.sum(e, axis=-1, keepdims=True)        # exact softmax (f32)

            ctx = jnp.einsum('gqk,gkd->gqd', attn.astype(jnp.bfloat16), v,
                             preferred_element_type=jnp.float32)             # (G,N,Dh)
            # per-(head,batch) output projection; summing over the head-major
            # leading axis == concat(heads) @ W_out (wout is replicated over b).
            proj = jnp.einsum('gnd,gdo->gno', ctx.astype(jnp.bfloat16), wout_ref[l],
                              preferred_element_type=jnp.float32)            # (G,N,D)
            attn_out = jnp.sum(proj.reshape(HEADS, BN, D), axis=0)           # (BN,D)
            x2 = x2 + attn_out + vec_ref[base + 2:base + 3, :]               # residual

            # ---------------- PreNorm + FeedForward ----------------
            h = _layernorm(x2,
                           vec_ref[base + 3:base + 4, :],
                           vec_ref[base + 4:base + 5, :])
            h1 = jnp.dot(h.astype(jnp.bfloat16), w1_ref[l],
                         preferred_element_type=jnp.float32) + b1_ref[l:l + 1, :]
            h1 = _gelu_exact(h1)
            x2 = x2 + jnp.dot(h1.astype(jnp.bfloat16), w2_ref[l],
                              preferred_element_type=jnp.float32) \
                    + vec_ref[base + 5:base + 6, :]                          # residual

        # final LayerNorm (self.norm in the torch module)
        fg = vec_ref[_VEC_ROWS_PER_LAYER * DEPTH + 0:_VEC_ROWS_PER_LAYER * DEPTH + 1, :]
        fb = vec_ref[_VEC_ROWS_PER_LAYER * DEPTH + 1:_VEC_ROWS_PER_LAYER * DEPTH + 2, :]
        o_ref[...] = _layernorm(x2, fg, fb).astype(o_ref.dtype)

    vmem_spec = pl.BlockSpec(memory_space=pltpu.MemorySpace.VMEM)
    out2 = pl.pallas_call(
        kernel,
        out_shape=jax.ShapeDtypeStruct((BN, D), x.dtype),
        in_specs=[vmem_spec] * 7,
        out_specs=vmem_spec,
    )(x.reshape(BN, D),
      params["wqkv"], params["wout"], params["w1"], params["w2"],
      params["vecs"], params["b1"])
    return out2.reshape(B, N, D)


# ----------------------------- parameter init ---------------------------------
def init_params(key):
    """Deterministic synthetic weights.

    Layout matches torch.nn.Linear math (y = x @ W + b with W stored (in,out)):
      * wqkv: (DEPTH, D, H*3*Dh) bf16, columns ordered [head][q|k|v][dh] so the
        kernel can split heads with static slices + reshapes only.
      * wout: (DEPTH, H*B, Dh, D) bf16 — the (H, Dh, D) projection (rows of the
        torch (inner, dim) weight in head-major order) replicated over batch so
        the merged g = h*B + b axis indexes it directly.
      * w1/w2: FFN weights, bf16.  Small vectors (LN gammas/betas, biases) are
        packed into single f32 arrays to keep the operand count low.
    """
    wqkv_l, wout_l, w1_l, w2_l, b1_l, vec_rows = [], [], [], [], [], []
    for _ in range(DEPTH):
        key, k0, k1, k2, k3, k4, k5, k6 = jax.random.split(key, 8)
        wq = 0.02 * jax.random.normal(k0, (DIM, HEADS, DIM_HEAD), jnp.float32)
        wk = 0.02 * jax.random.normal(k1, (DIM, HEADS, DIM_HEAD), jnp.float32)
        wv = 0.02 * jax.random.normal(k2, (DIM, HEADS, DIM_HEAD), jnp.float32)
        wqkv = jnp.concatenate([wq, wk, wv], axis=-1)          # (D, H, 3*Dh)
        wqkv_l.append(wqkv.reshape(DIM, HEADS * 3 * DIM_HEAD))  # [h][q|k|v][dh]

        wo = 0.02 * jax.random.normal(k3, (INNER, DIM), jnp.float32)
        wo = wo.reshape(HEADS, DIM_HEAD, DIM)                  # row index = h*Dh + d
        wout_l.append(jnp.repeat(wo, BATCH, axis=0))           # (H*B, Dh, D)

        w1_l.append(0.02 * jax.random.normal(k4, (DIM, MLP_DIM), jnp.float32))
        b1_l.append(0.01 * jax.random.normal(k5, (MLP_DIM,), jnp.float32))
        w2_l.append(0.02 * jax.random.normal(k6, (MLP_DIM, DIM), jnp.float32))

        vec_rows += [jnp.ones((DIM,), jnp.float32),    # ln1 gamma
                     jnp.zeros((DIM,), jnp.float32),   # ln1 beta
                     jnp.zeros((DIM,), jnp.float32),   # attention out-proj bias
                     jnp.ones((DIM,), jnp.float32),    # ln2 gamma
                     jnp.zeros((DIM,), jnp.float32),   # ln2 beta
                     jnp.zeros((DIM,), jnp.float32)]   # ffn out bias
    vec_rows += [jnp.ones((DIM,), jnp.float32),        # final LN gamma
                 jnp.zeros((DIM,), jnp.float32)]       # final LN beta

    return {
        "wqkv": jnp.stack(wqkv_l).astype(jnp.bfloat16),   # (DEPTH, D, 3*INNER)
        "wout": jnp.stack(wout_l).astype(jnp.bfloat16),   # (DEPTH, H*B, Dh, D)
        "w1":   jnp.stack(w1_l).astype(jnp.bfloat16),     # (DEPTH, D, MLP)
        "w2":   jnp.stack(w2_l).astype(jnp.bfloat16),     # (DEPTH, MLP, D)
        "b1":   jnp.stack(b1_l).astype(jnp.float32),      # (DEPTH, MLP)
        "vecs": jnp.stack(vec_rows).astype(jnp.float32),  # (6*DEPTH+2, D)
    }


# ----------------------------- main --------------------------------------------
if __name__ == "__main__":
    key = jax.random.PRNGKey(0)
    key, xkey, pkey = jax.random.split(key, 3)
    x = jax.random.normal(xkey, (BATCH, SEQ, DIM), jnp.float32)
    params = init_params(pkey)

    out = transformer_forward(x, params)
    out = jax.block_until_ready(out)
    assert out.shape == (BATCH, SEQ, DIM)
    assert bool(jnp.isfinite(out).all())
    print("KERNEL_OK")
</pallas_src>

<mosaic_0001>
module attributes {stable_mosaic.version = 11 : i64} {
  func.func @kernel(%arg0: memref<32x32xf32, #tpu.memory_space<vmem>>, %arg1: memref<2x32x96xbf16, #tpu.memory_space<vmem>>, %arg2: memref<2x8x8x32xbf16, #tpu.memory_space<vmem>>, %arg3: memref<2x32x64xbf16, #tpu.memory_space<vmem>>, %arg4: memref<2x64x32xbf16, #tpu.memory_space<vmem>>, %arg5: memref<14x32xf32, #tpu.memory_space<vmem>>, %arg6: memref<2x64xf32, #tpu.memory_space<vmem>>, %arg7: memref<32x32xf32, #tpu.memory_space<vmem>>) attributes {dimension_semantics = [], scalar_prefetch = 0 : i64, scratch_operands = 0 : i64, tpu.core_type = #tpu.core_type<tc>} {
    %c0 = arith.constant 0 : index
    %c0_0 = arith.constant 0 : index
    %0 = vector.load %arg0[%c0, %c0_0] : memref<32x32xf32, #tpu.memory_space<vmem>>, vector<32x32xf32>
    %c0_1 = arith.constant 0 : index
    %c0_2 = arith.constant 0 : index
    %1 = vector.load %arg5[%c0_1, %c0_2] : memref<14x32xf32, #tpu.memory_space<vmem>>, vector<1x32xf32>
    %c1 = arith.constant 1 : index
    %c0_3 = arith.constant 0 : index
    %2 = vector.load %arg5[%c1, %c0_3] : memref<14x32xf32, #tpu.memory_space<vmem>>, vector<1x32xf32>
    %cst = arith.constant dense<0.000000e+00> : vector<32xf32>
    %3 = vector.multi_reduction <add>, %0, %cst [1] : vector<32x32xf32> to vector<32xf32>
    %4 = vector.shape_cast %3 : vector<32xf32> to vector<32x1xf32>
    %cst_4 = arith.constant 3.200000e+01 : f32
    %5 = vector.broadcast %cst_4 : f32 to vector<32x1xf32>
    %6 = arith.divf %4, %5 : vector<32x1xf32>
    %7 = vector.broadcast %6 : vector<32x1xf32> to vector<32x32xf32>
    %8 = arith.subf %0, %7 : vector<32x32xf32>
    %9 = arith.mulf %8, %8 : vector<32x32xf32>
    %cst_5 = arith.constant dense<0.000000e+00> : vector<32xf32>
    %10 = vector.multi_reduction <add>, %9, %cst_5 [1] : vector<32x32xf32> to vector<32xf32>
    %11 = vector.shape_cast %10 : vector<32xf32> to vector<32x1xf32>
    %cst_6 = arith.constant 3.200000e+01 : f32
    %12 = vector.broadcast %cst_6 : f32 to vector<32x1xf32>
    %13 = arith.divf %11, %12 : vector<32x1xf32>
    %cst_7 = arith.constant 9.99999974E-6 : f32
    %14 = vector.broadcast %cst_7 : f32 to vector<32x1xf32>
    %15 = arith.addf %13, %14 : vector<32x1xf32>
    %16 = math.rsqrt %15 : vector<32x1xf32>
    %17 = vector.broadcast %16 : vector<32x1xf32> to vector<32x32xf32>
    %18 = arith.mulf %8, %17 : vector<32x32xf32>
    %19 = vector.broadcast %1 : vector<1x32xf32> to vector<32x32xf32>
    %20 = arith.mulf %18, %19 : vector<32x32xf32>
    %21 = vector.broadcast %2 : vector<1x32xf32> to vector<32x32xf32>
    %22 = arith.addf %20, %21 : vector<32x32xf32>
    %23 = arith.truncf %22 : vector<32x32xf32> to vector<32x32xbf16>
    %c0_8 = arith.constant 0 : index
    %c0_9 = arith.constant 0 : index
    %c0_10 = arith.constant 0 : index
    %24 = vector.load %arg1[%c0_8, %c0_9, %c0_10] : memref<2x32x96xbf16, #tpu.memory_space<vmem>>, vector<1x32x96xbf16>
    %25 = vector.shape_cast %24 : vector<1x32x96xbf16> to vector<32x96xbf16>
    %cst_11 = arith.constant dense<0.000000e+00> : vector<32x96xf32>
    %26 = tpu.matmul %23, %25, %cst_11 {dimension_numbers = #tpu.dot_dimension_numbers<[1], [0], [0], [1], [0, 0, 1, 1], [], []>} : vector<32x32xbf16>, vector<32x96xbf16>, vector<32x96xf32> -> vector<32x96xf32>
    %27 = vector.extract_strided_slice %26 {offsets = [0, 0], sizes = [32, 24], strides = [1, 1]} : vector<32x96xf32> to vector<32x24xf32>
    %28 = vector.extract_strided_slice %26 {offsets = [0, 24], sizes = [32, 24], strides = [1, 1]} : vector<32x96xf32> to vector<32x24xf32>
    %29 = vector.extract_strided_slice %26 {offsets = [0, 48], sizes = [32, 24], strides = [1, 1]} : vector<32x96xf32> to vector<32x24xf32>
    %30 = vector.extract_strided_slice %26 {offsets = [0, 72], sizes = [32, 24], strides = [1, 1]} : vector<32x96xf32> to vector<32x24xf32>
    %31 = vector.shape_cast %27 : vector<32x24xf32> to vector<1x32x24xf32>
    %32 = vector.shape_cast %28 : vector<32x24xf32> to vector<1x32x24xf32>
    %33 = vector.shape_cast %29 : vector<32x24xf32> to vector<1x32x24xf32>
    %34 = vector.shape_cast %30 : vector<32x24xf32> to vector<1x32x24xf32>
    %35 = tpu.concatenate %31, %32, %33, %34 in 0 : vector<1x32x24xf32>, vector<1x32x24xf32>, vector<1x32x24xf32>, vector<1x32x24xf32> -> vector<4x32x24xf32>
    %36 = vector.shape_cast %35 : vector<4x32x24xf32> to vector<8x16x24xf32>
    %37 = arith.truncf %36 : vector<8x16x24xf32> to vector<8x16x24xbf16>
    %38 = vector.extract_strided_slice %37 {offsets = [0, 0, 0], sizes = [8, 16, 8], strides = [1, 1, 1]} : vector<8x16x24xbf16> to vector<8x16x8xbf16>
    %39 = vector.extract_strided_slice %37 {offsets = [0, 0, 8], sizes = [8, 16, 8], strides = [1, 1, 1]} : vector<8x16x24xbf16> to vector<8x16x8xbf16>
    %40 = vector.extract_strided_slice %37 {offsets = [0, 0, 16], sizes = [8, 16, 8], strides = [1, 1, 1]} : vector<8x16x24xbf16> to vector<8x16x8xbf16>
    "tpu.trace_start"() <{level = 10 : i32, message = "gqd,gkd->gqk"}> : () -> ()
    %cst_12 = arith.constant dense<0.000000e+00> : vector<8x16x16xf32>
    %41 = tpu.matmul %38, %39, %cst_12 {dimension_numbers = #tpu.dot_dimension_numbers<[2], [2], [1], [1], [0, 0, 0, 1, 1, 1], [0], [0]>} : vector<8x16x8xbf16>, vector<8x16x8xbf16>, vector<8x16x16xf32> -> vector<8x16x16xf32>
    "tpu.trace_stop"() : () -> ()
    %cst_13 = arith.constant 0.353553385 : f32
    %42 = vector.broadcast %cst_13 : f32 to vector<8x16x16xf32>
    %43 = arith.mulf %41, %42 : vector<8x16x16xf32>
    %cst_14 = arith.constant dense<0xFF800000> : vector<8x16xf32>
    %44 = vector.multi_reduction <maximumf>, %43, %cst_14 [2] : vector<8x16x16xf32> to vector<8x16xf32>
    %45 = vector.shape_cast %44 : vector<8x16xf32> to vector<8x16x1xf32>
    %46 = vector.broadcast %45 : vector<8x16x1xf32> to vector<8x16x16xf32>
    %47 = arith.subf %43, %46 : vector<8x16x16xf32>
    %48 = math.exp %47 : vector<8x16x16xf32>
    %cst_15 = arith.constant dense<0.000000e+00> : vector<8x16xf32>
    %49 = vector.multi_reduction <add>, %48, %cst_15 [2] : vector<8x16x16xf32> to vector<8x16xf32>
    %50 = vector.shape_cast %49 : vector<8x16xf32> to vector<8x16x1xf32>
    %51 = vector.broadcast %50 : vector<8x16x1xf32> to vector<8x16x16xf32>
    %52 = arith.divf %48, %51 : vector<8x16x16xf32>
    %53 = arith.truncf %52 : vector<8x16x16xf32> to vector<8x16x16xbf16>
    "tpu.trace_start"() <{level = 10 : i32, message = "gqk,gkd->gqd"}> : () -> ()
    %cst_16 = arith.constant dense<0.000000e+00> : vector<8x16x8xf32>
    %54 = tpu.matmul %53, %40, %cst_16 {dimension_numbers = #tpu.dot_dimension_numbers<[2], [1], [1], [2], [0, 0, 0, 1, 1, 2], [0], [0]>} : vector<8x16x16xbf16>, vector<8x16x8xbf16>, vector<8x16x8xf32> -> vector<8x16x8xf32>
    "tpu.trace_stop"() : () -> ()
    %55 = arith.truncf %54 : vector<8x16x8xf32> to vector<8x16x8xbf16>
    %c0_17 = arith.constant 0 : index
    %c0_18 = arith.constant 0 : index
    %c0_19 = arith.constant 0 : index
    %c0_20 = arith.constant 0 : index
    %56 = vector.load %arg2[%c0_17, %c0_18, %c0_19, %c0_20] : memref<2x8x8x32xbf16, #tpu.memory_space<vmem>>, vector<1x8x8x32xbf16>
    %57 = vector.shape_cast %56 : vector<1x8x8x32xbf16> to vector<8x8x32xbf16>
    "tpu.trace_start"() <{level = 10 : i32, message = "gnd,gdo->gno"}> : () -> ()
    %cst_21 = arith.constant dense<0.000000e+00> : vector<8x16x32xf32>
    %58 = tpu.matmul %55, %57, %cst_21 {dimension_numbers = #tpu.dot_dimension_numbers<[2], [1], [1], [2], [0, 0, 0, 1, 1, 2], [0], [0]>} : vector<8x16x8xbf16>, vector<8x8x32xbf16>, vector<8x16x32xf32> -> vector<8x16x32xf32>
    "tpu.trace_stop"() : () -> ()
    %59 = vector.shape_cast %58 : vector<8x16x32xf32> to vector<4x32x32xf32>
    %cst_22 = arith.constant dense<0.000000e+00> : vector<32x32xf32>
    %60 = vector.multi_reduction <add>, %59, %cst_22 [0] : vector<4x32x32xf32> to vector<32x32xf32>
    %61 = arith.addf %0, %60 : vector<32x32xf32>
    %c2 = arith.constant 2 : index
    %c0_23 = arith.constant 0 : index
    %62 = vector.load %arg5[%c2, %c0_23] : memref<14x32xf32, #tpu.memory_space<vmem>>, vector<1x32xf32>
    %63 = vector.broadcast %62 : vector<1x32xf32> to vector<32x32xf32>
    %64 = arith.addf %61, %63 : vector<32x32xf32>
    %c3 = arith.constant 3 : index
    %c0_24 = arith.constant 0 : index
    %65 = vector.load %arg5[%c3, %c0_24] : memref<14x32xf32, #tpu.memory_space<vmem>>, vector<1x32xf32>
    %c4 = arith.constant 4 : index
    %c0_25 = arith.constant 0 : index
    %66 = vector.load %arg5[%c4, %c0_25] : memref<14x32xf32, #tpu.memory_space<vmem>>, vector<1x32xf32>
    %cst_26 = arith.constant dense<0.000000e+00> : vector<32xf32>
    %67 = vector.multi_reduction <add>, %64, %cst_26 [1] : vector<32x32xf32> to vector<32xf32>
    %68 = vector.shape_cast %67 : vector<32xf32> to vector<32x1xf32>
    %cst_27 = arith.constant 3.200000e+01 : f32
    %69 = vector.broadcast %cst_27 : f32 to vector<32x1xf32>
    %70 = arith.divf %68, %69 : vector<32x1xf32>
    %71 = vector.broadcast %70 : vector<32x1xf32> to vector<32x32xf32>
    %72 = arith.subf %64, %71 : vector<32x32xf32>
    %73 = arith.mulf %72, %72 : vector<32x32xf32>
    %cst_28 = arith.constant dense<0.000000e+00> : vector<32xf32>
    %74 = vector.multi_reduction <add>, %73, %cst_28 [1] : vector<32x32xf32> to vector<32xf32>
    %75 = vector.shape_cast %74 : vector<32xf32> to vector<32x1xf32>
    %cst_29 = arith.constant 3.200000e+01 : f32
    %76 = vector.broadcast %cst_29 : f32 to vector<32x1xf32>
    %77 = arith.divf %75, %76 : vector<32x1xf32>
    %cst_30 = arith.constant 9.99999974E-6 : f32
    %78 = vector.broadcast %cst_30 : f32 to vector<32x1xf32>
    %79 = arith.addf %77, %78 : vector<32x1xf32>
    %80 = math.rsqrt %79 : vector<32x1xf32>
    %81 = vector.broadcast %80 : vector<32x1xf32> to vector<32x32xf32>
    %82 = arith.mulf %72, %81 : vector<32x32xf32>
    %83 = vector.broadcast %65 : vector<1x32xf32> to vector<32x32xf32>
    %84 = arith.mulf %82, %83 : vector<32x32xf32>
    %85 = vector.broadcast %66 : vector<1x32xf32> to vector<32x32xf32>
    %86 = arith.addf %84, %85 : vector<32x32xf32>
    %87 = arith.truncf %86 : vector<32x32xf32> to vector<32x32xbf16>
    %c0_31 = arith.constant 0 : index
    %c0_32 = arith.constant 0 : index
    %c0_33 = arith.constant 0 : index
    %88 = vector.load %arg3[%c0_31, %c0_32, %c0_33] : memref<2x32x64xbf16, #tpu.memory_space<vmem>>, vector<1x32x64xbf16>
    %89 = vector.shape_cast %88 : vector<1x32x64xbf16> to vector<32x64xbf16>
    %cst_34 = arith.constant dense<0.000000e+00> : vector<32x64xf32>
    %90 = tpu.matmul %87, %89, %cst_34 {dimension_numbers = #tpu.dot_dimension_numbers<[1], [0], [0], [1], [0, 0, 1, 1], [], []>} : vector<32x32xbf16>, vector<32x64xbf16>, vector<32x64xf32> -> vector<32x64xf32>
    %c0_35 = arith.constant 0 : index
    %c0_36 = arith.constant 0 : index
    %91 = vector.load %arg6[%c0_35, %c0_36] : memref<2x64xf32, #tpu.memory_space<vmem>>, vector<1x64xf32>
    %92 = vector.broadcast %91 : vector<1x64xf32> to vector<32x64xf32>
    %93 = arith.addf %90, %92 : vector<32x64xf32>
    %cst_37 = arith.constant 5.000000e-01 : f32
    %94 = vector.broadcast %cst_37 : f32 to vector<32x64xf32>
    %95 = arith.mulf %94, %93 : vector<32x64xf32>
    %cst_38 = arith.constant 0.707106769 : f32
    %96 = vector.broadcast %cst_38 : f32 to vector<32x64xf32>
    %97 = arith.mulf %93, %96 : vector<32x64xf32>
    %98 = math.erf %97 : vector<32x64xf32>
    %cst_39 = arith.constant 1.000000e+00 : f32
    %99 = vector.broadcast %cst_39 : f32 to vector<32x64xf32>
    %100 = arith.addf %99, %98 : vector<32x64xf32>
    %101 = arith.mulf %95, %100 : vector<32x64xf32>
    %102 = arith.truncf %101 : vector<32x64xf32> to vector<32x64xbf16>
    %c0_40 = arith.constant 0 : index
    %c0_41 = arith.constant 0 : index
    %c0_42 = arith.constant 0 : index
    %103 = vector.load %arg4[%c0_40, %c0_41, %c0_42] : memref<2x64x32xbf16, #tpu.memory_space<vmem>>, vector<1x64x32xbf16>
    %104 = vector.shape_cast %103 : vector<1x64x32xbf16> to vector<64x32xbf16>
    %cst_43 = arith.constant dense<0.000000e+00> : vector<32x32xf32>
    %105 = tpu.matmul %102, %104, %cst_43 {dimension_numbers = #tpu.dot_dimension_numbers<[1], [0], [0], [1], [0, 0, 1, 1], [], []>} : vector<32x64xbf16>, vector<64x32xbf16>, vector<32x32xf32> -> vector<32x32xf32>
    %106 = arith.addf %64, %105 : vector<32x32xf32>
    %c5 = arith.constant 5 : index
    %c0_44 = arith.constant 0 : index
    %107 = vector.load %arg5[%c5, %c0_44] : memref<14x32xf32, #tpu.memory_space<vmem>>, vector<1x32xf32>
    %108 = vector.broadcast %107 : vector<1x32xf32> to vector<32x32xf32>
    %109 = arith.addf %106, %108 : vector<32x32xf32>
    %c6 = arith.constant 6 : index
    %c0_45 = arith.constant 0 : index
    %110 = vector.load %arg5[%c6, %c0_45] : memref<14x32xf32, #tpu.memory_space<vmem>>, vector<1x32xf32>
    %c7 = arith.constant 7 : index
    %c0_46 = arith.constant 0 : index
    %111 = vector.load %arg5[%c7, %c0_46] : memref<14x32xf32, #tpu.memory_space<vmem>>, vector<1x32xf32>
    %cst_47 = arith.constant dense<0.000000e+00> : vector<32xf32>
    %112 = vector.multi_reduction <add>, %109, %cst_47 [1] : vector<32x32xf32> to vector<32xf32>
    %113 = vector.shape_cast %112 : vector<32xf32> to vector<32x1xf32>
    %cst_48 = arith.constant 3.200000e+01 : f32
    %114 = vector.broadcast %cst_48 : f32 to vector<32x1xf32>
    %115 = arith.divf %113, %114 : vector<32x1xf32>
    %116 = vector.broadcast %115 : vector<32x1xf32> to vector<32x32xf32>
    %117 = arith.subf %109, %116 : vector<32x32xf32>
    %118 = arith.mulf %117, %117 : vector<32x32xf32>
    %cst_49 = arith.constant dense<0.000000e+00> : vector<32xf32>
    %119 = vector.multi_reduction <add>, %118, %cst_49 [1] : vector<32x32xf32> to vector<32xf32>
    %120 = vector.shape_cast %119 : vector<32xf32> to vector<32x1xf32>
    %cst_50 = arith.constant 3.200000e+01 : f32
    %121 = vector.broadcast %cst_50 : f32 to vector<32x1xf32>
    %122 = arith.divf %120, %121 : vector<32x1xf32>
    %cst_51 = arith.constant 9.99999974E-6 : f32
    %123 = vector.broadcast %cst_51 : f32 to vector<32x1xf32>
    %124 = arith.addf %122, %123 : vector<32x1xf32>
    %125 = math.rsqrt %124 : vector<32x1xf32>
    %126 = vector.broadcast %125 : vector<32x1xf32> to vector<32x32xf32>
    %127 = arith.mulf %117, %126 : vector<32x32xf32>
    %128 = vector.broadcast %110 : vector<1x32xf32> to vector<32x32xf32>
    %129 = arith.mulf %127, %128 : vector<32x32xf32>
    %130 = vector.broadcast %111 : vector<1x32xf32> to vector<32x32xf32>
    %131 = arith.addf %129, %130 : vector<32x32xf32>
    %132 = arith.truncf %131 : vector<32x32xf32> to vector<32x32xbf16>
    %c1_52 = arith.constant 1 : index
    %c0_53 = arith.constant 0 : index
    %c0_54 = arith.constant 0 : index
    %133 = vector.load %arg1[%c1_52, %c0_53, %c0_54] : memref<2x32x96xbf16, #tpu.memory_space<vmem>>, vector<1x32x96xbf16>
    %134 = vector.shape_cast %133 : vector<1x32x96xbf16> to vector<32x96xbf16>
    %cst_55 = arith.constant dense<0.000000e+00> : vector<32x96xf32>
    %135 = tpu.matmul %132, %134, %cst_55 {dimension_numbers = #tpu.dot_dimension_numbers<[1], [0], [0], [1], [0, 0, 1, 1], [], []>} : vector<32x32xbf16>, vector<32x96xbf16>, vector<32x96xf32> -> vector<32x96xf32>
    %136 = vector.extract_strided_slice %135 {offsets = [0, 0], sizes = [32, 24], strides = [1, 1]} : vector<32x96xf32> to vector<32x24xf32>
    %137 = vector.extract_strided_slice %135 {offsets = [0, 24], sizes = [32, 24], strides = [1, 1]} : vector<32x96xf32> to vector<32x24xf32>
    %138 = vector.extract_strided_slice %135 {offsets = [0, 48], sizes = [32, 24], strides = [1, 1]} : vector<32x96xf32> to vector<32x24xf32>
    %139 = vector.extract_strided_slice %135 {offsets = [0, 72], sizes = [32, 24], strides = [1, 1]} : vector<32x96xf32> to vector<32x24xf32>
    %140 = vector.shape_cast %136 : vector<32x24xf32> to vector<1x32x24xf32>
    %141 = vector.shape_cast %137 : vector<32x24xf32> to vector<1x32x24xf32>
    %142 = vector.shape_cast %138 : vector<32x24xf32> to vector<1x32x24xf32>
    %143 = vector.shape_cast %139 : vector<32x24xf32> to vector<1x32x24xf32>
    %144 = tpu.concatenate %140, %141, %142, %143 in 0 : vector<1x32x24xf32>, vector<1x32x24xf32>, vector<1x32x24xf32>, vector<1x32x24xf32> -> vector<4x32x24xf32>
    %145 = vector.shape_cast %144 : vector<4x32x24xf32> to vector<8x16x24xf32>
    %146 = arith.truncf %145 : vector<8x16x24xf32> to vector<8x16x24xbf16>
    %147 = vector.extract_strided_slice %146 {offsets = [0, 0, 0], sizes = [8, 16, 8], strides = [1, 1, 1]} : vector<8x16x24xbf16> to vector<8x16x8xbf16>
    %148 = vector.extract_strided_slice %146 {offsets = [0, 0, 8], sizes = [8, 16, 8], strides = [1, 1, 1]} : vector<8x16x24xbf16> to vector<8x16x8xbf16>
    %149 = vector.extract_strided_slice %146 {offsets = [0, 0, 16], sizes = [8, 16, 8], strides = [1, 1, 1]} : vector<8x16x24xbf16> to vector<8x16x8xbf16>
    "tpu.trace_start"() <{level = 10 : i32, message = "gqd,gkd->gqk"}> : () -> ()
    %cst_56 = arith.constant dense<0.000000e+00> : vector<8x16x16xf32>
    %150 = tpu.matmul %147, %148, %cst_56 {dimension_numbers = #tpu.dot_dimension_numbers<[2], [2], [1], [1], [0, 0, 0, 1, 1, 1], [0], [0]>} : vector<8x16x8xbf16>, vector<8x16x8xbf16>, vector<8x16x16xf32> -> vector<8x16x16xf32>
    "tpu.trace_stop"() : () -> ()
    %cst_57 = arith.constant 0.353553385 : f32
    %151 = vector.broadcast %cst_57 : f32 to vector<8x16x16xf32>
    %152 = arith.mulf %150, %151 : vector<8x16x16xf32>
    %cst_58 = arith.constant dense<0xFF800000> : vector<8x16xf32>
    %153 = vector.multi_reduction <maximumf>, %152, %cst_58 [2] : vector<8x16x16xf32> to vector<8x16xf32>
    %154 = vector.shape_cast %153 : vector<8x16xf32> to vector<8x16x1xf32>
    %155 = vector.broadcast %154 : vector<8x16x1xf32> to vector<8x16x16xf32>
    %156 = arith.subf %152, %155 : vector<8x16x16xf32>
    %157 = math.exp %156 : vector<8x16x16xf32>
    %cst_59 = arith.constant dense<0.000000e+00> : vector<8x16xf32>
    %158 = vector.multi_reduction <add>, %157, %cst_59 [2] : vector<8x16x16xf32> to vector<8x16xf32>
    %159 = vector.shape_cast %158 : vector<8x16xf32> to vector<8x16x1xf32>
    %160 = vector.broadcast %159 : vector<8x16x1xf32> to vector<8x16x16xf32>
    %161 = arith.divf %157, %160 : vector<8x16x16xf32>
    %162 = arith.truncf %161 : vector<8x16x16xf32> to vector<8x16x16xbf16>
    "tpu.trace_start"() <{level = 10 : i32, message = "gqk,gkd->gqd"}> : () -> ()
    %cst_60 = arith.constant dense<0.000000e+00> : vector<8x16x8xf32>
    %163 = tpu.matmul %162, %149, %cst_60 {dimension_numbers = #tpu.dot_dimension_numbers<[2], [1], [1], [2], [0, 0, 0, 1, 1, 2], [0], [0]>} : vector<8x16x16xbf16>, vector<8x16x8xbf16>, vector<8x16x8xf32> -> vector<8x16x8xf32>
    "tpu.trace_stop"() : () -> ()
    %164 = arith.truncf %163 : vector<8x16x8xf32> to vector<8x16x8xbf16>
    %c1_61 = arith.constant 1 : index
    %c0_62 = arith.constant 0 : index
    %c0_63 = arith.constant 0 : index
    %c0_64 = arith.constant 0 : index
    %165 = vector.load %arg2[%c1_61, %c0_62, %c0_63, %c0_64] : memref<2x8x8x32xbf16, #tpu.memory_space<vmem>>, vector<1x8x8x32xbf16>
    %166 = vector.shape_cast %165 : vector<1x8x8x32xbf16> to vector<8x8x32xbf16>
    "tpu.trace_start"() <{level = 10 : i32, message = "gnd,gdo->gno"}> : () -> ()
    %cst_65 = arith.constant dense<0.000000e+00> : vector<8x16x32xf32>
    %167 = tpu.matmul %164, %166, %cst_65 {dimension_numbers = #tpu.dot_dimension_numbers<[2], [1], [1], [2], [0, 0, 0, 1, 1, 2], [0], [0]>} : vector<8x16x8xbf16>, vector<8x8x32xbf16>, vector<8x16x32xf32> -> vector<8x16x32xf32>
    "tpu.trace_stop"() : () -> ()
    %168 = vector.shape_cast %167 : vector<8x16x32xf32> to vector<4x32x32xf32>
    %cst_66 = arith.constant dense<0.000000e+00> : vector<32x32xf32>
    %169 = vector.multi_reduction <add>, %168, %cst_66 [0] : vector<4x32x32xf32> to vector<32x32xf32>
    %170 = arith.addf %109, %169 : vector<32x32xf32>
    %c8 = arith.constant 8 : index
    %c0_67 = arith.constant 0 : index
    %171 = vector.load %arg5[%c8, %c0_67] : memref<14x32xf32, #tpu.memory_space<vmem>>, vector<1x32xf32>
    %172 = vector.broadcast %171 : vector<1x32xf32> to vector<32x32xf32>
    %173 = arith.addf %170, %172 : vector<32x32xf32>
    %c9 = arith.constant 9 : index
    %c0_68 = arith.constant 0 : index
    %174 = vector.load %arg5[%c9, %c0_68] : memref<14x32xf32, #tpu.memory_space<vmem>>, vector<1x32xf32>
    %c10 = arith.constant 10 : index
    %c0_69 = arith.constant 0 : index
    %175 = vector.load %arg5[%c10, %c0_69] : memref<14x32xf32, #tpu.memory_space<vmem>>, vector<1x32xf32>
    %cst_70 = arith.constant dense<0.000000e+00> : vector<32xf32>
    %176 = vector.multi_reduction <add>, %173, %cst_70 [1] : vector<32x32xf32> to vector<32xf32>
    %177 = vector.shape_cast %176 : vector<32xf32> to vector<32x1xf32>
    %cst_71 = arith.constant 3.200000e+01 : f32
    %178 = vector.broadcast %cst_71 : f32 to vector<32x1xf32>
    %179 = arith.divf %177, %178 : vector<32x1xf32>
    %180 = vector.broadcast %179 : vector<32x1xf32> to vector<32x32xf32>
    %181 = arith.subf %173, %180 : vector<32x32xf32>
    %182 = arith.mulf %181, %181 : vector<32x32xf32>
    %cst_72 = arith.constant dense<0.000000e+00> : vector<32xf32>
    %183 = vector.multi_reduction <add>, %182, %cst_72 [1] : vector<32x32xf32> to vector<32xf32>
    %184 = vector.shape_cast %183 : vector<32xf32> to vector<32x1xf32>
    %cst_73 = arith.constant 3.200000e+01 : f32
    %185 = vector.broadcast %cst_73 : f32 to vector<32x1xf32>
    %186 = arith.divf %184, %185 : vector<32x1xf32>
    %cst_74 = arith.constant 9.99999974E-6 : f32
    %187 = vector.broadcast %cst_74 : f32 to vector<32x1xf32>
    %188 = arith.addf %186, %187 : vector<32x1xf32>
    %189 = math.rsqrt %188 : vector<32x1xf32>
    %190 = vector.broadcast %189 : vector<32x1xf32> to vector<32x32xf32>
    %191 = arith.mulf %181, %190 : vector<32x32xf32>
    %192 = vector.broadcast %174 : vector<1x32xf32> to vector<32x32xf32>
    %193 = arith.mulf %191, %192 : vector<32x32xf32>
    %194 = vector.broadcast %175 : vector<1x32xf32> to vector<32x32xf32>
    %195 = arith.addf %193, %194 : vector<32x32xf32>
    %196 = arith.truncf %195 : vector<32x32xf32> to vector<32x32xbf16>
    %c1_75 = arith.constant 1 : index
    %c0_76 = arith.constant 0 : index
    %c0_77 = arith.constant 0 : index
    %197 = vector.load %arg3[%c1_75, %c0_76, %c0_77] : memref<2x32x64xbf16, #tpu.memory_space<vmem>>, vector<1x32x64xbf16>
    %198 = vector.shape_cast %197 : vector<1x32x64xbf16> to vector<32x64xbf16>
    %cst_78 = arith.constant dense<0.000000e+00> : vector<32x64xf32>
    %199 = tpu.matmul %196, %198, %cst_78 {dimension_numbers = #tpu.dot_dimension_numbers<[1], [0], [0], [1], [0, 0, 1, 1], [], []>} : vector<32x32xbf16>, vector<32x64xbf16>, vector<32x64xf32> -> vector<32x64xf32>
    %c1_79 = arith.constant 1 : index
    %c0_80 = arith.constant 0 : index
    %200 = vector.load %arg6[%c1_79, %c0_80] : memref<2x64xf32, #tpu.memory_space<vmem>>, vector<1x64xf32>
    %201 = vector.broadcast %200 : vector<1x64xf32> to vector<32x64xf32>
    %202 = arith.addf %199, %201 : vector<32x64xf32>
    %cst_81 = arith.constant 5.000000e-01 : f32
    %203 = vector.broadcast %cst_81 : f32 to vector<32x64xf32>
    %204 = arith.mulf %203, %202 : vector<32x64xf32>
    %cst_82 = arith.constant 0.707106769 : f32
    %205 = vector.broadcast %cst_82 : f32 to vector<32x64xf32>
    %206 = arith.mulf %202, %205 : vector<32x64xf32>
    %207 = math.erf %206 : vector<32x64xf32>
    %cst_83 = arith.constant 1.000000e+00 : f32
    %208 = vector.broadcast %cst_83 : f32 to vector<32x64xf32>
    %209 = arith.addf %208, %207 : vector<32x64xf32>
    %210 = arith.mulf %204, %209 : vector<32x64xf32>
    %211 = arith.truncf %210 : vector<32x64xf32> to vector<32x64xbf16>
    %c1_84 = arith.constant 1 : index
    %c0_85 = arith.constant 0 : index
    %c0_86 = arith.constant 0 : index
    %212 = vector.load %arg4[%c1_84, %c0_85, %c0_86] : memref<2x64x32xbf16, #tpu.memory_space<vmem>>, vector<1x64x32xbf16>
    %213 = vector.shape_cast %212 : vector<1x64x32xbf16> to vector<64x32xbf16>
    %cst_87 = arith.constant dense<0.000000e+00> : vector<32x32xf32>
    %214 = tpu.matmul %211, %213, %cst_87 {dimension_numbers = #tpu.dot_dimension_numbers<[1], [0], [0], [1], [0, 0, 1, 1], [], []>} : vector<32x64xbf16>, vector<64x32xbf16>, vector<32x32xf32> -> vector<32x32xf32>
    %215 = arith.addf %173, %214 : vector<32x32xf32>
    %c11 = arith.constant 11 : index
    %c0_88 = arith.constant 0 : index
    %216 = vector.load %arg5[%c11, %c0_88] : memref<14x32xf32, #tpu.memory_space<vmem>>, vector<1x32xf32>
    %217 = vector.broadcast %216 : vector<1x32xf32> to vector<32x32xf32>
    %218 = arith.addf %215, %217 : vector<32x32xf32>
    %c12 = arith.constant 12 : index
    %c0_89 = arith.constant 0 : index
    %219 = vector.load %arg5[%c12, %c0_89] : memref<14x32xf32, #tpu.memory_space<vmem>>, vector<1x32xf32>
    %c13 = arith.constant 13 : index
    %c0_90 = arith.constant 0 : index
    %220 = vector.load %arg5[%c13, %c0_90] : memref<14x32xf32, #tpu.memory_space<vmem>>, vector<1x32xf32>
    %cst_91 = arith.constant dense<0.000000e+00> : vector<32xf32>
    %221 = vector.multi_reduction <add>, %218, %cst_91 [1] : vector<32x32xf32> to vector<32xf32>
    %222 = vector.shape_cast %221 : vector<32xf32> to vector<32x1xf32>
    %cst_92 = arith.constant 3.200000e+01 : f32
    %223 = vector.broadcast %cst_92 : f32 to vector<32x1xf32>
    %224 = arith.divf %222, %223 : vector<32x1xf32>
    %225 = vector.broadcast %224 : vector<32x1xf32> to vector<32x32xf32>
    %226 = arith.subf %218, %225 : vector<32x32xf32>
    %227 = arith.mulf %226, %226 : vector<32x32xf32>
    %cst_93 = arith.constant dense<0.000000e+00> : vector<32xf32>
    %228 = vector.multi_reduction <add>, %227, %cst_93 [1] : vector<32x32xf32> to vector<32xf32>
    %229 = vector.shape_cast %228 : vector<32xf32> to vector<32x1xf32>
    %cst_94 = arith.constant 3.200000e+01 : f32
    %230 = vector.broadcast %cst_94 : f32 to vector<32x1xf32>
    %231 = arith.divf %229, %230 : vector<32x1xf32>
    %cst_95 = arith.constant 9.99999974E-6 : f32
    %232 = vector.broadcast %cst_95 : f32 to vector<32x1xf32>
    %233 = arith.addf %231, %232 : vector<32x1xf32>
    %234 = math.rsqrt %233 : vector<32x1xf32>
    %235 = vector.broadcast %234 : vector<32x1xf32> to vector<32x32xf32>
    %236 = arith.mulf %226, %235 : vector<32x32xf32>
    %237 = vector.broadcast %219 : vector<1x32xf32> to vector<32x32xf32>
    %238 = arith.mulf %236, %237 : vector<32x32xf32>
    %239 = vector.broadcast %220 : vector<1x32xf32> to vector<32x32xf32>
    %240 = arith.addf %238, %239 : vector<32x32xf32>
    %c0_96 = arith.constant 0 : index
    %c0_97 = arith.constant 0 : index
    %241 = vector.load %arg7[%c0_96, %c0_97] : memref<32x32xf32, #tpu.memory_space<vmem>>, vector<32x32xf32>
    tpu.vector_store %arg7[%c0_96, %c0_97], %240 {strides = array<i32>} : memref<32x32xf32, #tpu.memory_space<vmem>>, vector<32x32xf32>,
    return
  }
}

</mosaic_0001>

<llo_original>
// kernel: tpu_custom_call.1
$region0: #{tpu_custom_call.1}
  #allocation0 [shape = 'u32[]', space=smem, size = 0x4, offset = 0x4, fixed_abs, tag = 'smem constant byte address 0x4 - core index']
  #allocation1 [shape = 'u32[144,128]{1,0:T(1,128)}', space=vmem, size = 0x12000, scoped, tag = 'internal scratch']
  %s0 = inlined_call_operand.vmem [shape: f32[32,32], index: 0, kind: input, shape index: {}]
  %s1 = inlined_call_operand.hbm [shape: bf16[2,32,96], index: 1, kind: input, shape index: {}]
  %s2 = inlined_call_operand.vmem [shape: bf16[2,8,8,32], index: 2, kind: input, shape index: {}]
  %s3 = inlined_call_operand.hbm [shape: bf16[2,32,64], index: 3, kind: input, shape index: {}]
  %s4 = inlined_call_operand.vmem [shape: bf16[2,64,32], index: 4, kind: input, shape index: {}]
  %s5 = inlined_call_operand.hbm [shape: f32[14,32], index: 5, kind: input, shape index: {}]
  %s6 = inlined_call_operand.vmem [shape: f32[2,64], index: 6, kind: input, shape index: {}]
  %s7 = inlined_call_operand.hbm [shape: f32[32,32], index: 7, kind: output, shape index: {}]
  %s8 = sld [smem:[#allocation0]]
  $region50: #{tpu_custom_call.1} parent=0
    _
  %s10 = ssub.s32 1, %s8
  %s11 = scalar_select 0, %s10, %s8
  $region1: #{tpu_custom_call.1} parent=0
    #allocation2 [shape = 'u8[16384]{0}', space=vmem, size = 0x4000, scoped, tag = 'input window, operand 1, single buffered']
    #allocation3 [shape = 's32[1]{0}', space=sflag, size = 0x4, scoped, tag = 'scoped memory for tpu_custom_call.1']
    #allocation4 [shape = 's32[1]{0}', space=sflag, size = 0x4, scoped, tag = 'scoped memory for tpu_custom_call.1']
    #allocation5 [shape = 'u8[16384]{0}', space=vmem, size = 0x4000, scoped, tag = 'input window, operand 3, single buffered']
    #allocation6 [shape = 's32[1]{0}', space=sflag, size = 0x4, scoped, tag = 'scoped memory for tpu_custom_call.1']
    #allocation7 [shape = 'u8[8192]{0}', space=vmem, size = 0x2000, scoped, tag = 'input window, operand 5, single buffered']
    #allocation8 [shape = 'u8[16384]{0}', space=vmem, size = 0x4000, scoped, tag = 'output window, operand 0, single buffered']
    %12 = vsyncpa [#allocation3], 0
    %13 = vsyncpa [#allocation6], 0
    %14 = vsyncpa [#allocation4], 0
    // Predicated region
    $region2: #{tpu_custom_call.1} parent=1 // pred_check
      _
    $region3: #{tpu_custom_call.1} parent=1 // pred_check_branch
      %16 = sbr.rel (0) target = $region5
    $region4: #{tpu_custom_call.1} parent=1 // pred_region
      _
    $region5: #{tpu_custom_call.1} parent=1 // pred_fallthru
      _
    // Predicated region
    $region6: #{tpu_custom_call.1} parent=1 // pred_check
      _
    $region7: #{tpu_custom_call.1} parent=1 // pred_check_branch
      %18 = sbr.rel (0) target = $region9
    $region8: #{tpu_custom_call.1} parent=1 // pred_region
      %s20 = ssub.s32 512, 512
      %21 = vsyncadd [#allocation3], %s20
      %s22 = sshll.u32 [#allocation2], 4
      %s23 = int_to_ptr.vmem [resolvable:$true] %s22
      %28 = dma.hbm_to_vmem [thread:$0]  %s1, 512, %s23, [#allocation3], 64, 64, 4
    $region9: #{tpu_custom_call.1} parent=1 // pred_fallthru
      _
    // Predicated region
    $region10: #{tpu_custom_call.1} parent=1 // pred_check
      _
    $region11: #{tpu_custom_call.1} parent=1 // pred_check_branch
      %30 = sbr.rel (0) target = $region13
    $region12: #{tpu_custom_call.1} parent=1 // pred_region
      _
    $region13: #{tpu_custom_call.1} parent=1 // pred_fallthru
      _
    // Predicated region
    $region14: #{tpu_custom_call.1} parent=1 // pred_check
      _
    $region15: #{tpu_custom_call.1} parent=1 // pred_check_branch
      %32 = sbr.rel (0) target = $region17
    $region16: #{tpu_custom_call.1} parent=1 // pred_region
      %s34 = ssub.s32 512, 512
      %35 = vsyncadd [#allocation6], %s34
      %s36 = sshll.u32 [#allocation5], 4
      %s37 = int_to_ptr.vmem [resolvable:$true] %s36
      %42 = dma.hbm_to_vmem [thread:$0]  %s3, 512, %s37, [#allocation6], 64, 64, 4
    $region17: #{tpu_custom_call.1} parent=1 // pred_fallthru
      _
    // Predicated region
    $region18: #{tpu_custom_call.1} parent=1 // pred_check
      _
    $region19: #{tpu_custom_call.1} parent=1 // pred_check_branch
      %44 = sbr.rel (0) target = $region21
    $region20: #{tpu_custom_call.1} parent=1 // pred_region
      _
    $region21: #{tpu_custom_call.1} parent=1 // pred_fallthru
      _
    // Predicated region
    $region22: #{tpu_custom_call.1} parent=1 // pred_check
      _
    $region23: #{tpu_custom_call.1} parent=1 // pred_check_branch
      %46 = sbr.rel (0) target = $region25
    $region24: #{tpu_custom_call.1} parent=1 // pred_region
      %s48 = ssub.s32 256, 256
      %49 = vsyncadd [#allocation6], %s48
      %s50 = sshll.u32 [#allocation7], 4
      %s51 = int_to_ptr.vmem [resolvable:$true] %s50
      %56 = dma.hbm_to_vmem [thread:$0]  %s5, 256, %s51, [#allocation6], 128, 128, 8
    $region25: #{tpu_custom_call.1} parent=1 // pred_fallthru
      _
    // Predicated region
    $region26: #{tpu_custom_call.1} parent=1 // pred_check
      _
    $region27: #{tpu_custom_call.1} parent=1 // pred_check_branch
      %58 = sbr.rel (0) target = $region29
    $region28: #{tpu_custom_call.1} parent=1 // pred_region
      _
    $region29: #{tpu_custom_call.1} parent=1 // pred_fallthru
      _
    // Predicated region
    $region30: #{tpu_custom_call.1} parent=1 // pred_check
      _
    $region31: #{tpu_custom_call.1} parent=1 // pred_check_branch
      %60 = sbr.rel (0) target = $region33
    $region32: #{tpu_custom_call.1} parent=1 // pred_region
      %61 = dma.done [#allocation3], 512
    $region33: #{tpu_custom_call.1} parent=1 // pred_fallthru
      _
    // Predicated region
    $region34: #{tpu_custom_call.1} parent=1 // pred_check
      _
    $region35: #{tpu_custom_call.1} parent=1 // pred_check_branch
      %63 = sbr.rel (0) target = $region37
    $region36: #{tpu_custom_call.1} parent=1 // pred_region
      %64 = dma.done [#allocation6], 512
    $region37: #{tpu_custom_call.1} parent=1 // pred_fallthru
      _
    // Predicated region
    $region38: #{tpu_custom_call.1} parent=1 // pred_check
      _
    $region39: #{tpu_custom_call.1} parent=1 // pred_check_branch
      %66 = sbr.rel (0) target = $region41
    $region40: #{tpu_custom_call.1} parent=1 // pred_region
      %67 = dma.done [#allocation6], 256
    $region41: #{tpu_custom_call.1} parent=1 // pred_fallthru
      _
    %v69 = vld [vmem:[%s0] sm:$0xff]
    %v70 = vld [vmem:[%s0 + $0x8] sm:$0xff]
    %v71 = vld [vmem:[%s0 + $0x10] sm:$0xff]
    %v72 = vld [vmem:[%s0 + $0x18] sm:$0xff]
    %v73 = vld [vmem:[#allocation7] sm:$0x1]
    %v74 = vld [vmem:[#allocation7 + $0x1] sm:$0x1]
    %vm75 = vcmask 261120
    %v76 = vsel %vm75, %v69, 0.0
    %77 = vadd.xlane.f32.xlu0 %v76
    %v78 = vpop.xlane.xlu0 %77
    %v79 = vsel %vm75, %v70, 0.0
    %80 = vadd.xlane.f32.xlu0 %v79
    %v81 = vpop.xlane.xlu0 %80
    %v82 = vsel %vm75, %v71, 0.0
    %83 = vadd.xlane.f32.xlu0 %v82
    %v84 = vpop.xlane.xlu0 %83
    %v85 = vsel %vm75, %v72, 0.0
    %86 = vadd.xlane.f32.xlu0 %v85
    %v87 = vpop.xlane.xlu0 %86
    %v88 = vrcp.pop 32.0
    %v89 = vmul.f32 %v78, %v88
    %v90 = vmul.f32 %v81, %v88
    %v91 = vmul.f32 %v84, %v88
    %v92 = vmul.f32 %v87, %v88
    %v93 = vsub.f32 %v69, %v89
    %v94 = vsub.f32 %v70, %v90
    %v95 = vsub.f32 %v71, %v91
    %v96 = vsub.f32 %v72, %v92
    %v97 = vmul.f32 %v93, %v93
    %v98 = vmul.f32 %v94, %v94
    %v99 = vmul.f32 %v95, %v95
    %v100 = vmul.f32 %v96, %v96
    %v101 = vsel %vm75, %v97, 0.0
    %102 = vadd.xlane.f32.xlu0 %v101
    %v103 = vpop.xlane.xlu0 %102
    %v104 = vsel %vm75, %v98, 0.0
    %105 = vadd.xlane.f32.xlu0 %v104
    %v106 = vpop.xlane.xlu0 %105
    %v107 = vsel %vm75, %v99, 0.0
    %108 = vadd.xlane.f32.xlu0 %v107
    %v109 = vpop.xlane.xlu0 %108
    %v110 = vsel %vm75, %v100, 0.0
    %111 = vadd.xlane.f32.xlu0 %v110
    %v112 = vpop.xlane.xlu0 %111
    %v113 = vmul.f32 %v103, %v88
    %v114 = vmul.f32 %v106, %v88
    %v115 = vmul.f32 %v109, %v88
    %v116 = vmul.f32 %v112, %v88
    %v117 = vadd.f32 %v113, 1e-05
    %v118 = vadd.f32 %v114, 1e-05
    %v119 = vadd.f32 %v115, 1e-05
    %v120 = vadd.f32 %v116, 1e-05
    %v121 = vrsqrt.pop %v117
    %v122 = vrsqrt.pop %v118
    %v123 = vrsqrt.pop %v119
    %v124 = vrsqrt.pop %v120
    %v125 = vmul.f32 %v93, %v121
    %v126 = vmul.f32 %v94, %v122
    %v127 = vmul.f32 %v95, %v123
    %v128 = vmul.f32 %v96, %v124
    %v129 = vlaneseq
    %v130 = vshrl.u32 %v129, 7
    %v131 = vsub.s32 0, %v130
    %v132 = vrot.slane %v73, %v131
    %v133 = vmul.f32 %v125, %v132
    %v134 = vmul.f32 %v126, %v132
    %v135 = vmul.f32 %v127, %v132
    %v136 = vmul.f32 %v128, %v132
    %v137 = vlaneseq
    %v138 = vshrl.u32 %v137, 7
    %v139 = vsub.s32 0, %v138
    %v140 = vrot.slane %v74, %v139
    %v141 = vadd.f32 %v133, %v140
    %v142 = vadd.f32 %v134, %v140
    %v143 = vadd.f32 %v135, %v140
    %v144 = vadd.f32 %v136, %v140
    %v145 = vpack.c.bf16 %v142, %v141
    %v146 = vpack.c.bf16 %v144, %v143
    %v147 = vld [vmem:[#allocation2] sm:$0xf]
    %v148 = vld [vmem:[#allocation2 + $0x4] sm:$0xf]
    %v149 = vld [vmem:[#allocation2 + $0x8] sm:$0xf]
    %v150 = vld [vmem:[#allocation2 + $0xc] sm:$0xf]
    %v155 = vunpack.c.l.b16 %v147
    %v156 = vunpack.c.l.b16 %v148
    %v157 = vunpack.c.l.b16 %v149
    %v158 = vunpack.c.l.b16 %v150
    %v159 = vpack.c.b16 %v156, %v155
    %v160 = vpack.c.b16 %v158, %v157
    %v164 = vsel %vm75, %v145, 0
    %v167 = vsel %vm75, %v146, 0
    %169 = vmatprep.subr.bf16.mxu0 0
    %170 = vmatpush1.bf16.msra.mxu0 0
    %171 = vmatprep.subr.bf16.mxu0 0
    %172 = vmatpush1.bf16.msra.mxu0 0
    %173 = vmatprep.subr.bf16.mxu0 0
    %174 = vmatpush1.bf16.msra.mxu0 0
    %175 = vmatprep.subr.bf16.mxu0 0
    %176 = vmatpush1.bf16.msra.mxu0 0
    %177 = vmatprep.subr.bf16.mxu0 0
    %178 = vmatpush1.bf16.msra.mxu0 0
    %179 = vmatprep.subr.bf16.mxu0 0
    %180 = vmatpush1.bf16.msra.mxu0 0
    %181 = vmatprep.subr.bf16.mxu0 0
    %182 = vmatpush1.bf16.msra.mxu0 %v160
    %183 = vmatprep.subr.bf16.mxu0 0
    %184 = vmatpush1.bf16.msra.mxu0 %v159
    %185 = vmatprep.subr.bf16.mxu0 0
    %186 = vmatpush2.bf16.msra.mxu0 0
    %187 = vmatprep.subr.bf16.mxu0 0
    %188 = vmatpush2.bf16.msra.mxu0 0
    %189 = vmatprep.subr.bf16.mxu0 0
    %190 = vmatpush2.bf16.msra.mxu0 0
    %191 = vmatprep.subr.bf16.mxu0 0
    %192 = vmatpush2.bf16.msra.mxu0 0
    %193 = vmatprep.subr.bf16.mxu0 0
    %194 = vmatpush2.bf16.msra.mxu0 0
    %195 = vmatprep.subr.bf16.mxu0 0
    %196 = vmatpush2.bf16.msra.mxu0 0
    %197 = vmatprep.subr.bf16.mxu0 0
    %198 = vmatpush2.bf16.msra.mxu0 0
    %199 = vmatprep.subr.bf16.mxu0 0
    %200 = vmatpush2.bf16.msra.mxu0 0
    %201 = vmatprep.mubr.bf16.mxu0 0
    %202 = vmatmul.mubr.bf16.gmra.mxu0 %v164
    %v203 = vpop.f32.mrf.mxu0
    %v204 = vadd.f32 0.0, %v203
    %v205 = vpop.f32.mrf.mxu0
    %v206 = vpop.f32.mrf.mxu0
    %v207 = vadd.f32 0.0, %v206
    %v208 = vpop.f32.mrf.mxu0
    %209 = vmatprep.mubr.bf16.mxu0 0
    %210 = vmatmul.mubr.bf16.gmra.mxu0 %v167
    %v211 = vpop.f32.mrf.mxu0
    %v212 = vadd.f32 0.0, %v211
    %v213 = vpop.f32.mrf.mxu0
    %v214 = vpop.f32.mrf.mxu0
    %v215 = vadd.f32 0.0, %v214
    %v216 = vpop.f32.mrf.mxu0
    %217 = vdwg.mxu0
    %222 = vrot.lane.b32.xlu0 %v204, 104
    %v223 = vpop.permute.xlu0 %222
    %224 = vrot.lane.b32.xlu0 %v207, 104
    %v225 = vpop.permute.xlu0 %224
    %226 = vrot.lane.b32.xlu0 %v212, 104
    %v227 = vpop.permute.xlu0 %226
    %228 = vrot.lane.b32.xlu0 %v215, 104
    %v229 = vpop.permute.xlu0 %228
    %234 = vrot.lane.b32.xlu0 %v204, 80
    %v235 = vpop.permute.xlu0 %234
    %236 = vrot.lane.b32.xlu0 %v207, 80
    %v237 = vpop.permute.xlu0 %236
    %238 = vrot.lane.b32.xlu0 %v212, 80
    %v239 = vpop.permute.xlu0 %238
    %240 = vrot.lane.b32.xlu0 %v215, 80
    %v241 = vpop.permute.xlu0 %240
    %246 = vrot.lane.b32.xlu0 %v204, 56
    %v247 = vpop.permute.xlu0 %246
    %248 = vrot.lane.b32.xlu0 %v207, 56
    %v249 = vpop.permute.xlu0 %248
    %250 = vrot.lane.b32.xlu0 %v212, 56
    %v251 = vpop.permute.xlu0 %250
    %252 = vrot.lane.b32.xlu0 %v215, 56
    %v253 = vpop.permute.xlu0 %252
    %v258 = vpack.c.bf16 %v207, %v204
    %v259 = vpack.c.bf16 %v215, %v212
    %v260 = vpack.c.bf16 %v225, %v223
    %v261 = vpack.c.bf16 %v229, %v227
    %v262 = vpack.c.bf16 %v237, %v235
    %v263 = vpack.c.bf16 %v241, %v239
    %v264 = vpack.c.bf16 %v249, %v247
    %v265 = vpack.c.bf16 %v253, %v251
    %267 = vrot.lane.b32.xlu0 %v258, 120
    %v268 = vpop.permute.xlu0 %267
    %vm269 = vcmask 64512
    %v271 = vsel %vm269, %v258, 0
    %v274 = vsel %vm269, %v268, 0
    %276 = vmatprep.subr.bf16.mxu0 0
    %277 = vmatpush1.bf16.xpose.msra.mxu0 0
    %278 = vmatprep.subr.bf16.mxu0 0
    %279 = vmatpush1.bf16.xpose.msra.mxu0 0
    %280 = vmatprep.subr.bf16.mxu0 0
    %281 = vmatpush1.bf16.xpose.msra.mxu0 0
    %282 = vmatprep.subr.bf16.mxu0 0
    %283 = vmatpush1.bf16.xpose.msra.mxu0 0
    %284 = vmatprep.subr.bf16.mxu0 0
    %285 = vmatpush1.bf16.xpose.msra.mxu0 0
    %286 = vmatprep.subr.bf16.mxu0 0
    %287 = vmatpush1.bf16.xpose.msra.mxu0 0
    %288 = vmatprep.subr.bf16.mxu0 0
    %289 = vmatpush1.bf16.xpose.msra.mxu0 0
    %290 = vmatprep.subr.bf16.mxu0 0
    %291 = vmatpush1.bf16.xpose.msra.mxu0 %v274
    %292 = vmatprep.subr.bf16.mxu0 0
    %293 = vmatpush2.bf16.xpose.msra.mxu0 0
    %294 = vmatprep.subr.bf16.mxu0 0
    %295 = vmatpush2.bf16.xpose.msra.mxu0 0
    %296 = vmatprep.subr.bf16.mxu0 0
    %297 = vmatpush2.bf16.xpose.msra.mxu0 0
    %298 = vmatprep.subr.bf16.mxu0 0
    %299 = vmatpush2.bf16.xpose.msra.mxu0 0
    %300 = vmatprep.subr.bf16.mxu0 0
    %301 = vmatpush2.bf16.xpose.msra.mxu0 0
    %302 = vmatprep.subr.bf16.mxu0 0
    %303 = vmatpush2.bf16.xpose.msra.mxu0 0
    %304 = vmatprep.subr.bf16.mxu0 0
    %305 = vmatpush2.bf16.xpose.msra.mxu0 0
    %306 = vmatprep.subr.bf16.mxu0 0
    %307 = vmatpush2.bf16.xpose.msra.mxu0 0
    %308 = vmatprep.mubr.bf16.mxu0 0
    %309 = vmatmul.mubr.bf16.gmra.mxu0 %v271
    %v310 = vpop.f32.mrf.mxu0
    %v311 = vadd.f32 0.0, %v310
    %v312 = vpop.f32.mrf.mxu0
    %v313 = vpop.f32.mrf.mxu0
    %v314 = vadd.f32 0.0, %v313
    %v315 = vpop.f32.mrf.mxu0
    %316 = vdwg.mxu0
    %318 = vrot.lane.b32.xlu0 %v259, 120
    %v319 = vpop.permute.xlu0 %318
    %v321 = vsel %vm269, %v259, 0
    %v324 = vsel %vm269, %v319, 0
    %326 = vmatprep.subr.bf16.mxu0 0
    %327 = vmatpush1.bf16.xpose.msra.mxu0 0
    %328 = vmatprep.subr.bf16.mxu0 0
    %329 = vmatpush1.bf16.xpose.msra.mxu0 0
    %330 = vmatprep.subr.bf16.mxu0 0
    %331 = vmatpush1.bf16.xpose.msra.mxu0 0
    %332 = vmatprep.subr.bf16.mxu0 0
    %333 = vmatpush1.bf16.xpose.msra.mxu0 0
    %334 = vmatprep.subr.bf16.mxu0 0
    %335 = vmatpush1.bf16.xpose.msra.mxu0 0
    %336 = vmatprep.subr.bf16.mxu0 0
    %337 = vmatpush1.bf16.xpose.msra.mxu0 0
    %338 = vmatprep.subr.bf16.mxu0 0
    %339 = vmatpush1.bf16.xpose.msra.mxu0 0
    %340 = vmatprep.subr.bf16.mxu0 0
    %341 = vmatpush1.bf16.xpose.msra.mxu0 %v324
    %342 = vmatprep.subr.bf16.mxu0 0
    %343 = vmatpush2.bf16.xpose.msra.mxu0 0
    %344 = vmatprep.subr.bf16.mxu0 0
    %345 = vmatpush2.bf16.xpose.msra.mxu0 0
    %346 = vmatprep.subr.bf16.mxu0 0
    %347 = vmatpush2.bf16.xpose.msra.mxu0 0
    %348 = vmatprep.subr.bf16.mxu0 0
    %349 = vmatpush2.bf16.xpose.msra.mxu0 0
    %350 = vmatprep.subr.bf16.mxu0 0
    %351 = vmatpush2.bf16.xpose.msra.mxu0 0
    %352 = vmatprep.subr.bf16.mxu0 0
    %353 = vmatpush2.bf16.xpose.msra.mxu0 0
    %354 = vmatprep.subr.bf16.mxu0 0
    %355 = vmatpush2.bf16.xpose.msra.mxu0 0
    %356 = vmatprep.subr.bf16.mxu0 0
    %357 = vmatpush2.bf16.xpose.msra.mxu0 0
    %358 = vmatprep.mubr.bf16.mxu0 0
    %359 = vmatmul.mubr.bf16.gmra.mxu0 %v321
    %v360 = vpop.f32.mrf.mxu0
    %v361 = vadd.f32 0.0, %v360
    %v362 = vpop.f32.mrf.mxu0
    %v363 = vpop.f32.mrf.mxu0
    %v364 = vadd.f32 0.0, %v363
    %v365 = vpop.f32.mrf.mxu0
    %366 = vdwg.mxu0
    %368 = vrot.lane.b32.xlu0 %v260, 120
    %v369 = vpop.permute.xlu0 %368
    %v371 = vsel %vm269, %v260, 0
    %v374 = vsel %vm269, %v369, 0
    %376 = vmatprep.subr.bf16.mxu0 0
    %377 = vmatpush1.bf16.xpose.msra.mxu0 0
    %378 = vmatprep.subr.bf16.mxu0 0
    %379 = vmatpush1.bf16.xpose.msra.mxu0 0
    %380 = vmatprep.subr.bf16.mxu0 0
    %381 = vmatpush1.bf16.xpose.msra.mxu0 0
    %382 = vmatprep.subr.bf16.mxu0 0
    %383 = vmatpush1.bf16.xpose.msra.mxu0 0
    %384 = vmatprep.subr.bf16.mxu0 0
    %385 = vmatpush1.bf16.xpose.msra.mxu0 0
    %386 = vmatprep.subr.bf16.mxu0 0
    %387 = vmatpush1.bf16.xpose.msra.mxu0 0
    %388 = vmatprep.subr.bf16.mxu0 0
    %389 = vmatpush1.bf16.xpose.msra.mxu0 0
    %390 = vmatprep.subr.bf16.mxu0 0
    %391 = vmatpush1.bf16.xpose.msra.mxu0 %v374
    %392 = vmatprep.subr.bf16.mxu0 0
    %393 = vmatpush2.bf16.xpose.msra.mxu0 0
    %394 = vmatprep.subr.bf16.mxu0 0
    %395 = vmatpush2.bf16.xpose.msra.mxu0 0
    %396 = vmatprep.subr.bf16.mxu0 0
    %397 = vmatpush2.bf16.xpose.msra.mxu0 0
    %398 = vmatprep.subr.bf16.mxu0 0
    %399 = vmatpush2.bf16.xpose.msra.mxu0 0
    %400 = vmatprep.subr.bf16.mxu0 0
    %401 = vmatpush2.bf16.xpose.msra.mxu0 0
    %402 = vmatprep.subr.bf16.mxu0 0
    %403 = vmatpush2.bf16.xpose.msra.mxu0 0
    %404 = vmatprep.subr.bf16.mxu0 0
    %405 = vmatpush2.bf16.xpose.msra.mxu0 0
    %406 = vmatprep.subr.bf16.mxu0 0
    %407 = vmatpush2.bf16.xpose.msra.mxu0 0
    %408 = vmatprep.mubr.bf16.mxu0 0
    %409 = vmatmul.mubr.bf16.gmra.mxu0 %v371
    %v410 = vpop.f32.mrf.mxu0
    %v411 = vadd.f32 0.0, %v410
    %v412 = vpop.f32.mrf.mxu0
    %v413 = vpop.f32.mrf.mxu0
    %v414 = vadd.f32 0.0, %v413
    %v415 = vpop.f32.mrf.mxu0
    %416 = vdwg.mxu0
    %418 = vrot.lane.b32.xlu0 %v261, 120
    %v419 = vpop.permute.xlu0 %418
    %v421 = vsel %vm269, %v261, 0
    %v424 = vsel %vm269, %v419, 0
    %426 = vmatprep.subr.bf16.mxu0 0
    %427 = vmatpush1.bf16.xpose.msra.mxu0 0
    %428 = vmatprep.subr.bf16.mxu0 0
    %429 = vmatpush1.bf16.xpose.msra.mxu0 0
    %430 = vmatprep.subr.bf16.mxu0 0
    %431 = vmatpush1.bf16.xpose.msra.mxu0 0
    %432 = vmatprep.subr.bf16.mxu0 0
    %433 = vmatpush1.bf16.xpose.msra.mxu0 0
    %434 = vmatprep.subr.bf16.mxu0 0
    %435 = vmatpush1.bf16.xpose.msra.mxu0 0
    %436 = vmatprep.subr.bf16.mxu0 0
    %437 = vmatpush1.bf16.xpose.msra.mxu0 0
    %438 = vmatprep.subr.bf16.mxu0 0
    %439 = vmatpush1.bf16.xpose.msra.mxu0 0
    %440 = vmatprep.subr.bf16.mxu0 0
    %441 = vmatpush1.bf16.xpose.msra.mxu0 %v424
    %442 = vmatprep.subr.bf16.mxu0 0
    %443 = vmatpush2.bf16.xpose.msra.mxu0 0
    %444 = vmatprep.subr.bf16.mxu0 0
    %445 = vmatpush2.bf16.xpose.msra.mxu0 0
    %446 = vmatprep.subr.bf16.mxu0 0
    %447 = vmatpush2.bf16.xpose.msra.mxu0 0
    %448 = vmatprep.subr.bf16.mxu0 0
    %449 = vmatpush2.bf16.xpose.msra.mxu0 0
    %450 = vmatprep.subr.bf16.mxu0 0
    %451 = vmatpush2.bf16.xpose.msra.mxu0 0
    %452 = vmatprep.subr.bf16.mxu0 0
    %453 = vmatpush2.bf16.xpose.msra.mxu0 0
    %454 = vmatprep.subr.bf16.mxu0 0
    %455 = vmatpush2.bf16.xpose.msra.mxu0 0
    %456 = vmatprep.subr.bf16.mxu0 0
    %457 = vmatpush2.bf16.xpose.msra.mxu0 0
    %458 = vmatprep.mubr.bf16.mxu0 0
    %459 = vmatmul.mubr.bf16.gmra.mxu0 %v421
    %v460 = vpop.f32.mrf.mxu0
    %v461 = vadd.f32 0.0, %v460
    %v462 = vpop.f32.mrf.mxu0
    %v463 = vpop.f32.mrf.mxu0
    %v464 = vadd.f32 0.0, %v463
    %v465 = vpop.f32.mrf.mxu0
    %466 = vdwg.mxu0
    %468 = vrot.lane.b32.xlu0 %v262, 120
    %v469 = vpop.permute.xlu0 %468
    %v471 = vsel %vm269, %v262, 0
    %v474 = vsel %vm269, %v469, 0
    %476 = vmatprep.subr.bf16.mxu0 0
    %477 = vmatpush1.bf16.xpose.msra.mxu0 0
    %478 = vmatprep.subr.bf16.mxu0 0
    %479 = vmatpush1.bf16.xpose.msra.mxu0 0
    %480 = vmatprep.subr.bf16.mxu0 0
    %481 = vmatpush1.bf16.xpose.msra.mxu0 0
    %482 = vmatprep.subr.bf16.mxu0 0
    %483 = vmatpush1.bf16.xpose.msra.mxu0 0
    %484 = vmatprep.subr.bf16.mxu0 0
    %485 = vmatpush1.bf16.xpose.msra.mxu0 0
    %486 = vmatprep.subr.bf16.mxu0 0
    %487 = vmatpush1.bf16.xpose.msra.mxu0 0
    %488 = vmatprep.subr.bf16.mxu0 0
    %489 = vmatpush1.bf16.xpose.msra.mxu0 0
    %490 = vmatprep.subr.bf16.mxu0 0
    %491 = vmatpush1.bf16.xpose.msra.mxu0 %v474
    %492 = vmatprep.subr.bf16.mxu0 0
    %493 = vmatpush2.bf16.xpose.msra.mxu0 0
    %494 = vmatprep.subr.bf16.mxu0 0
    %495 = vmatpush2.bf16.xpose.msra.mxu0 0
    %496 = vmatprep.subr.bf16.mxu0 0
    %497 = vmatpush2.bf16.xpose.msra.mxu0 0
    %498 = vmatprep.subr.bf16.mxu0 0
    %499 = vmatpush2.bf16.xpose.msra.mxu0 0
    %500 = vmatprep.subr.bf16.mxu0 0
    %501 = vmatpush2.bf16.xpose.msra.mxu0 0
    %502 = vmatprep.subr.bf16.mxu0 0
    %503 = vmatpush2.bf16.xpose.msra.mxu0 0
    %504 = vmatprep.subr.bf16.mxu0 0
    %505 = vmatpush2.bf16.xpose.msra.mxu0 0
    %506 = vmatprep.subr.bf16.mxu0 0
    %507 = vmatpush2.bf16.xpose.msra.mxu0 0
    %508 = vmatprep.mubr.bf16.mxu0 0
    %509 = vmatmul.mubr.bf16.gmra.mxu0 %v471
    %v510 = vpop.f32.mrf.mxu0
    %v511 = vadd.f32 0.0, %v510
    %v512 = vpop.f32.mrf.mxu0
    %v513 = vpop.f32.mrf.mxu0
    %v514 = vadd.f32 0.0, %v513
    %v515 = vpop.f32.mrf.mxu0
    %516 = vdwg.mxu0
    %518 = vrot.lane.b32.xlu0 %v263, 120
    %v519 = vpop.permute.xlu0 %518
    %v521 = vsel %vm269, %v263, 0
    %v524 = vsel %vm269, %v519, 0
    %526 = vmatprep.subr.bf16.mxu0 0
    %527 = vmatpush1.bf16.xpose.msra.mxu0 0
    %528 = vmatprep.subr.bf16.mxu0 0
    %529 = vmatpush1.bf16.xpose.msra.mxu0 0
    %530 = vmatprep.subr.bf16.mxu0 0
    %531 = vmatpush1.bf16.xpose.msra.mxu0 0
    %532 = vmatprep.subr.bf16.mxu0 0
    %533 = vmatpush1.bf16.xpose.msra.mxu0 0
    %534 = vmatprep.subr.bf16.mxu0 0
    %535 = vmatpush1.bf16.xpose.msra.mxu0 0
    %536 = vmatprep.subr.bf16.mxu0 0
    %537 = vmatpush1.bf16.xpose.msra.mxu0 0
    %538 = vmatprep.subr.bf16.mxu0 0
    %539 = vmatpush1.bf16.xpose.msra.mxu0 0
    %540 = vmatprep.subr.bf16.mxu0 0
    %541 = vmatpush1.bf16.xpose.msra.mxu0 %v524
    %542 = vmatprep.subr.bf16.mxu0 0
    %543 = vmatpush2.bf16.xpose.msra.mxu0 0
    %544 = vmatprep.subr.bf16.mxu0 0
    %545 = vmatpush2.bf16.xpose.msra.mxu0 0
    %546 = vmatprep.subr.bf16.mxu0 0
    %547 = vmatpush2.bf16.xpose.msra.mxu0 0
    %548 = vmatprep.subr.bf16.mxu0 0
    %549 = vmatpush2.bf16.xpose.msra.mxu0 0
    %550 = vmatprep.subr.bf16.mxu0 0
    %551 = vmatpush2.bf16.xpose.msra.mxu0 0
    %552 = vmatprep.subr.bf16.mxu0 0
    %553 = vmatpush2.bf16.xpose.msra.mxu0 0
    %554 = vmatprep.subr.bf16.mxu0 0
    %555 = vmatpush2.bf16.xpose.msra.mxu0 0
    %556 = vmatprep.subr.bf16.mxu0 0
    %557 = vmatpush2.bf16.xpose.msra.mxu0 0
    %558 = vmatprep.mubr.bf16.mxu0 0
    %559 = vmatmul.mubr.bf16.gmra.mxu0 %v521
    %v560 = vpop.f32.mrf.mxu0
    %v561 = vadd.f32 0.0, %v560
    %v562 = vpop.f32.mrf.mxu0
    %v563 = vpop.f32.mrf.mxu0
    %v564 = vadd.f32 0.0, %v563
    %v565 = vpop.f32.mrf.mxu0
    %566 = vdwg.mxu0
    %568 = vrot.lane.b32.xlu0 %v264, 120
    %v569 = vpop.permute.xlu0 %568
    %v571 = vsel %vm269, %v264, 0
    %v574 = vsel %vm269, %v569, 0
    %576 = vmatprep.subr.bf16.mxu0 0
    %577 = vmatpush1.bf16.xpose.msra.mxu0 0
    %578 = vmatprep.subr.bf16.mxu0 0
    %579 = vmatpush1.bf16.xpose.msra.mxu0 0
    %580 = vmatprep.subr.bf16.mxu0 0
    %581 = vmatpush1.bf16.xpose.msra.mxu0 0
    %582 = vmatprep.subr.bf16.mxu0 0
    %583 = vmatpush1.bf16.xpose.msra.mxu0 0
    %584 = vmatprep.subr.bf16.mxu0 0
    %585 = vmatpush1.bf16.xpose.msra.mxu0 0
    %586 = vmatprep.subr.bf16.mxu0 0
    %587 = vmatpush1.bf16.xpose.msra.mxu0 0
    %588 = vmatprep.subr.bf16.mxu0 0
    %589 = vmatpush1.bf16.xpose.msra.mxu0 0
    %590 = vmatprep.subr.bf16.mxu0 0
    %591 = vmatpush1.bf16.xpose.msra.mxu0 %v574
    %592 = vmatprep.subr.bf16.mxu0 0
    %593 = vmatpush2.bf16.xpose.msra.mxu0 0
    %594 = vmatprep.subr.bf16.mxu0 0
    %595 = vmatpush2.bf16.xpose.msra.mxu0 0
    %596 = vmatprep.subr.bf16.mxu0 0
    %597 = vmatpush2.bf16.xpose.msra.mxu0 0
    %598 = vmatprep.subr.bf16.mxu0 0
    %599 = vmatpush2.bf16.xpose.msra.mxu0 0
    %600 = vmatprep.subr.bf16.mxu0 0
    %601 = vmatpush2.bf16.xpose.msra.mxu0 0
    %602 = vmatprep.subr.bf16.mxu0 0
    %603 = vmatpush2.bf16.xpose.msra.mxu0 0
    %604 = vmatprep.subr.bf16.mxu0 0
    %605 = vmatpush2.bf16.xpose.msra.mxu0 0
    %606 = vmatprep.subr.bf16.mxu0 0
    %607 = vmatpush2.bf16.xpose.msra.mxu0 0
    %608 = vmatprep.mubr.bf16.mxu0 0
    %609 = vmatmul.mubr.bf16.gmra.mxu0 %v571
    %v610 = vpop.f32.mrf.mxu0
    %v611 = vadd.f32 0.0, %v610
    %v612 = vpop.f32.mrf.mxu0
    %v613 = vpop.f32.mrf.mxu0
    %v614 = vadd.f32 0.0, %v613
    %v615 = vpop.f32.mrf.mxu0
    %616 = vdwg.mxu0
    %618 = vrot.lane.b32.xlu0 %v265, 120
    %v619 = vpop.permute.xlu0 %618
    %v621 = vsel %vm269, %v265, 0
    %v624 = vsel %vm269, %v619, 0
    %626 = vmatprep.subr.bf16.mxu0 0
    %627 = vmatpush1.bf16.xpose.msra.mxu0 0
    %628 = vmatprep.subr.bf16.mxu0 0
    %629 = vmatpush1.bf16.xpose.msra.mxu0 0
    %630 = vmatprep.subr.bf16.mxu0 0
    %631 = vmatpush1.bf16.xpose.msra.mxu0 0
    %632 = vmatprep.subr.bf16.mxu0 0
    %633 = vmatpush1.bf16.xpose.msra.mxu0 0
    %634 = vmatprep.subr.bf16.mxu0 0
    %635 = vmatpush1.bf16.xpose.msra.mxu0 0
    %636 = vmatprep.subr.bf16.mxu0 0
    %637 = vmatpush1.bf16.xpose.msra.mxu0 0
    %638 = vmatprep.subr.bf16.mxu0 0
    %639 = vmatpush1.bf16.xpose.msra.mxu0 0
    %640 = vmatprep.subr.bf16.mxu0 0
    %641 = vmatpush1.bf16.xpose.msra.mxu0 %v624
    %642 = vmatprep.subr.bf16.mxu0 0
    %643 = vmatpush2.bf16.xpose.msra.mxu0 0
    %644 = vmatprep.subr.bf16.mxu0 0
    %645 = vmatpush2.bf16.xpose.msra.mxu0 0
    %646 = vmatprep.subr.bf16.mxu0 0
    %647 = vmatpush2.bf16.xpose.msra.mxu0 0
    %648 = vmatprep.subr.bf16.mxu0 0
    %649 = vmatpush2.bf16.xpose.msra.mxu0 0
    %650 = vmatprep.subr.bf16.mxu0 0
    %651 = vmatpush2.bf16.xpose.msra.mxu0 0
    %652 = vmatprep.subr.bf16.mxu0 0
    %653 = vmatpush2.bf16.xpose.msra.mxu0 0
    %654 = vmatprep.subr.bf16.mxu0 0
    %655 = vmatpush2.bf16.xpose.msra.mxu0 0
    %656 = vmatprep.subr.bf16.mxu0 0
    %657 = vmatpush2.bf16.xpose.msra.mxu0 0
    %658 = vmatprep.mubr.bf16.mxu0 0
    %659 = vmatmul.mubr.bf16.gmra.mxu0 %v621
    %v660 = vpop.f32.mrf.mxu0
    %v661 = vadd.f32 0.0, %v660
    %v662 = vpop.f32.mrf.mxu0
    %v663 = vpop.f32.mrf.mxu0
    %v664 = vadd.f32 0.0, %v663
    %v665 = vpop.f32.mrf.mxu0
    %666 = vdwg.mxu0
    %v667 = vmul.f32 %v311, 0.35355338
    %v668 = vmul.f32 %v314, 0.35355338
    %v669 = vmul.f32 %v361, 0.35355338
    %v670 = vmul.f32 %v364, 0.35355338
    %v671 = vmul.f32 %v411, 0.35355338
    %v672 = vmul.f32 %v414, 0.35355338
    %v673 = vmul.f32 %v461, 0.35355338
    %v674 = vmul.f32 %v464, 0.35355338
    %v675 = vmul.f32 %v511, 0.35355338
    %v676 = vmul.f32 %v514, 0.35355338
    %v677 = vmul.f32 %v561, 0.35355338
    %v678 = vmul.f32 %v564, 0.35355338
    %v679 = vmul.f32 %v611, 0.35355338
    %v680 = vmul.f32 %v614, 0.35355338
    %v681 = vmul.f32 %v661, 0.35355338
    %v682 = vmul.f32 %v664, 0.35355338
    %vm683 = vcmask 130048
    %v684 = vsel %vm683, %v667, -inf
    %685 = vmax.xlane.f32.xlu0 %v684
    %v686 = vpop.xlane.xlu0 %685
    %v687 = vsel %vm683, %v668, -inf
    %688 = vmax.xlane.f32.xlu0 %v687
    %v689 = vpop.xlane.xlu0 %688
    %v690 = vsel %vm683, %v669, -inf
    %691 = vmax.xlane.f32.xlu0 %v690
    %v692 = vpop.xlane.xlu0 %691
    %v693 = vsel %vm683, %v670, -inf
    %694 = vmax.xlane.f32.xlu0 %v693
    %v695 = vpop.xlane.xlu0 %694
    %v696 = vsel %vm683, %v671, -inf
    %697 = vmax.xlane.f32.xlu0 %v696
    %v698 = vpop.xlane.xlu0 %697
    %v699 = vsel %vm683, %v672, -inf
    %700 = vmax.xlane.f32.xlu0 %v699
    %v701 = vpop.xlane.xlu0 %700
    %v702 = vsel %vm683, %v673, -inf
    %703 = vmax.xlane.f32.xlu0 %v702
    %v704 = vpop.xlane.xlu0 %703
    %v705 = vsel %vm683, %v674, -inf
    %706 = vmax.xlane.f32.xlu0 %v705
    %v707 = vpop.xlane.xlu0 %706
    %v708 = vsel %vm683, %v675, -inf
    %709 = vmax.xlane.f32.xlu0 %v708
    %v710 = vpop.xlane.xlu0 %709
    %v711 = vsel %vm683, %v676, -inf
    %712 = vmax.xlane.f32.xlu0 %v711
    %v713 = vpop.xlane.xlu0 %712
    %v714 = vsel %vm683, %v677, -inf
    %715 = vmax.xlane.f32.xlu0 %v714
    %v716 = vpop.xlane.xlu0 %715
    %v717 = vsel %vm683, %v678, -inf
    %718 = vmax.xlane.f32.xlu0 %v717
    %v719 = vpop.xlane.xlu0 %718
    %v720 = vsel %vm683, %v679, -inf
    %721 = vmax.xlane.f32.xlu0 %v720
    %v722 = vpop.xlane.xlu0 %721
    %v723 = vsel %vm683, %v680, -inf
    %724 = vmax.xlane.f32.xlu0 %v723
    %v725 = vpop.xlane.xlu0 %724
    %v726 = vsel %vm683, %v681, -inf
    %727 = vmax.xlane.f32.xlu0 %v726
    %v728 = vpop.xlane.xlu0 %727
    %v729 = vsel %vm683, %v682, -inf
    %730 = vmax.xlane.f32.xlu0 %v729
    %v731 = vpop.xlane.xlu0 %730
    %v732 = vsub.f32 %v667, %v686
    %v733 = vsub.f32 %v668, %v689
    %v734 = vsub.f32 %v669, %v692
    %v735 = vsub.f32 %v670, %v695
    %v736 = vsub.f32 %v671, %v698
    %v737 = vsub.f32 %v672, %v701
    %v738 = vsub.f32 %v673, %v704
    %v739 = vsub.f32 %v674, %v707
    %v740 = vsub.f32 %v675, %v710
    %v741 = vsub.f32 %v676, %v713
    %v742 = vsub.f32 %v677, %v716
    %v743 = vsub.f32 %v678, %v719
    %v744 = vsub.f32 %v679, %v722
    %v745 = vsub.f32 %v680, %v725
    %v746 = vsub.f32 %v681, %v728
    %v747 = vsub.f32 %v682, %v731
    %v748 = vmul.f32 %v732, 1.442695
    %v749 = vpow.pop %v748
    %v750 = vmul.f32 %v733, 1.442695
    %v751 = vpow.pop %v750
    %v752 = vmul.f32 %v734, 1.442695
    %v753 = vpow.pop %v752
    %v754 = vmul.f32 %v735, 1.442695
    %v755 = vpow.pop %v754
    %v756 = vmul.f32 %v736, 1.442695
    %v757 = vpow.pop %v756
    %v758 = vmul.f32 %v737, 1.442695
    %v759 = vpow.pop %v758
    %v760 = vmul.f32 %v738, 1.442695
    %v761 = vpow.pop %v760
    %v762 = vmul.f32 %v739, 1.442695
    %v763 = vpow.pop %v762
    %v764 = vmul.f32 %v740, 1.442695
    %v765 = vpow.pop %v764
    %v766 = vmul.f32 %v741, 1.442695
    %v767 = vpow.pop %v766
    %v768 = vmul.f32 %v742, 1.442695
    %v769 = vpow.pop %v768
    %v770 = vmul.f32 %v743, 1.442695
    %v771 = vpow.pop %v770
    %v772 = vmul.f32 %v744, 1.442695
    %v773 = vpow.pop %v772
    %v774 = vmul.f32 %v745, 1.442695
    %v775 = vpow.pop %v774
    %v776 = vmul.f32 %v746, 1.442695
    %v777 = vpow.pop %v776
    %v778 = vmul.f32 %v747, 1.442695
    %v779 = vpow.pop %v778
    %v780 = vsel %vm683, %v749, 0.0
    %781 = vadd.xlane.f32.xlu0 %v780
    %v782 = vpop.xlane.xlu0 %781
    %v783 = vsel %vm683, %v751, 0.0
    %784 = vadd.xlane.f32.xlu0 %v783
    %v785 = vpop.xlane.xlu0 %784
    %v786 = vsel %vm683, %v753, 0.0
    %787 = vadd.xlane.f32.xlu0 %v786
    %v788 = vpop.xlane.xlu0 %787
    %v789 = vsel %vm683, %v755, 0.0
    %790 = vadd.xlane.f32.xlu0 %v789
    %v791 = vpop.xlane.xlu0 %790
    %v792 = vsel %vm683, %v757, 0.0
    %793 = vadd.xlane.f32.xlu0 %v792
    %v794 = vpop.xlane.xlu0 %793
    %v795 = vsel %vm683, %v759, 0.0
    %796 = vadd.xlane.f32.xlu0 %v795
    %v797 = vpop.xlane.xlu0 %796
    %v798 = vsel %vm683, %v761, 0.0
    %799 = vadd.xlane.f32.xlu0 %v798
    %v800 = vpop.xlane.xlu0 %799
    %v801 = vsel %vm683, %v763, 0.0
    %802 = vadd.xlane.f32.xlu0 %v801
    %v803 = vpop.xlane.xlu0 %802
    %v804 = vsel %vm683, %v765, 0.0
    %805 = vadd.xlane.f32.xlu0 %v804
    %v806 = vpop.xlane.xlu0 %805
    %v807 = vsel %vm683, %v767, 0.0
    %808 = vadd.xlane.f32.xlu0 %v807
    %v809 = vpop.xlane.xlu0 %808
    %v810 = vsel %vm683, %v769, 0.0
    %811 = vadd.xlane.f32.xlu0 %v810
    %v812 = vpop.xlane.xlu0 %811
    %v813 = vsel %vm683, %v771, 0.0
    %814 = vadd.xlane.f32.xlu0 %v813
    %v815 = vpop.xlane.xlu0 %814
    %v816 = vsel %vm683, %v773, 0.0
    %817 = vadd.xlane.f32.xlu0 %v816
    %v818 = vpop.xlane.xlu0 %817
    %v819 = vsel %vm683, %v775, 0.0
    %820 = vadd.xlane.f32.xlu0 %v819
    %v821 = vpop.xlane.xlu0 %820
    %v822 = vsel %vm683, %v777, 0.0
    %823 = vadd.xlane.f32.xlu0 %v822
    %v824 = vpop.xlane.xlu0 %823
    %v825 = vsel %vm683, %v779, 0.0
    %826 = vadd.xlane.f32.xlu0 %v825
    %v827 = vpop.xlane.xlu0 %826
    %v828 = vrcp.pop %v782
    %v829 = vmul.f32 %v749, %v828
    %v830 = vrcp.pop %v785
    %v831 = vmul.f32 %v751, %v830
    %v832 = vrcp.pop %v788
    %v833 = vmul.f32 %v753, %v832
    %v834 = vrcp.pop %v791
    %v835 = vmul.f32 %v755, %v834
    %v836 = vrcp.pop %v794
    %v837 = vmul.f32 %v757, %v836
    %v838 = vrcp.pop %v797
    %v839 = vmul.f32 %v759, %v838
    %v840 = vrcp.pop %v800
    %v841 = vmul.f32 %v761, %v840
    %v842 = vrcp.pop %v803
    %v843 = vmul.f32 %v763, %v842
    %v844 = vrcp.pop %v806
    %v845 = vmul.f32 %v765, %v844
    %v846 = vrcp.pop %v809
    %v847 = vmul.f32 %v767, %v846
    %v848 = vrcp.pop %v812
    %v849 = vmul.f32 %v769, %v848
    %v850 = vrcp.pop %v815
    %v851 = vmul.f32 %v771, %v850
    %v852 = vrcp.pop %v818
    %v853 = vmul.f32 %v773, %v852
    %v854 = vrcp.pop %v821
    %v855 = vmul.f32 %v775, %v854
    %v856 = vrcp.pop %v824
    %v857 = vmul.f32 %v777, %v856
    %v858 = vrcp.pop %v827
    %v859 = vmul.f32 %v779, %v858
    %v860 = vpack.c.bf16 %v831, %v829
    %v861 = vpack.c.bf16 %v835, %v833
    %v862 = vpack.c.bf16 %v839, %v837
    %v863 = vpack.c.bf16 %v843, %v841
    %v864 = vpack.c.bf16 %v847, %v845
    %v865 = vpack.c.bf16 %v851, %v849
    %v866 = vpack.c.bf16 %v855, %v853
    %v867 = vpack.c.bf16 %v859, %v857
    %868 = vrot.lane.b32.xlu0 %v258, 112
    %v869 = vpop.permute.xlu0 %868
    %v872 = vsel %vm683, %v860, 0
    %874 = vmatprep.subr.bf16.mxu0 0
    %875 = vmatpush1.bf16.msra.mxu0 0
    %876 = vmatprep.subr.bf16.mxu0 0
    %877 = vmatpush1.bf16.msra.mxu0 0
    %878 = vmatprep.subr.bf16.mxu0 0
    %879 = vmatpush1.bf16.msra.mxu0 0
    %880 = vmatprep.subr.bf16.mxu0 0
    %881 = vmatpush1.bf16.msra.mxu0 0
    %882 = vmatprep.subr.bf16.mxu0 0
    %883 = vmatpush1.bf16.msra.mxu0 0
    %884 = vmatprep.subr.bf16.mxu0 0
    %885 = vmatpush1.bf16.msra.mxu0 0
    %886 = vmatprep.subr.bf16.mxu0 0
    %887 = vmatpush1.bf16.msra.mxu0 0
    %888 = vmatprep.subr.bf16.mxu0 0
    %889 = vmatpush1.bf16.msra.mxu0 %v869
    %890 = vmatprep.subr.bf16.mxu0 0
    %891 = vmatpush2.bf16.msra.mxu0 0
    %892 = vmatprep.subr.bf16.mxu0 0
    %893 = vmatpush2.bf16.msra.mxu0 0
    %894 = vmatprep.subr.bf16.mxu0 0
    %895 = vmatpush2.bf16.msra.mxu0 0
    %896 = vmatprep.subr.bf16.mxu0 0
    %897 = vmatpush2.bf16.msra.mxu0 0
    %898 = vmatprep.subr.bf16.mxu0 0
    %899 = vmatpush2.bf16.msra.mxu0 0
    %900 = vmatprep.subr.bf16.mxu0 0
    %901 = vmatpush2.bf16.msra.mxu0 0
    %902 = vmatprep.subr.bf16.mxu0 0
    %903 = vmatpush2.bf16.msra.mxu0 0
    %904 = vmatprep.subr.bf16.mxu0 0
    %905 = vmatpush2.bf16.msra.mxu0 0
    %906 = vmatprep.mubr.bf16.mxu0 0
    %907 = vmatmul.mubr.bf16.gmra.mxu0 %v872
    %v908 = vpop.f32.mrf.mxu0
    %v909 = vadd.f32 0.0, %v908
    %v910 = vpop.f32.mrf.mxu0
    %v911 = vpop.f32.mrf.mxu0
    %v912 = vadd.f32 0.0, %v911
    %v913 = vpop.f32.mrf.mxu0
    %914 = vdwg.mxu0
    %915 = vrot.lane.b32.xlu0 %v259, 112
    %v916 = vpop.permute.xlu0 %915
    %v919 = vsel %vm683, %v861, 0
    %921 = vmatprep.subr.bf16.mxu0 0
    %922 = vmatpush1.bf16.msra.mxu0 0
    %923 = vmatprep.subr.bf16.mxu0 0
    %924 = vmatpush1.bf16.msra.mxu0 0
    %925 = vmatprep.subr.bf16.mxu0 0
    %926 = vmatpush1.bf16.msra.mxu0 0
    %927 = vmatprep.subr.bf16.mxu0 0
    %928 = vmatpush1.bf16.msra.mxu0 0
    %929 = vmatprep.subr.bf16.mxu0 0
    %930 = vmatpush1.bf16.msra.mxu0 0
    %931 = vmatprep.subr.bf16.mxu0 0
    %932 = vmatpush1.bf16.msra.mxu0 0
    %933 = vmatprep.subr.bf16.mxu0 0
    %934 = vmatpush1.bf16.msra.mxu0 0
    %935 = vmatprep.subr.bf16.mxu0 0
    %936 = vmatpush1.bf16.msra.mxu0 %v916
    %937 = vmatprep.subr.bf16.mxu0 0
    %938 = vmatpush2.bf16.msra.mxu0 0
    %939 = vmatprep.subr.bf16.mxu0 0
    %940 = vmatpush2.bf16.msra.mxu0 0
    %941 = vmatprep.subr.bf16.mxu0 0
    %942 = vmatpush2.bf16.msra.mxu0 0
    %943 = vmatprep.subr.bf16.mxu0 0
    %944 = vmatpush2.bf16.msra.mxu0 0
    %945 = vmatprep.subr.bf16.mxu0 0
    %946 = vmatpush2.bf16.msra.mxu0 0
    %947 = vmatprep.subr.bf16.mxu0 0
    %948 = vmatpush2.bf16.msra.mxu0 0
    %949 = vmatprep.subr.bf16.mxu0 0
    %950 = vmatpush2.bf16.msra.mxu0 0
    %951 = vmatprep.subr.bf16.mxu0 0
    %952 = vmatpush2.bf16.msra.mxu0 0
    %953 = vmatprep.mubr.bf16.mxu0 0
    %954 = vmatmul.mubr.bf16.gmra.mxu0 %v919
    %v955 = vpop.f32.mrf.mxu0
    %v956 = vadd.f32 0.0, %v955
    %v957 = vpop.f32.mrf.mxu0
    %v958 = vpop.f32.mrf.mxu0
    %v959 = vadd.f32 0.0, %v958
    %v960 = vpop.f32.mrf.mxu0
    %961 = vdwg.mxu0
    %962 = vrot.lane.b32.xlu0 %v260, 112
    %v963 = vpop.permute.xlu0 %962
    %v966 = vsel %vm683, %v862, 0
    %968 = vmatprep.subr.bf16.mxu0 0
    %969 = vmatpush1.bf16.msra.mxu0 0
    %970 = vmatprep.subr.bf16.mxu0 0
    %971 = vmatpush1.bf16.msra.mxu0 0
    %972 = vmatprep.subr.bf16.mxu0 0
    %973 = vmatpush1.bf16.msra.mxu0 0
    %974 = vmatprep.subr.bf16.mxu0 0
    %975 = vmatpush1.bf16.msra.mxu0 0
    %976 = vmatprep.subr.bf16.mxu0 0
    %977 = vmatpush1.bf16.msra.mxu0 0
    %978 = vmatprep.subr.bf16.mxu0 0
    %979 = vmatpush1.bf16.msra.mxu0 0
    %980 = vmatprep.subr.bf16.mxu0 0
    %981 = vmatpush1.bf16.msra.mxu0 0
    %982 = vmatprep.subr.bf16.mxu0 0
    %983 = vmatpush1.bf16.msra.mxu0 %v963
    %984 = vmatprep.subr.bf16.mxu0 0
    %985 = vmatpush2.bf16.msra.mxu0 0
    %986 = vmatprep.subr.bf16.mxu0 0
    %987 = vmatpush2.bf16.msra.mxu0 0
    %988 = vmatprep.subr.bf16.mxu0 0
    %989 = vmatpush2.bf16.msra.mxu0 0
    %990 = vmatprep.subr.bf16.mxu0 0
    %991 = vmatpush2.bf16.msra.mxu0 0
    %992 = vmatprep.subr.bf16.mxu0 0
    %993 = vmatpush2.bf16.msra.mxu0 0
    %994 = vmatprep.subr.bf16.mxu0 0
    %995 = vmatpush2.bf16.msra.mxu0 0
    %996 = vmatprep.subr.bf16.mxu0 0
    %997 = vmatpush2.bf16.msra.mxu0 0
    %998 = vmatprep.subr.bf16.mxu0 0
    %999 = vmatpush2.bf16.msra.mxu0 0
    %1000 = vmatprep.mubr.bf16.mxu0 0
    %1001 = vmatmul.mubr.bf16.gmra.mxu0 %v966
    %v1002 = vpop.f32.mrf.mxu0
    %v1003 = vadd.f32 0.0, %v1002
    %v1004 = vpop.f32.mrf.mxu0
    %v1005 = vpop.f32.mrf.mxu0
    %v1006 = vadd.f32 0.0, %v1005
    %v1007 = vpop.f32.mrf.mxu0
    %1008 = vdwg.mxu0
    %1009 = vrot.lane.b32.xlu0 %v261, 112
    %v1010 = vpop.permute.xlu0 %1009
    %v1013 = vsel %vm683, %v863, 0
    %1015 = vmatprep.subr.bf16.mxu0 0
    %1016 = vmatpush1.bf16.msra.mxu0 0
    %1017 = vmatprep.subr.bf16.mxu0 0
    %1018 = vmatpush1.bf16.msra.mxu0 0
    %1019 = vmatprep.subr.bf16.mxu0 0
    %1020 = vmatpush1.bf16.msra.mxu0 0
    %1021 = vmatprep.subr.bf16.mxu0 0
    %1022 = vmatpush1.bf16.msra.mxu0 0
    %1023 = vmatprep.subr.bf16.mxu0 0
    %1024 = vmatpush1.bf16.msra.mxu0 0
    %1025 = vmatprep.subr.bf16.mxu0 0
    %1026 = vmatpush1.bf16.msra.mxu0 0
    %1027 = vmatprep.subr.bf16.mxu0 0
    %1028 = vmatpush1.bf16.msra.mxu0 0
    %1029 = vmatprep.subr.bf16.mxu0 0
    %1030 = vmatpush1.bf16.msra.mxu0 %v1010
    %1031 = vmatprep.subr.bf16.mxu0 0
    %1032 = vmatpush2.bf16.msra.mxu0 0
    %1033 = vmatprep.subr.bf16.mxu0 0
    %1034 = vmatpush2.bf16.msra.mxu0 0
    %1035 = vmatprep.subr.bf16.mxu0 0
    %1036 = vmatpush2.bf16.msra.mxu0 0
    %1037 = vmatprep.subr.bf16.mxu0 0
    %1038 = vmatpush2.bf16.msra.mxu0 0
    %1039 = vmatprep.subr.bf16.mxu0 0
    %1040 = vmatpush2.bf16.msra.mxu0 0
    %1041 = vmatprep.subr.bf16.mxu0 0
    %1042 = vmatpush2.bf16.msra.mxu0 0
    %1043 = vmatprep.subr.bf16.mxu0 0
    %1044 = vmatpush2.bf16.msra.mxu0 0
    %1045 = vmatprep.subr.bf16.mxu0 0
    %1046 = vmatpush2.bf16.msra.mxu0 0
    %1047 = vmatprep.mubr.bf16.mxu0 0
    %1048 = vmatmul.mubr.bf16.gmra.mxu0 %v1013
    %v1049 = vpop.f32.mrf.mxu0
    %v1050 = vadd.f32 0.0, %v1049
    %v1051 = vpop.f32.mrf.mxu0
    %v1052 = vpop.f32.mrf.mxu0
    %v1053 = vadd.f32 0.0, %v1052
    %v1054 = vpop.f32.mrf.mxu0
    %1055 = vdwg.mxu0
    %1056 = vrot.lane.b32.xlu0 %v262, 112
    %v1057 = vpop.permute.xlu0 %1056
    %v1060 = vsel %vm683, %v864, 0
    %1062 = vmatprep.subr.bf16.mxu0 0
    %1063 = vmatpush1.bf16.msra.mxu0 0
    %1064 = vmatprep.subr.bf16.mxu0 0
    %1065 = vmatpush1.bf16.msra.mxu0 0
    %1066 = vmatprep.subr.bf16.mxu0 0
    %1067 = vmatpush1.bf16.msra.mxu0 0
    %1068 = vmatprep.subr.bf16.mxu0 0
    %1069 = vmatpush1.bf16.msra.mxu0 0
    %1070 = vmatprep.subr.bf16.mxu0 0
    %1071 = vmatpush1.bf16.msra.mxu0 0
    %1072 = vmatprep.subr.bf16.mxu0 0
    %1073 = vmatpush1.bf16.msra.mxu0 0
    %1074 = vmatprep.subr.bf16.mxu0 0
    %1075 = vmatpush1.bf16.msra.mxu0 0
    %1076 = vmatprep.subr.bf16.mxu0 0
    %1077 = vmatpush1.bf16.msra.mxu0 %v1057
    %1078 = vmatprep.subr.bf16.mxu0 0
    %1079 = vmatpush2.bf16.msra.mxu0 0
    %1080 = vmatprep.subr.bf16.mxu0 0
    %1081 = vmatpush2.bf16.msra.mxu0 0
    %1082 = vmatprep.subr.bf16.mxu0 0
    %1083 = vmatpush2.bf16.msra.mxu0 0
    %1084 = vmatprep.subr.bf16.mxu0 0
    %1085 = vmatpush2.bf16.msra.mxu0 0
    %1086 = vmatprep.subr.bf16.mxu0 0
    %1087 = vmatpush2.bf16.msra.mxu0 0
    %1088 = vmatprep.subr.bf16.mxu0 0
    %1089 = vmatpush2.bf16.msra.mxu0 0
    %1090 = vmatprep.subr.bf16.mxu0 0
    %1091 = vmatpush2.bf16.msra.mxu0 0
    %1092 = vmatprep.subr.bf16.mxu0 0
    %1093 = vmatpush2.bf16.msra.mxu0 0
    %1094 = vmatprep.mubr.bf16.mxu0 0
    %1095 = vmatmul.mubr.bf16.gmra.mxu0 %v1060
    %v1096 = vpop.f32.mrf.mxu0
    %v1097 = vadd.f32 0.0, %v1096
    %v1098 = vpop.f32.mrf.mxu0
    %v1099 = vpop.f32.mrf.mxu0
    %v1100 = vadd.f32 0.0, %v1099
    %v1101 = vpop.f32.mrf.mxu0
    %1102 = vdwg.mxu0
    %1103 = vrot.lane.b32.xlu0 %v263, 112
    %v1104 = vpop.permute.xlu0 %1103
    %v1107 = vsel %vm683, %v865, 0
    %1109 = vmatprep.subr.bf16.mxu0 0
    %1110 = vmatpush1.bf16.msra.mxu0 0
    %1111 = vmatprep.subr.bf16.mxu0 0
    %1112 = vmatpush1.bf16.msra.mxu0 0
    %1113 = vmatprep.subr.bf16.mxu0 0
    %1114 = vmatpush1.bf16.msra.mxu0 0
    %1115 = vmatprep.subr.bf16.mxu0 0
    %1116 = vmatpush1.bf16.msra.mxu0 0
    %1117 = vmatprep.subr.bf16.mxu0 0
    %1118 = vmatpush1.bf16.msra.mxu0 0
    %1119 = vmatprep.subr.bf16.mxu0 0
    %1120 = vmatpush1.bf16.msra.mxu0 0
    %1121 = vmatprep.subr.bf16.mxu0 0
    %1122 = vmatpush1.bf16.msra.mxu0 0
    %1123 = vmatprep.subr.bf16.mxu0 0
    %1124 = vmatpush1.bf16.msra.mxu0 %v1104
    %1125 = vmatprep.subr.bf16.mxu0 0
    %1126 = vmatpush2.bf16.msra.mxu0 0
    %1127 = vmatprep.subr.bf16.mxu0 0
    %1128 = vmatpush2.bf16.msra.mxu0 0
    %1129 = vmatprep.subr.bf16.mxu0 0
    %1130 = vmatpush2.bf16.msra.mxu0 0
    %1131 = vmatprep.subr.bf16.mxu0 0
    %1132 = vmatpush2.bf16.msra.mxu0 0
    %1133 = vmatprep.subr.bf16.mxu0 0
    %1134 = vmatpush2.bf16.msra.mxu0 0
    %1135 = vmatprep.subr.bf16.mxu0 0
    %1136 = vmatpush2.bf16.msra.mxu0 0
    %1137 = vmatprep.subr.bf16.mxu0 0
    %1138 = vmatpush2.bf16.msra.mxu0 0
    %1139 = vmatprep.subr.bf16.mxu0 0
    %1140 = vmatpush2.bf16.msra.mxu0 0
    %1141 = vmatprep.mubr.bf16.mxu0 0
    %1142 = vmatmul.mubr.bf16.gmra.mxu0 %v1107
    %v1143 = vpop.f32.mrf.mxu0
    %v1144 = vadd.f32 0.0, %v1143
    %v1145 = vpop.f32.mrf.mxu0
    %v1146 = vpop.f32.mrf.mxu0
    %v1147 = vadd.f32 0.0, %v1146
    %v1148 = vpop.f32.mrf.mxu0
    %1149 = vdwg.mxu0
    %1150 = vrot.lane.b32.xlu0 %v264, 112
    %v1151 = vpop.permute.xlu0 %1150
    %v1154 = vsel %vm683, %v866, 0
    %1156 = vmatprep.subr.bf16.mxu0 0
    %1157 = vmatpush1.bf16.msra.mxu0 0
    %1158 = vmatprep.subr.bf16.mxu0 0
    %1159 = vmatpush1.bf16.msra.mxu0 0
    %1160 = vmatprep.subr.bf16.mxu0 0
    %1161 = vmatpush1.bf16.msra.mxu0 0
    %1162 = vmatprep.subr.bf16.mxu0 0
    %1163 = vmatpush1.bf16.msra.mxu0 0
    %1164 = vmatprep.subr.bf16.mxu0 0
    %1165 = vmatpush1.bf16.msra.mxu0 0
    %1166 = vmatprep.subr.bf16.mxu0 0
    %1167 = vmatpush1.bf16.msra.mxu0 0
    %1168 = vmatprep.subr.bf16.mxu0 0
    %1169 = vmatpush1.bf16.msra.mxu0 0
    %1170 = vmatprep.subr.bf16.mxu0 0
    %1171 = vmatpush1.bf16.msra.mxu0 %v1151
    %1172 = vmatprep.subr.bf16.mxu0 0
    %1173 = vmatpush2.bf16.msra.mxu0 0
    %1174 = vmatprep.subr.bf16.mxu0 0
    %1175 = vmatpush2.bf16.msra.mxu0 0
    %1176 = vmatprep.subr.bf16.mxu0 0
    %1177 = vmatpush2.bf16.msra.mxu0 0
    %1178 = vmatprep.subr.bf16.mxu0 0
    %1179 = vmatpush2.bf16.msra.mxu0 0
    %1180 = vmatprep.subr.bf16.mxu0 0
    %1181 = vmatpush2.bf16.msra.mxu0 0
    %1182 = vmatprep.subr.bf16.mxu0 0
    %1183 = vmatpush2.bf16.msra.mxu0 0
    %1184 = vmatprep.subr.bf16.mxu0 0
    %1185 = vmatpush2.bf16.msra.mxu0 0
    %1186 = vmatprep.subr.bf16.mxu0 0
    %1187 = vmatpush2.bf16.msra.mxu0 0
    %1188 = vmatprep.mubr.bf16.mxu0 0
    %1189 = vmatmul.mubr.bf16.gmra.mxu0 %v1154
    %v1190 = vpop.f32.mrf.mxu0
    %v1191 = vadd.f32 0.0, %v1190
    %v1192 = vpop.f32.mrf.mxu0
    %v1193 = vpop.f32.mrf.mxu0
    %v1194 = vadd.f32 0.0, %v1193
    %v1195 = vpop.f32.mrf.mxu0
    %1196 = vdwg.mxu0
    %1197 = vrot.lane.b32.xlu0 %v265, 112
    %v1198 = vpop.permute.xlu0 %1197
    %v1201 = vsel %vm683, %v867, 0
    %1203 = vmatprep.subr.bf16.mxu0 0
    %1204 = vmatpush1.bf16.msra.mxu0 0
    %1205 = vmatprep.subr.bf16.mxu0 0
    %1206 = vmatpush1.bf16.msra.mxu0 0
    %1207 = vmatprep.subr.bf16.mxu0 0
    %1208 = vmatpush1.bf16.msra.mxu0 0
    %1209 = vmatprep.subr.bf16.mxu0 0
    %1210 = vmatpush1.bf16.msra.mxu0 0
    %1211 = vmatprep.subr.bf16.mxu0 0
    %1212 = vmatpush1.bf16.msra.mxu0 0
    %1213 = vmatprep.subr.bf16.mxu0 0
    %1214 = vmatpush1.bf16.msra.mxu0 0
    %1215 = vmatprep.subr.bf16.mxu0 0
    %1216 = vmatpush1.bf16.msra.mxu0 0
    %1217 = vmatprep.subr.bf16.mxu0 0
    %1218 = vmatpush1.bf16.msra.mxu0 %v1198
    %1219 = vmatprep.subr.bf16.mxu0 0
    %1220 = vmatpush2.bf16.msra.mxu0 0
    %1221 = vmatprep.subr.bf16.mxu0 0
    %1222 = vmatpush2.bf16.msra.mxu0 0
    %1223 = vmatprep.subr.bf16.mxu0 0
    %1224 = vmatpush2.bf16.msra.mxu0 0
    %1225 = vmatprep.subr.bf16.mxu0 0
    %1226 = vmatpush2.bf16.msra.mxu0 0
    %1227 = vmatprep.subr.bf16.mxu0 0
    %1228 = vmatpush2.bf16.msra.mxu0 0
    %1229 = vmatprep.subr.bf16.mxu0 0
    %1230 = vmatpush2.bf16.msra.mxu0 0
    %1231 = vmatprep.subr.bf16.mxu0 0
    %1232 = vmatpush2.bf16.msra.mxu0 0
    %1233 = vmatprep.subr.bf16.mxu0 0
    %1234 = vmatpush2.bf16.msra.mxu0 0
    %1235 = vmatprep.mubr.bf16.mxu0 0
    %1236 = vmatmul.mubr.bf16.gmra.mxu0 %v1201
    %v1237 = vpop.f32.mrf.mxu0
    %v1238 = vadd.f32 0.0, %v1237
    %v1239 = vpop.f32.mrf.mxu0
    %v1240 = vpop.f32.mrf.mxu0
    %v1241 = vadd.f32 0.0, %v1240
    %v1242 = vpop.f32.mrf.mxu0
    %1243 = vdwg.mxu0
    %v1244 = vpack.c.bf16 %v912, %v909
    %v1245 = vpack.c.bf16 %v959, %v956
    %v1246 = vpack.c.bf16 %v1006, %v1003
    %v1247 = vpack.c.bf16 %v1053, %v1050
    %v1248 = vpack.c.bf16 %v1100, %v1097
    %v1249 = vpack.c.bf16 %v1147, %v1144
    %v1250 = vpack.c.bf16 %v1194, %v1191
    %v1251 = vpack.c.bf16 %v1241, %v1238
    %v1252 = vld [vmem:[%s2] sm:$0xf]
    %v1253 = vld [vmem:[%s2 + $0x4] sm:$0xf]
    %v1254 = vld [vmem:[%s2 + $0x8] sm:$0xf]
    %v1255 = vld [vmem:[%s2 + $0xc] sm:$0xf]
    %v1256 = vld [vmem:[%s2 + $0x10] sm:$0xf]
    %v1257 = vld [vmem:[%s2 + $0x14] sm:$0xf]
    %v1258 = vld [vmem:[%s2 + $0x18] sm:$0xf]
    %v1259 = vld [vmem:[%s2 + $0x1c] sm:$0xf]
    %v1261 = vsel %vm269, %v1244, 0
    %vm1263 = vcmask 1043456
    %v1265 = vsel %vm1263, %v1252, 0
    %1267 = vmatprep.subr.bf16.mxu0 0
    %1268 = vmatpush1.bf16.msra.mxu0 0
    %1269 = vmatprep.subr.bf16.mxu0 0
    %1270 = vmatpush1.bf16.msra.mxu0 0
    %1271 = vmatprep.subr.bf16.mxu0 0
    %1272 = vmatpush1.bf16.msra.mxu0 0
    %1273 = vmatprep.subr.bf16.mxu0 0
    %1274 = vmatpush1.bf16.msra.mxu0 0
    %1275 = vmatprep.subr.bf16.mxu0 0
    %1276 = vmatpush1.bf16.msra.mxu0 0
    %1277 = vmatprep.subr.bf16.mxu0 0
    %1278 = vmatpush1.bf16.msra.mxu0 0
    %1279 = vmatprep.subr.bf16.mxu0 0
    %1280 = vmatpush1.bf16.msra.mxu0 0
    %1281 = vmatprep.subr.bf16.mxu0 0
    %1282 = vmatpush1.bf16.msra.mxu0 %v1265
    %1283 = vmatprep.subr.bf16.mxu0 0
    %1284 = vmatpush2.bf16.msra.mxu0 0
    %1285 = vmatprep.subr.bf16.mxu0 0
    %1286 = vmatpush2.bf16.msra.mxu0 0
    %1287 = vmatprep.subr.bf16.mxu0 0
    %1288 = vmatpush2.bf16.msra.mxu0 0
    %1289 = vmatprep.subr.bf16.mxu0 0
    %1290 = vmatpush2.bf16.msra.mxu0 0
    %1291 = vmatprep.subr.bf16.mxu0 0
    %1292 = vmatpush2.bf16.msra.mxu0 0
    %1293 = vmatprep.subr.bf16.mxu0 0
    %1294 = vmatpush2.bf16.msra.mxu0 0
    %1295 = vmatprep.subr.bf16.mxu0 0
    %1296 = vmatpush2.bf16.msra.mxu0 0
    %1297 = vmatprep.subr.bf16.mxu0 0
    %1298 = vmatpush2.bf16.msra.mxu0 0
    %1299 = vmatprep.mubr.bf16.mxu0 0
    %1300 = vmatmul.mubr.bf16.gmra.mxu0 %v1261
    %v1301 = vpop.f32.mrf.mxu0
    %v1302 = vadd.f32 0.0, %v1301
    %v1303 = vpop.f32.mrf.mxu0
    %v1304 = vpop.f32.mrf.mxu0
    %v1305 = vadd.f32 0.0, %v1304
    %v1306 = vpop.f32.mrf.mxu0
    %1307 = vdwg.mxu0
    %v1309 = vsel %vm269, %v1245, 0
    %v1312 = vsel %vm1263, %v1253, 0
    %1314 = vmatprep.subr.bf16.mxu0 0
    %1315 = vmatpush1.bf16.msra.mxu0 0
    %1316 = vmatprep.subr.bf16.mxu0 0
    %1317 = vmatpush1.bf16.msra.mxu0 0
    %1318 = vmatprep.subr.bf16.mxu0 0
    %1319 = vmatpush1.bf16.msra.mxu0 0
    %1320 = vmatprep.subr.bf16.mxu0 0
    %1321 = vmatpush1.bf16.msra.mxu0 0
    %1322 = vmatprep.subr.bf16.mxu0 0
    %1323 = vmatpush1.bf16.msra.mxu0 0
    %1324 = vmatprep.subr.bf16.mxu0 0
    %1325 = vmatpush1.bf16.msra.mxu0 0
    %1326 = vmatprep.subr.bf16.mxu0 0
    %1327 = vmatpush1.bf16.msra.mxu0 0
    %1328 = vmatprep.subr.bf16.mxu0 0
    %1329 = vmatpush1.bf16.msra.mxu0 %v1312
    %1330 = vmatprep.subr.bf16.mxu0 0
    %1331 = vmatpush2.bf16.msra.mxu0 0
    %1332 = vmatprep.subr.bf16.mxu0 0
    %1333 = vmatpush2.bf16.msra.mxu0 0
    %1334 = vmatprep.subr.bf16.mxu0 0
    %1335 = vmatpush2.bf16.msra.mxu0 0
    %1336 = vmatprep.subr.bf16.mxu0 0
    %1337 = vmatpush2.bf16.msra.mxu0 0
    %1338 = vmatprep.subr.bf16.mxu0 0
    %1339 = vmatpush2.bf16.msra.mxu0 0
    %1340 = vmatprep.subr.bf16.mxu0 0
    %1341 = vmatpush2.bf16.msra.mxu0 0
    %1342 = vmatprep.subr.bf16.mxu0 0
    %1343 = vmatpush2.bf16.msra.mxu0 0
    %1344 = vmatprep.subr.bf16.mxu0 0
    %1345 = vmatpush2.bf16.msra.mxu0 0
    %1346 = vmatprep.mubr.bf16.mxu0 0
    %1347 = vmatmul.mubr.bf16.gmra.mxu0 %v1309
    %v1348 = vpop.f32.mrf.mxu0
    %v1349 = vadd.f32 0.0, %v1348
    %v1350 = vpop.f32.mrf.mxu0
    %v1351 = vpop.f32.mrf.mxu0
    %v1352 = vadd.f32 0.0, %v1351
    %v1353 = vpop.f32.mrf.mxu0
    %1354 = vdwg.mxu0
    %v1356 = vsel %vm269, %v1246, 0
    %v1359 = vsel %vm1263, %v1254, 0
    %1361 = vmatprep.subr.bf16.mxu0 0
    %1362 = vmatpush1.bf16.msra.mxu0 0
    %1363 = vmatprep.subr.bf16.mxu0 0
    %1364 = vmatpush1.bf16.msra.mxu0 0
    %1365 = vmatprep.subr.bf16.mxu0 0
    %1366 = vmatpush1.bf16.msra.mxu0 0
    %1367 = vmatprep.subr.bf16.mxu0 0
    %1368 = vmatpush1.bf16.msra.mxu0 0
    %1369 = vmatprep.subr.bf16.mxu0 0
    %1370 = vmatpush1.bf16.msra.mxu0 0
    %1371 = vmatprep.subr.bf16.mxu0 0
    %1372 = vmatpush1.bf16.msra.mxu0 0
    %1373 = vmatprep.subr.bf16.mxu0 0
    %1374 = vmatpush1.bf16.msra.mxu0 0
    %1375 = vmatprep.subr.bf16.mxu0 0
    %1376 = vmatpush1.bf16.msra.mxu0 %v1359
    %1377 = vmatprep.subr.bf16.mxu0 0
    %1378 = vmatpush2.bf16.msra.mxu0 0
    %1379 = vmatprep.subr.bf16.mxu0 0
    %1380 = vmatpush2.bf16.msra.mxu0 0
    %1381 = vmatprep.subr.bf16.mxu0 0
    %1382 = vmatpush2.bf16.msra.mxu0 0
    %1383 = vmatprep.subr.bf16.mxu0 0
    %1384 = vmatpush2.bf16.msra.mxu0 0
    %1385 = vmatprep.subr.bf16.mxu0 0
    %1386 = vmatpush2.bf16.msra.mxu0 0
    %1387 = vmatprep.subr.bf16.mxu0 0
    %1388 = vmatpush2.bf16.msra.mxu0 0
    %1389 = vmatprep.subr.bf16.mxu0 0
    %1390 = vmatpush2.bf16.msra.mxu0 0
    %1391 = vmatprep.subr.bf16.mxu0 0
    %1392 = vmatpush2.bf16.msra.mxu0 0
    %1393 = vmatprep.mubr.bf16.mxu0 0
    %1394 = vmatmul.mubr.bf16.gmra.mxu0 %v1356
    %v1395 = vpop.f32.mrf.mxu0
    %v1396 = vadd.f32 0.0, %v1395
    %v1397 = vpop.f32.mrf.mxu0
    %v1398 = vpop.f32.mrf.mxu0
    %v1399 = vadd.f32 0.0, %v1398
    %v1400 = vpop.f32.mrf.mxu0
    %1401 = vdwg.mxu0
    %v1403 = vsel %vm269, %v1247, 0
    %v1406 = vsel %vm1263, %v1255, 0
    %1408 = vmatprep.subr.bf16.mxu0 0
    %1409 = vmatpush1.bf16.msra.mxu0 0
    %1410 = vmatprep.subr.bf16.mxu0 0
    %1411 = vmatpush1.bf16.msra.mxu0 0
    %1412 = vmatprep.subr.bf16.mxu0 0
    %1413 = vmatpush1.bf16.msra.mxu0 0
    %1414 = vmatprep.subr.bf16.mxu0 0
    %1415 = vmatpush1.bf16.msra.mxu0 0
    %1416 = vmatprep.subr.bf16.mxu0 0
    %1417 = vmatpush1.bf16.msra.mxu0 0
    %1418 = vmatprep.subr.bf16.mxu0 0
    %1419 = vmatpush1.bf16.msra.mxu0 0
    %1420 = vmatprep.subr.bf16.mxu0 0
    %1421 = vmatpush1.bf16.msra.mxu0 0
    %1422 = vmatprep.subr.bf16.mxu0 0
    %1423 = vmatpush1.bf16.msra.mxu0 %v1406
    %1424 = vmatprep.subr.bf16.mxu0 0
    %1425 = vmatpush2.bf16.msra.mxu0 0
    %1426 = vmatprep.subr.bf16.mxu0 0
    %1427 = vmatpush2.bf16.msra.mxu0 0
    %1428 = vmatprep.subr.bf16.mxu0 0
    %1429 = vmatpush2.bf16.msra.mxu0 0
    %1430 = vmatprep.subr.bf16.mxu0 0
    %1431 = vmatpush2.bf16.msra.mxu0 0
    %1432 = vmatprep.subr.bf16.mxu0 0
    %1433 = vmatpush2.bf16.msra.mxu0 0
    %1434 = vmatprep.subr.bf16.mxu0 0
    %1435 = vmatpush2.bf16.msra.mxu0 0
    %1436 = vmatprep.subr.bf16.mxu0 0
    %1437 = vmatpush2.bf16.msra.mxu0 0
    %1438 = vmatprep.subr.bf16.mxu0 0
    %1439 = vmatpush2.bf16.msra.mxu0 0
    %1440 = vmatprep.mubr.bf16.mxu0 0
    %1441 = vmatmul.mubr.bf16.gmra.mxu0 %v1403
    %v1442 = vpop.f32.mrf.mxu0
    %v1443 = vadd.f32 0.0, %v1442
    %v1444 = vpop.f32.mrf.mxu0
    %v1445 = vpop.f32.mrf.mxu0
    %v1446 = vadd.f32 0.0, %v1445
    %v1447 = vpop.f32.mrf.mxu0
    %1448 = vdwg.mxu0
    %v1450 = vsel %vm269, %v1248, 0
    %v1453 = vsel %vm1263, %v1256, 0
    %1455 = vmatprep.subr.bf16.mxu0 0
    %1456 = vmatpush1.bf16.msra.mxu0 0
    %1457 = vmatprep.subr.bf16.mxu0 0
    %1458 = vmatpush1.bf16.msra.mxu0 0
    %1459 = vmatprep.subr.bf16.mxu0 0
    %1460 = vmatpush1.bf16.msra.mxu0 0
    %1461 = vmatprep.subr.bf16.mxu0 0
    %1462 = vmatpush1.bf16.msra.mxu0 0
    %1463 = vmatprep.subr.bf16.mxu0 0
    %1464 = vmatpush1.bf16.msra.mxu0 0
    %1465 = vmatprep.subr.bf16.mxu0 0
    %1466 = vmatpush1.bf16.msra.mxu0 0
    %1467 = vmatprep.subr.bf16.mxu0 0
    %1468 = vmatpush1.bf16.msra.mxu0 0
    %1469 = vmatprep.subr.bf16.mxu0 0
    %1470 = vmatpush1.bf16.msra.mxu0 %v1453
    %1471 = vmatprep.subr.bf16.mxu0 0
    %1472 = vmatpush2.bf16.msra.mxu0 0
    %1473 = vmatprep.subr.bf16.mxu0 0
    %1474 = vmatpush2.bf16.msra.mxu0 0
    %1475 = vmatprep.subr.bf16.mxu0 0
    %1476 = vmatpush2.bf16.msra.mxu0 0
    %1477 = vmatprep.subr.bf16.mxu0 0
    %1478 = vmatpush2.bf16.msra.mxu0 0
    %1479 = vmatprep.subr.bf16.mxu0 0
    %1480 = vmatpush2.bf16.msra.mxu0 0
    %1481 = vmatprep.subr.bf16.mxu0 0
    %1482 = vmatpush2.bf16.msra.mxu0 0
    %1483 = vmatprep.subr.bf16.mxu0 0
    %1484 = vmatpush2.bf16.msra.mxu0 0
    %1485 = vmatprep.subr.bf16.mxu0 0
    %1486 = vmatpush2.bf16.msra.mxu0 0
    %1487 = vmatprep.mubr.bf16.mxu0 0
    %1488 = vmatmul.mubr.bf16.gmra.mxu0 %v1450
    %v1489 = vpop.f32.mrf.mxu0
    %v1490 = vadd.f32 0.0, %v1489
    %v1491 = vpop.f32.mrf.mxu0
    %v1492 = vpop.f32.mrf.mxu0
    %v1493 = vadd.f32 0.0, %v1492
    %v1494 = vpop.f32.mrf.mxu0
    %1495 = vdwg.mxu0
    %v1497 = vsel %vm269, %v1249, 0
    %v1500 = vsel %vm1263, %v1257, 0
    %1502 = vmatprep.subr.bf16.mxu0 0
    %1503 = vmatpush1.bf16.msra.mxu0 0
    %1504 = vmatprep.subr.bf16.mxu0 0
    %1505 = vmatpush1.bf16.msra.mxu0 0
    %1506 = vmatprep.subr.bf16.mxu0 0
    %1507 = vmatpush1.bf16.msra.mxu0 0
    %1508 = vmatprep.subr.bf16.mxu0 0
    %1509 = vmatpush1.bf16.msra.mxu0 0
    %1510 = vmatprep.subr.bf16.mxu0 0
    %1511 = vmatpush1.bf16.msra.mxu0 0
    %1512 = vmatprep.subr.bf16.mxu0 0
    %1513 = vmatpush1.bf16.msra.mxu0 0
    %1514 = vmatprep.subr.bf16.mxu0 0
    %1515 = vmatpush1.bf16.msra.mxu0 0
    %1516 = vmatprep.subr.bf16.mxu0 0
    %1517 = vmatpush1.bf16.msra.mxu0 %v1500
    %1518 = vmatprep.subr.bf16.mxu0 0
    %1519 = vmatpush2.bf16.msra.mxu0 0
    %1520 = vmatprep.subr.bf16.mxu0 0
    %1521 = vmatpush2.bf16.msra.mxu0 0
    %1522 = vmatprep.subr.bf16.mxu0 0
    %1523 = vmatpush2.bf16.msra.mxu0 0
    %1524 = vmatprep.subr.bf16.mxu0 0
    %1525 = vmatpush2.bf16.msra.mxu0 0
    %1526 = vmatprep.subr.bf16.mxu0 0
    %1527 = vmatpush2.bf16.msra.mxu0 0
    %1528 = vmatprep.subr.bf16.mxu0 0
    %1529 = vmatpush2.bf16.msra.mxu0 0
    %1530 = vmatprep.subr.bf16.mxu0 0
    %1531 = vmatpush2.bf16.msra.mxu0 0
    %1532 = vmatprep.subr.bf16.mxu0 0
    %1533 = vmatpush2.bf16.msra.mxu0 0
    %1534 = vmatprep.mubr.bf16.mxu0 0
    %1535 = vmatmul.mubr.bf16.gmra.mxu0 %v1497
    %v1536 = vpop.f32.mrf.mxu0
    %v1537 = vadd.f32 0.0, %v1536
    %v1538 = vpop.f32.mrf.mxu0
    %v1539 = vpop.f32.mrf.mxu0
    %v1540 = vadd.f32 0.0, %v1539
    %v1541 = vpop.f32.mrf.mxu0
    %1542 = vdwg.mxu0
    %v1544 = vsel %vm269, %v1250, 0
    %v1547 = vsel %vm1263, %v1258, 0
    %1549 = vmatprep.subr.bf16.mxu0 0
    %1550 = vmatpush1.bf16.msra.mxu0 0
    %1551 = vmatprep.subr.bf16.mxu0 0
    %1552 = vmatpush1.bf16.msra.mxu0 0
    %1553 = vmatprep.subr.bf16.mxu0 0
    %1554 = vmatpush1.bf16.msra.mxu0 0
    %1555 = vmatprep.subr.bf16.mxu0 0
    %1556 = vmatpush1.bf16.msra.mxu0 0
    %1557 = vmatprep.subr.bf16.mxu0 0
    %1558 = vmatpush1.bf16.msra.mxu0 0
    %1559 = vmatprep.subr.bf16.mxu0 0
    %1560 = vmatpush1.bf16.msra.mxu0 0
    %1561 = vmatprep.subr.bf16.mxu0 0
    %1562 = vmatpush1.bf16.msra.mxu0 0
    %1563 = vmatprep.subr.bf16.mxu0 0
    %1564 = vmatpush1.bf16.msra.mxu0 %v1547
    %1565 = vmatprep.subr.bf16.mxu0 0
    %1566 = vmatpush2.bf16.msra.mxu0 0
    %1567 = vmatprep.subr.bf16.mxu0 0
    %1568 = vmatpush2.bf16.msra.mxu0 0
    %1569 = vmatprep.subr.bf16.mxu0 0
    %1570 = vmatpush2.bf16.msra.mxu0 0
    %1571 = vmatprep.subr.bf16.mxu0 0
    %1572 = vmatpush2.bf16.msra.mxu0 0
    %1573 = vmatprep.subr.bf16.mxu0 0
    %1574 = vmatpush2.bf16.msra.mxu0 0
    %1575 = vmatprep.subr.bf16.mxu0 0
    %1576 = vmatpush2.bf16.msra.mxu0 0
    %1577 = vmatprep.subr.bf16.mxu0 0
    %1578 = vmatpush2.bf16.msra.mxu0 0
    %1579 = vmatprep.subr.bf16.mxu0 0
    %1580 = vmatpush2.bf16.msra.mxu0 0
    %1581 = vmatprep.mubr.bf16.mxu0 0
    %1582 = vmatmul.mubr.bf16.gmra.mxu0 %v1544
    %v1583 = vpop.f32.mrf.mxu0
    %v1584 = vadd.f32 0.0, %v1583
    %v1585 = vpop.f32.mrf.mxu0
    %v1586 = vpop.f32.mrf.mxu0
    %v1587 = vadd.f32 0.0, %v1586
    %v1588 = vpop.f32.mrf.mxu0
    %1589 = vdwg.mxu0
    %v1591 = vsel %vm269, %v1251, 0
    %v1594 = vsel %vm1263, %v1259, 0
    %1596 = vmatprep.subr.bf16.mxu0 0
    %1597 = vmatpush1.bf16.msra.mxu0 0
    %1598 = vmatprep.subr.bf16.mxu0 0
    %1599 = vmatpush1.bf16.msra.mxu0 0
    %1600 = vmatprep.subr.bf16.mxu0 0
    %1601 = vmatpush1.bf16.msra.mxu0 0
    %1602 = vmatprep.subr.bf16.mxu0 0
    %1603 = vmatpush1.bf16.msra.mxu0 0
    %1604 = vmatprep.subr.bf16.mxu0 0
    %1605 = vmatpush1.bf16.msra.mxu0 0
    %1606 = vmatprep.subr.bf16.mxu0 0
    %1607 = vmatpush1.bf16.msra.mxu0 0
    %1608 = vmatprep.subr.bf16.mxu0 0
    %1609 = vmatpush1.bf16.msra.mxu0 0
    %1610 = vmatprep.subr.bf16.mxu0 0
    %1611 = vmatpush1.bf16.msra.mxu0 %v1594
    %1612 = vmatprep.subr.bf16.mxu0 0
    %1613 = vmatpush2.bf16.msra.mxu0 0
    %1614 = vmatprep.subr.bf16.mxu0 0
    %1615 = vmatpush2.bf16.msra.mxu0 0
    %1616 = vmatprep.subr.bf16.mxu0 0
    %1617 = vmatpush2.bf16.msra.mxu0 0
    %1618 = vmatprep.subr.bf16.mxu0 0
    %1619 = vmatpush2.bf16.msra.mxu0 0
    %1620 = vmatprep.subr.bf16.mxu0 0
    %1621 = vmatpush2.bf16.msra.mxu0 0
    %1622 = vmatprep.subr.bf16.mxu0 0
    %1623 = vmatpush2.bf16.msra.mxu0 0
    %1624 = vmatprep.subr.bf16.mxu0 0
    %1625 = vmatpush2.bf16.msra.mxu0 0
    %1626 = vmatprep.subr.bf16.mxu0 0
    %1627 = vmatpush2.bf16.msra.mxu0 0
    %1628 = vmatprep.mubr.bf16.mxu0 0
    %1629 = vmatmul.mubr.bf16.gmra.mxu0 %v1591
    %v1630 = vpop.f32.mrf.mxu0
    %v1631 = vadd.f32 0.0, %v1630
    %v1632 = vpop.f32.mrf.mxu0
    %v1633 = vpop.f32.mrf.mxu0
    %v1634 = vadd.f32 0.0, %v1633
    %v1635 = vpop.f32.mrf.mxu0
    %1636 = vdwg.mxu0
    %v1637 = vsel %vm75, %v1302, 0.0
    %v1638 = vsel %vm75, %v1396, 0.0
    %v1639 = vadd.f32 %v1637, %v1638
    %v1640 = vsel %vm75, %v1490, 0.0
    %v1641 = vadd.f32 %v1639, %v1640
    %v1642 = vsel %vm75, %v1584, 0.0
    %v1643 = vadd.f32 %v1641, %v1642
    %v1644 = vsel %vm75, %v1305, 0.0
    %v1645 = vsel %vm75, %v1399, 0.0
    %v1646 = vadd.f32 %v1644, %v1645
    %v1647 = vsel %vm75, %v1493, 0.0
    %v1648 = vadd.f32 %v1646, %v1647
    %v1649 = vsel %vm75, %v1587, 0.0
    %v1650 = vadd.f32 %v1648, %v1649
    %v1651 = vsel %vm75, %v1349, 0.0
    %v1652 = vsel %vm75, %v1443, 0.0
    %v1653 = vadd.f32 %v1651, %v1652
    %v1654 = vsel %vm75, %v1537, 0.0
    %v1655 = vadd.f32 %v1653, %v1654
    %v1656 = vsel %vm75, %v1631, 0.0
    %v1657 = vadd.f32 %v1655, %v1656
    %v1658 = vsel %vm75, %v1352, 0.0
    %v1659 = vsel %vm75, %v1446, 0.0
    %v1660 = vadd.f32 %v1658, %v1659
    %v1661 = vsel %vm75, %v1540, 0.0
    %v1662 = vadd.f32 %v1660, %v1661
    %v1663 = vsel %vm75, %v1634, 0.0
    %v1664 = vadd.f32 %v1662, %v1663
    %v1665 = vadd.f32 %v69, %v1643
    %v1666 = vadd.f32 %v70, %v1650
    %v1667 = vadd.f32 %v71, %v1657
    %v1668 = vadd.f32 %v72, %v1664
    %v1669 = vld [vmem:[#allocation7 + $0x2] sm:$0x1]
    %v1670 = vlaneseq
    %v1671 = vshrl.u32 %v1670, 7
    %v1672 = vsub.s32 0, %v1671
    %v1673 = vrot.slane %v1669, %v1672
    %v1674 = vadd.f32 %v1665, %v1673
    %v1675 = vadd.f32 %v1666, %v1673
    %v1676 = vadd.f32 %v1667, %v1673
    %v1677 = vadd.f32 %v1668, %v1673
    %v1678 = vld [vmem:[#allocation7 + $0x3] sm:$0x1]
    %v1679 = vld [vmem:[#allocation7 + $0x4] sm:$0x1]
    %v1680 = vsel %vm75, %v1674, 0.0
    %1681 = vadd.xlane.f32.xlu0 %v1680
    %v1682 = vpop.xlane.xlu0 %1681
    %v1683 = vsel %vm75, %v1675, 0.0
    %1684 = vadd.xlane.f32.xlu0 %v1683
    %v1685 = vpop.xlane.xlu0 %1684
    %v1686 = vsel %vm75, %v1676, 0.0
    %1687 = vadd.xlane.f32.xlu0 %v1686
    %v1688 = vpop.xlane.xlu0 %1687
    %v1689 = vsel %vm75, %v1677, 0.0
    %1690 = vadd.xlane.f32.xlu0 %v1689
    %v1691 = vpop.xlane.xlu0 %1690
    %v1692 = vmul.f32 %v1682, %v88
    %v1693 = vmul.f32 %v1685, %v88
    %v1694 = vmul.f32 %v1688, %v88
    %v1695 = vmul.f32 %v1691, %v88
    %v1696 = vsub.f32 %v1674, %v1692
    %v1697 = vsub.f32 %v1675, %v1693
    %v1698 = vsub.f32 %v1676, %v1694
    %v1699 = vsub.f32 %v1677, %v1695
    %v1700 = vmul.f32 %v1696, %v1696
    %v1701 = vmul.f32 %v1697, %v1697
    %v1702 = vmul.f32 %v1698, %v1698
    %v1703 = vmul.f32 %v1699, %v1699
    %v1704 = vsel %vm75, %v1700, 0.0
    %1705 = vadd.xlane.f32.xlu0 %v1704
    %v1706 = vpop.xlane.xlu0 %1705
    %v1707 = vsel %vm75, %v1701, 0.0
    %1708 = vadd.xlane.f32.xlu0 %v1707
    %v1709 = vpop.xlane.xlu0 %1708
    %v1710 = vsel %vm75, %v1702, 0.0
    %1711 = vadd.xlane.f32.xlu0 %v1710
    %v1712 = vpop.xlane.xlu0 %1711
    %v1713 = vsel %vm75, %v1703, 0.0
    %1714 = vadd.xlane.f32.xlu0 %v1713
    %v1715 = vpop.xlane.xlu0 %1714
    %v1716 = vmul.f32 %v1706, %v88
    %v1717 = vmul.f32 %v1709, %v88
    %v1718 = vmul.f32 %v1712, %v88
    %v1719 = vmul.f32 %v1715, %v88
    %v1720 = vadd.f32 %v1716, 1e-05
    %v1721 = vadd.f32 %v1717, 1e-05
    %v1722 = vadd.f32 %v1718, 1e-05
    %v1723 = vadd.f32 %v1719, 1e-05
    %v1724 = vrsqrt.pop %v1720
    %v1725 = vrsqrt.pop %v1721
    %v1726 = vrsqrt.pop %v1722
    %v1727 = vrsqrt.pop %v1723
    %v1728 = vmul.f32 %v1696, %v1724
    %v1729 = vmul.f32 %v1697, %v1725
    %v1730 = vmul.f32 %v1698, %v1726
    %v1731 = vmul.f32 %v1699, %v1727
    %v1732 = vlaneseq
    %v1733 = vshrl.u32 %v1732, 7
    %v1734 = vsub.s32 0, %v1733
    %v1735 = vrot.slane %v1678, %v1734
    %v1736 = vmul.f32 %v1728, %v1735
    %v1737 = vmul.f32 %v1729, %v1735
    %v1738 = vmul.f32 %v1730, %v1735
    %v1739 = vmul.f32 %v1731, %v1735
    %v1740 = vlaneseq
    %v1741 = vshrl.u32 %v1740, 7
    %v1742 = vsub.s32 0, %v1741
    %v1743 = vrot.slane %v1679, %v1742
    %v1744 = vadd.f32 %v1736, %v1743
    %v1745 = vadd.f32 %v1737, %v1743
    %v1746 = vadd.f32 %v1738, %v1743
    %v1747 = vadd.f32 %v1739, %v1743
    %v1748 = vpack.c.bf16 %v1745, %v1744
    %v1749 = vpack.c.bf16 %v1747, %v1746
    %v1750 = vld [vmem:[#allocation5] sm:$0xf]
    %v1751 = vld [vmem:[#allocation5 + $0x4] sm:$0xf]
    %v1752 = vld [vmem:[#allocation5 + $0x8] sm:$0xf]
    %v1753 = vld [vmem:[#allocation5 + $0xc] sm:$0xf]
    %v1754 = vld [vmem:[%s6] sm:$0x1]
    %v1755 = vlaneseq
    %v1756 = vshrl.u32 %v1755, 7
    %v1757 = vsub.s32 0, %v1756
    %v1758 = vrot.slane %v1754, %v1757
    %v1763 = vunpack.c.l.b16 %v1750
    %v1764 = vunpack.c.l.b16 %v1751
    %v1765 = vunpack.c.l.b16 %v1752
    %v1766 = vunpack.c.l.b16 %v1753
    %v1767 = vpack.c.b16 %v1764, %v1763
    %v1768 = vpack.c.b16 %v1766, %v1765
    %v1772 = vsel %vm75, %v1748, 0
    %v1775 = vsel %vm75, %v1749, 0
    %1777 = vmatprep.subr.bf16.mxu0 0
    %1778 = vmatpush1.bf16.msra.mxu0 0
    %1779 = vmatprep.subr.bf16.mxu0 0
    %1780 = vmatpush1.bf16.msra.mxu0 0
    %1781 = vmatprep.subr.bf16.mxu0 0
    %1782 = vmatpush1.bf16.msra.mxu0 0
    %1783 = vmatprep.subr.bf16.mxu0 0
    %1784 = vmatpush1.bf16.msra.mxu0 0
    %1785 = vmatprep.subr.bf16.mxu0 0
    %1786 = vmatpush1.bf16.msra.mxu0 0
    %1787 = vmatprep.subr.bf16.mxu0 0
    %1788 = vmatpush1.bf16.msra.mxu0 0
    %1789 = vmatprep.subr.bf16.mxu0 0
    %1790 = vmatpush1.bf16.msra.mxu0 %v1768
    %1791 = vmatprep.subr.bf16.mxu0 0
    %1792 = vmatpush1.bf16.msra.mxu0 %v1767
    %1793 = vmatprep.subr.bf16.mxu0 0
    %1794 = vmatpush2.bf16.msra.mxu0 0
    %1795 = vmatprep.subr.bf16.mxu0 0
    %1796 = vmatpush2.bf16.msra.mxu0 0
    %1797 = vmatprep.subr.bf16.mxu0 0
    %1798 = vmatpush2.bf16.msra.mxu0 0
    %1799 = vmatprep.subr.bf16.mxu0 0
    %1800 = vmatpush2.bf16.msra.mxu0 0
    %1801 = vmatprep.subr.bf16.mxu0 0
    %1802 = vmatpush2.bf16.msra.mxu0 0
    %1803 = vmatprep.subr.bf16.mxu0 0
    %1804 = vmatpush2.bf16.msra.mxu0 0
    %1805 = vmatprep.subr.bf16.mxu0 0
    %1806 = vmatpush2.bf16.msra.mxu0 0
    %1807 = vmatprep.subr.bf16.mxu0 0
    %1808 = vmatpush2.bf16.msra.mxu0 0
    %1809 = vmatprep.mubr.bf16.mxu0 0
    %1810 = vmatmul.mubr.bf16.gmra.mxu0 %v1772
    %v1811 = vpop.f32.mrf.mxu0
    %v1812 = vadd.f32 %v1758, %v1811
    %v1813 = vpop.f32.mrf.mxu0
    %v1814 = vpop.f32.mrf.mxu0
    %v1815 = vadd.f32 %v1758, %v1814
    %v1816 = vpop.f32.mrf.mxu0
    %1817 = vmatprep.mubr.bf16.mxu0 0
    %1818 = vmatmul.mubr.bf16.gmra.mxu0 %v1775
    %v1819 = vpop.f32.mrf.mxu0
    %v1820 = vadd.f32 %v1758, %v1819
    %v1821 = vpop.f32.mrf.mxu0
    %v1822 = vpop.f32.mrf.mxu0
    %v1823 = vadd.f32 %v1758, %v1822
    %v1824 = vpop.f32.mrf.mxu0
    %1825 = vdwg.mxu0
    %v1826 = vmul.f32 %v1812, 0.5
    %v1827 = vmul.f32 %v1815, 0.5
    %v1828 = vmul.f32 %v1820, 0.5
    %v1829 = vmul.f32 %v1823, 0.5
    %v1830 = vmul.f32 %v1812, 0.70710677
    %v1831 = vmul.f32 %v1815, 0.70710677
    %v1832 = vmul.f32 %v1820, 0.70710677
    %v1833 = vmul.f32 %v1823, 0.70710677
    %v1834 = verf.f32.pop %v1830
    %v1835 = verf.f32.pop %v1831
    %v1836 = verf.f32.pop %v1832
    %v1837 = verf.f32.pop %v1833
    %v1838 = vadd.f32 %v1834, 1.0
    %v1839 = vadd.f32 %v1835, 1.0
    %v1840 = vadd.f32 %v1836, 1.0
    %v1841 = vadd.f32 %v1837, 1.0
    %v1842 = vmul.f32 %v1826, %v1838
    %v1843 = vmul.f32 %v1827, %v1839
    %v1844 = vmul.f32 %v1828, %v1840
    %v1845 = vmul.f32 %v1829, %v1841
    %v1846 = vpack.c.bf16 %v1843, %v1842
    %v1847 = vpack.c.bf16 %v1845, %v1844
    %v1848 = vld [vmem:[%s4] sm:$0xf]
    %v1849 = vld [vmem:[%s4 + $0x4] sm:$0xf]
    %v1850 = vld [vmem:[%s4 + $0x8] sm:$0xf]
    %v1851 = vld [vmem:[%s4 + $0xc] sm:$0xf]
    %v1852 = vld [vmem:[%s4 + $0x10] sm:$0xf]
    %v1853 = vld [vmem:[%s4 + $0x14] sm:$0xf]
    %v1854 = vld [vmem:[%s4 + $0x18] sm:$0xf]
    %v1855 = vld [vmem:[%s4 + $0x1c] sm:$0xf]
    %v1864 = vunpack.c.l.b16 %v1848
    %v1865 = vunpack.c.l.b16 %v1849
    %v1866 = vunpack.c.l.b16 %v1850
    %v1867 = vunpack.c.l.b16 %v1851
    %v1868 = vunpack.c.l.b16 %v1852
    %v1869 = vunpack.c.l.b16 %v1853
    %v1870 = vunpack.c.l.b16 %v1854
    %v1871 = vunpack.c.l.b16 %v1855
    %v1872 = vpack.c.b16 %v1865, %v1864
    %v1873 = vpack.c.b16 %v1867, %v1866
    %v1874 = vpack.c.b16 %v1869, %v1868
    %v1875 = vpack.c.b16 %v1871, %v1870
    %vm1880 = vcmask 523264
    %v1882 = vsel %vm1880, %v1846, 0
    %v1885 = vsel %vm1880, %v1847, 0
    %1887 = vmatprep.subr.bf16.mxu0 0
    %1888 = vmatpush1.bf16.msra.mxu0 0
    %1889 = vmatprep.subr.bf16.mxu0 0
    %1890 = vmatpush1.bf16.msra.mxu0 0
    %1891 = vmatprep.subr.bf16.mxu0 0
    %1892 = vmatpush1.bf16.msra.mxu0 0
    %1893 = vmatprep.subr.bf16.mxu0 0
    %1894 = vmatpush1.bf16.msra.mxu0 0
    %1895 = vmatprep.subr.bf16.mxu0 0
    %1896 = vmatpush1.bf16.msra.mxu0 %v1875
    %1897 = vmatprep.subr.bf16.mxu0 0
    %1898 = vmatpush1.bf16.msra.mxu0 %v1874
    %1899 = vmatprep.subr.bf16.mxu0 0
    %1900 = vmatpush1.bf16.msra.mxu0 %v1873
    %1901 = vmatprep.subr.bf16.mxu0 0
    %1902 = vmatpush1.bf16.msra.mxu0 %v1872
    %1903 = vmatprep.subr.bf16.mxu0 0
    %1904 = vmatpush2.bf16.msra.mxu0 0
    %1905 = vmatprep.subr.bf16.mxu0 0
    %1906 = vmatpush2.bf16.msra.mxu0 0
    %1907 = vmatprep.subr.bf16.mxu0 0
    %1908 = vmatpush2.bf16.msra.mxu0 0
    %1909 = vmatprep.subr.bf16.mxu0 0
    %1910 = vmatpush2.bf16.msra.mxu0 0
    %1911 = vmatprep.subr.bf16.mxu0 0
    %1912 = vmatpush2.bf16.msra.mxu0 0
    %1913 = vmatprep.subr.bf16.mxu0 0
    %1914 = vmatpush2.bf16.msra.mxu0 0
    %1915 = vmatprep.subr.bf16.mxu0 0
    %1916 = vmatpush2.bf16.msra.mxu0 0
    %1917 = vmatprep.subr.bf16.mxu0 0
    %1918 = vmatpush2.bf16.msra.mxu0 0
    %1919 = vmatprep.mubr.bf16.mxu0 0
    %1920 = vmatmul.mubr.bf16.gmra.mxu0 %v1882
    %v1921 = vpop.f32.mrf.mxu0
    %v1922 = vadd.f32 0.0, %v1921
    %v1923 = vpop.f32.mrf.mxu0
    %v1924 = vpop.f32.mrf.mxu0
    %v1925 = vadd.f32 0.0, %v1924
    %v1926 = vpop.f32.mrf.mxu0
    %1927 = vmatprep.mubr.bf16.mxu0 0
    %1928 = vmatmul.mubr.bf16.gmra.mxu0 %v1885
    %v1929 = vpop.f32.mrf.mxu0
    %v1930 = vadd.f32 0.0, %v1929
    %v1931 = vpop.f32.mrf.mxu0
    %v1932 = vpop.f32.mrf.mxu0
    %v1933 = vadd.f32 0.0, %v1932
    %v1934 = vpop.f32.mrf.mxu0
    %1935 = vdwg.mxu0
    %v1936 = vadd.f32 %v1674, %v1922
    %v1937 = vadd.f32 %v1675, %v1925
    %v1938 = vadd.f32 %v1676, %v1930
    %v1939 = vadd.f32 %v1677, %v1933
    %v1940 = vld [vmem:[#allocation7 + $0x5] sm:$0x1]
    %v1941 = vlaneseq
    %v1942 = vshrl.u32 %v1941, 7
    %v1943 = vsub.s32 0, %v1942
    %v1944 = vrot.slane %v1940, %v1943
    %v1945 = vadd.f32 %v1936, %v1944
    %v1946 = vadd.f32 %v1937, %v1944
    %v1947 = vadd.f32 %v1938, %v1944
    %v1948 = vadd.f32 %v1939, %v1944
    %v1949 = vld [vmem:[#allocation7 + $0x6] sm:$0x1]
    %v1950 = vld [vmem:[#allocation7 + $0x7] sm:$0x1]
    %v1951 = vsel %vm75, %v1945, 0.0
    %1952 = vadd.xlane.f32.xlu0 %v1951
    %v1953 = vpop.xlane.xlu0 %1952
    %v1954 = vsel %vm75, %v1946, 0.0
    %1955 = vadd.xlane.f32.xlu0 %v1954
    %v1956 = vpop.xlane.xlu0 %1955
    %v1957 = vsel %vm75, %v1947, 0.0
    %1958 = vadd.xlane.f32.xlu0 %v1957
    %v1959 = vpop.xlane.xlu0 %1958
    %v1960 = vsel %vm75, %v1948, 0.0
    %1961 = vadd.xlane.f32.xlu0 %v1960
    %v1962 = vpop.xlane.xlu0 %1961
    %v1963 = vmul.f32 %v1953, %v88
    %v1964 = vmul.f32 %v1956, %v88
    %v1965 = vmul.f32 %v1959, %v88
    %v1966 = vmul.f32 %v1962, %v88
    %v1967 = vsub.f32 %v1945, %v1963
    %v1968 = vsub.f32 %v1946, %v1964
    %v1969 = vsub.f32 %v1947, %v1965
    %v1970 = vsub.f32 %v1948, %v1966
    %v1971 = vmul.f32 %v1967, %v1967
    %v1972 = vmul.f32 %v1968, %v1968
    %v1973 = vmul.f32 %v1969, %v1969
    %v1974 = vmul.f32 %v1970, %v1970
    %v1975 = vsel %vm75, %v1971, 0.0
    %1976 = vadd.xlane.f32.xlu0 %v1975
    %v1977 = vpop.xlane.xlu0 %1976
    %v1978 = vsel %vm75, %v1972, 0.0
    %1979 = vadd.xlane.f32.xlu0 %v1978
    %v1980 = vpop.xlane.xlu0 %1979
    %v1981 = vsel %vm75, %v1973, 0.0
    %1982 = vadd.xlane.f32.xlu0 %v1981
    %v1983 = vpop.xlane.xlu0 %1982
    %v1984 = vsel %vm75, %v1974, 0.0
    %1985 = vadd.xlane.f32.xlu0 %v1984
    %v1986 = vpop.xlane.xlu0 %1985
    %v1987 = vmul.f32 %v1977, %v88
    %v1988 = vmul.f32 %v1980, %v88
    %v1989 = vmul.f32 %v1983, %v88
    %v1990 = vmul.f32 %v1986, %v88
    %v1991 = vadd.f32 %v1987, 1e-05
    %v1992 = vadd.f32 %v1988, 1e-05
    %v1993 = vadd.f32 %v1989, 1e-05
    %v1994 = vadd.f32 %v1990, 1e-05
    %v1995 = vrsqrt.pop %v1991
    %v1996 = vrsqrt.pop %v1992
    %v1997 = vrsqrt.pop %v1993
    %v1998 = vrsqrt.pop %v1994
    %v1999 = vmul.f32 %v1967, %v1995
    %v2000 = vmul.f32 %v1968, %v1996
    %v2001 = vmul.f32 %v1969, %v1997
    %v2002 = vmul.f32 %v1970, %v1998
    %v2003 = vlaneseq
    %v2004 = vshrl.u32 %v2003, 7
    %v2005 = vsub.s32 0, %v2004
    %v2006 = vrot.slane %v1949, %v2005
    %v2007 = vmul.f32 %v1999, %v2006
    %v2008 = vmul.f32 %v2000, %v2006
    %v2009 = vmul.f32 %v2001, %v2006
    %v2010 = vmul.f32 %v2002, %v2006
    %v2011 = vlaneseq
    %v2012 = vshrl.u32 %v2011, 7
    %v2013 = vsub.s32 0, %v2012
    %v2014 = vrot.slane %v1950, %v2013
    %v2015 = vadd.f32 %v2007, %v2014
    %v2016 = vadd.f32 %v2008, %v2014
    %v2017 = vadd.f32 %v2009, %v2014
    %v2018 = vadd.f32 %v2010, %v2014
    %v2019 = vpack.c.bf16 %v2016, %v2015
    %v2020 = vpack.c.bf16 %v2018, %v2017
    %s2021 = scalar_lea.vmem [#allocation2], 16
    %v2022 = vld [vmem:[%s2021] sm:$0xf]
    %v2023 = vld [vmem:[%s2021 + $0x4] sm:$0xf]
    %v2024 = vld [vmem:[%s2021 + $0x8] sm:$0xf]
    %v2025 = vld [vmem:[%s2021 + $0xc] sm:$0xf]
    %v2030 = vunpack.c.l.b16 %v2022
    %v2031 = vunpack.c.l.b16 %v2023
    %v2032 = vunpack.c.l.b16 %v2024
    %v2033 = vunpack.c.l.b16 %v2025
    %v2034 = vpack.c.b16 %v2031, %v2030
    %v2035 = vpack.c.b16 %v2033, %v2032
    %v2039 = vsel %vm75, %v2019, 0
    %v2042 = vsel %vm75, %v2020, 0
    %2044 = vmatprep.subr.bf16.mxu0 0
    %2045 = vmatpush1.bf16.msra.mxu0 0
    %2046 = vmatprep.subr.bf16.mxu0 0
    %2047 = vmatpush1.bf16.msra.mxu0 0
    %2048 = vmatprep.subr.bf16.mxu0 0
    %2049 = vmatpush1.bf16.msra.mxu0 0
    %2050 = vmatprep.subr.bf16.mxu0 0
    %2051 = vmatpush1.bf16.msra.mxu0 0
    %2052 = vmatprep.subr.bf16.mxu0 0
    %2053 = vmatpush1.bf16.msra.mxu0 0
    %2054 = vmatprep.subr.bf16.mxu0 0
    %2055 = vmatpush1.bf16.msra.mxu0 0
    %2056 = vmatprep.subr.bf16.mxu0 0
    %2057 = vmatpush1.bf16.msra.mxu0 %v2035
    %2058 = vmatprep.subr.bf16.mxu0 0
    %2059 = vmatpush1.bf16.msra.mxu0 %v2034
    %2060 = vmatprep.subr.bf16.mxu0 0
    %2061 = vmatpush2.bf16.msra.mxu0 0
    %2062 = vmatprep.subr.bf16.mxu0 0
    %2063 = vmatpush2.bf16.msra.mxu0 0
    %2064 = vmatprep.subr.bf16.mxu0 0
    %2065 = vmatpush2.bf16.msra.mxu0 0
    %2066 = vmatprep.subr.bf16.mxu0 0
    %2067 = vmatpush2.bf16.msra.mxu0 0
    %2068 = vmatprep.subr.bf16.mxu0 0
    %2069 = vmatpush2.bf16.msra.mxu0 0
    %2070 = vmatprep.subr.bf16.mxu0 0
    %2071 = vmatpush2.bf16.msra.mxu0 0
    %2072 = vmatprep.subr.bf16.mxu0 0
    %2073 = vmatpush2.bf16.msra.mxu0 0
    %2074 = vmatprep.subr.bf16.mxu0 0
    %2075 = vmatpush2.bf16.msra.mxu0 0
    %2076 = vmatprep.mubr.bf16.mxu0 0
    %2077 = vmatmul.mubr.bf16.gmra.mxu0 %v2039
    %v2078 = vpop.f32.mrf.mxu0
    %v2079 = vadd.f32 0.0, %v2078
    %v2080 = vpop.f32.mrf.mxu0
    %v2081 = vpop.f32.mrf.mxu0
    %v2082 = vadd.f32 0.0, %v2081
    %v2083 = vpop.f32.mrf.mxu0
    %2084 = vmatprep.mubr.bf16.mxu0 0
    %2085 = vmatmul.mubr.bf16.gmra.mxu0 %v2042
    %v2086 = vpop.f32.mrf.mxu0
    %v2087 = vadd.f32 0.0, %v2086
    %v2088 = vpop.f32.mrf.mxu0
    %v2089 = vpop.f32.mrf.mxu0
    %v2090 = vadd.f32 0.0, %v2089
    %v2091 = vpop.f32.mrf.mxu0
    %2092 = vdwg.mxu0
    %2097 = vrot.lane.b32.xlu0 %v2079, 104
    %v2098 = vpop.permute.xlu0 %2097
    %2099 = vrot.lane.b32.xlu0 %v2082, 104
    %v2100 = vpop.permute.xlu0 %2099
    %2101 = vrot.lane.b32.xlu0 %v2087, 104
    %v2102 = vpop.permute.xlu0 %2101
    %2103 = vrot.lane.b32.xlu0 %v2090, 104
    %v2104 = vpop.permute.xlu0 %2103
    %2109 = vrot.lane.b32.xlu0 %v2079, 80
    %v2110 = vpop.permute.xlu0 %2109
    %2111 = vrot.lane.b32.xlu0 %v2082, 80
    %v2112 = vpop.permute.xlu0 %2111
    %2113 = vrot.lane.b32.xlu0 %v2087, 80
    %v2114 = vpop.permute.xlu0 %2113
    %2115 = vrot.lane.b32.xlu0 %v2090, 80
    %v2116 = vpop.permute.xlu0 %2115
    %2121 = vrot.lane.b32.xlu0 %v2079, 56
    %v2122 = vpop.permute.xlu0 %2121
    %2123 = vrot.lane.b32.xlu0 %v2082, 56
    %v2124 = vpop.permute.xlu0 %2123
    %2125 = vrot.lane.b32.xlu0 %v2087, 56
    %v2126 = vpop.permute.xlu0 %2125
    %2127 = vrot.lane.b32.xlu0 %v2090, 56
    %v2128 = vpop.permute.xlu0 %2127
    %v2133 = vpack.c.bf16 %v2082, %v2079
    %v2134 = vpack.c.bf16 %v2090, %v2087
    %v2135 = vpack.c.bf16 %v2100, %v2098
    %v2136 = vpack.c.bf16 %v2104, %v2102
    %v2137 = vpack.c.bf16 %v2112, %v2110
    %v2138 = vpack.c.bf16 %v2116, %v2114
    %v2139 = vpack.c.bf16 %v2124, %v2122
    %v2140 = vpack.c.bf16 %v2128, %v2126
    %2142 = vrot.lane.b32.xlu0 %v2133, 120
    %v2143 = vpop.permute.xlu0 %2142
    %v2145 = vsel %vm269, %v2133, 0
    %v2148 = vsel %vm269, %v2143, 0
    %2150 = vmatprep.subr.bf16.mxu0 0
    %2151 = vmatpush1.bf16.xpose.msra.mxu0 0
    %2152 = vmatprep.subr.bf16.mxu0 0
    %2153 = vmatpush1.bf16.xpose.msra.mxu0 0
    %2154 = vmatprep.subr.bf16.mxu0 0
    %2155 = vmatpush1.bf16.xpose.msra.mxu0 0
    %2156 = vmatprep.subr.bf16.mxu0 0
    %2157 = vmatpush1.bf16.xpose.msra.mxu0 0
    %2158 = vmatprep.subr.bf16.mxu0 0
    %2159 = vmatpush1.bf16.xpose.msra.mxu0 0
    %2160 = vmatprep.subr.bf16.mxu0 0
    %2161 = vmatpush1.bf16.xpose.msra.mxu0 0
    %2162 = vmatprep.subr.bf16.mxu0 0
    %2163 = vmatpush1.bf16.xpose.msra.mxu0 0
    %2164 = vmatprep.subr.bf16.mxu0 0
    %2165 = vmatpush1.bf16.xpose.msra.mxu0 %v2148
    %2166 = vmatprep.subr.bf16.mxu0 0
    %2167 = vmatpush2.bf16.xpose.msra.mxu0 0
    %2168 = vmatprep.subr.bf16.mxu0 0
    %2169 = vmatpush2.bf16.xpose.msra.mxu0 0
    %2170 = vmatprep.subr.bf16.mxu0 0
    %2171 = vmatpush2.bf16.xpose.msra.mxu0 0
    %2172 = vmatprep.subr.bf16.mxu0 0
    %2173 = vmatpush2.bf16.xpose.msra.mxu0 0
    %2174 = vmatprep.subr.bf16.mxu0 0
    %2175 = vmatpush2.bf16.xpose.msra.mxu0 0
    %2176 = vmatprep.subr.bf16.mxu0 0
    %2177 = vmatpush2.bf16.xpose.msra.mxu0 0
    %2178 = vmatprep.subr.bf16.mxu0 0
    %2179 = vmatpush2.bf16.xpose.msra.mxu0 0
    %2180 = vmatprep.subr.bf16.mxu0 0
    %2181 = vmatpush2.bf16.xpose.msra.mxu0 0
    %2182 = vmatprep.mubr.bf16.mxu0 0
    %2183 = vmatmul.mubr.bf16.gmra.mxu0 %v2145
    %v2184 = vpop.f32.mrf.mxu0
    %v2185 = vadd.f32 0.0, %v2184
    %v2186 = vpop.f32.mrf.mxu0
    %v2187 = vpop.f32.mrf.mxu0
    %v2188 = vadd.f32 0.0, %v2187
    %v2189 = vpop.f32.mrf.mxu0
    %2190 = vdwg.mxu0
    %2192 = vrot.lane.b32.xlu0 %v2134, 120
    %v2193 = vpop.permute.xlu0 %2192
    %v2195 = vsel %vm269, %v2134, 0
    %v2198 = vsel %vm269, %v2193, 0
    %2200 = vmatprep.subr.bf16.mxu0 0
    %2201 = vmatpush1.bf16.xpose.msra.mxu0 0
    %2202 = vmatprep.subr.bf16.mxu0 0
    %2203 = vmatpush1.bf16.xpose.msra.mxu0 0
    %2204 = vmatprep.subr.bf16.mxu0 0
    %2205 = vmatpush1.bf16.xpose.msra.mxu0 0
    %2206 = vmatprep.subr.bf16.mxu0 0
    %2207 = vmatpush1.bf16.xpose.msra.mxu0 0
    %2208 = vmatprep.subr.bf16.mxu0 0
    %2209 = vmatpush1.bf16.xpose.msra.mxu0 0
    %2210 = vmatprep.subr.bf16.mxu0 0
    %2211 = vmatpush1.bf16.xpose.msra.mxu0 0
    %2212 = vmatprep.subr.bf16.mxu0 0
    %2213 = vmatpush1.bf16.xpose.msra.mxu0 0
    %2214 = vmatprep.subr.bf16.mxu0 0
    %2215 = vmatpush1.bf16.xpose.msra.mxu0 %v2198
    %2216 = vmatprep.subr.bf16.mxu0 0
    %2217 = vmatpush2.bf16.xpose.msra.mxu0 0
    %2218 = vmatprep.subr.bf16.mxu0 0
    %2219 = vmatpush2.bf16.xpose.msra.mxu0 0
    %2220 = vmatprep.subr.bf16.mxu0 0
    %2221 = vmatpush2.bf16.xpose.msra.mxu0 0
    %2222 = vmatprep.subr.bf16.mxu0 0
    %2223 = vmatpush2.bf16.xpose.msra.mxu0 0
    %2224 = vmatprep.subr.bf16.mxu0 0
    %2225 = vmatpush2.bf16.xpose.msra.mxu0 0
    %2226 = vmatprep.subr.bf16.mxu0 0
    %2227 = vmatpush2.bf16.xpose.msra.mxu0 0
    %2228 = vmatprep.subr.bf16.mxu0 0
    %2229 = vmatpush2.bf16.xpose.msra.mxu0 0
    %2230 = vmatprep.subr.bf16.mxu0 0
    %2231 = vmatpush2.bf16.xpose.msra.mxu0 0
    %2232 = vmatprep.mubr.bf16.mxu0 0
    %2233 = vmatmul.mubr.bf16.gmra.mxu0 %v2195
    %v2234 = vpop.f32.mrf.mxu0
    %v2235 = vadd.f32 0.0, %v2234
    %v2236 = vpop.f32.mrf.mxu0
    %v2237 = vpop.f32.mrf.mxu0
    %v2238 = vadd.f32 0.0, %v2237
    %v2239 = vpop.f32.mrf.mxu0
    %2240 = vdwg.mxu0
    %2242 = vrot.lane.b32.xlu0 %v2135, 120
    %v2243 = vpop.permute.xlu0 %2242
    %v2245 = vsel %vm269, %v2135, 0
    %v2248 = vsel %vm269, %v2243, 0
    %2250 = vmatprep.subr.bf16.mxu0 0
    %2251 = vmatpush1.bf16.xpose.msra.mxu0 0
    %2252 = vmatprep.subr.bf16.mxu0 0
    %2253 = vmatpush1.bf16.xpose.msra.mxu0 0
    %2254 = vmatprep.subr.bf16.mxu0 0
    %2255 = vmatpush1.bf16.xpose.msra.mxu0 0
    %2256 = vmatprep.subr.bf16.mxu0 0
    %2257 = vmatpush1.bf16.xpose.msra.mxu0 0
    %2258 = vmatprep.subr.bf16.mxu0 0
    %2259 = vmatpush1.bf16.xpose.msra.mxu0 0
    %2260 = vmatprep.subr.bf16.mxu0 0
    %2261 = vmatpush1.bf16.xpose.msra.mxu0 0
    %2262 = vmatprep.subr.bf16.mxu0 0
    %2263 = vmatpush1.bf16.xpose.msra.mxu0 0
    %2264 = vmatprep.subr.bf16.mxu0 0
    %2265 = vmatpush1.bf16.xpose.msra.mxu0 %v2248
    %2266 = vmatprep.subr.bf16.mxu0 0
    %2267 = vmatpush2.bf16.xpose.msra.mxu0 0
    %2268 = vmatprep.subr.bf16.mxu0 0
    %2269 = vmatpush2.bf16.xpose.msra.mxu0 0
    %2270 = vmatprep.subr.bf16.mxu0 0
    %2271 = vmatpush2.bf16.xpose.msra.mxu0 0
    %2272 = vmatprep.subr.bf16.mxu0 0
    %2273 = vmatpush2.bf16.xpose.msra.mxu0 0
    %2274 = vmatprep.subr.bf16.mxu0 0
    %2275 = vmatpush2.bf16.xpose.msra.mxu0 0
    %2276 = vmatprep.subr.bf16.mxu0 0
    %2277 = vmatpush2.bf16.xpose.msra.mxu0 0
    %2278 = vmatprep.subr.bf16.mxu0 0
    %2279 = vmatpush2.bf16.xpose.msra.mxu0 0
    %2280 = vmatprep.subr.bf16.mxu0 0
    %2281 = vmatpush2.bf16.xpose.msra.mxu0 0
    %2282 = vmatprep.mubr.bf16.mxu0 0
    %2283 = vmatmul.mubr.bf16.gmra.mxu0 %v2245
    %v2284 = vpop.f32.mrf.mxu0
    %v2285 = vadd.f32 0.0, %v2284
    %v2286 = vpop.f32.mrf.mxu0
    %v2287 = vpop.f32.mrf.mxu0
    %v2288 = vadd.f32 0.0, %v2287
    %v2289 = vpop.f32.mrf.mxu0
    %2290 = vdwg.mxu0
    %2292 = vrot.lane.b32.xlu0 %v2136, 120
    %v2293 = vpop.permute.xlu0 %2292
    %v2295 = vsel %vm269, %v2136, 0
    %v2298 = vsel %vm269, %v2293, 0
    %2300 = vmatprep.subr.bf16.mxu0 0
    %2301 = vmatpush1.bf16.xpose.msra.mxu0 0
    %2302 = vmatprep.subr.bf16.mxu0 0
    %2303 = vmatpush1.bf16.xpose.msra.mxu0 0
    %2304 = vmatprep.subr.bf16.mxu0 0
    %2305 = vmatpush1.bf16.xpose.msra.mxu0 0
    %2306 = vmatprep.subr.bf16.mxu0 0
    %2307 = vmatpush1.bf16.xpose.msra.mxu0 0
    %2308 = vmatprep.subr.bf16.mxu0 0
    %2309 = vmatpush1.bf16.xpose.msra.mxu0 0
    %2310 = vmatprep.subr.bf16.mxu0 0
    %2311 = vmatpush1.bf16.xpose.msra.mxu0 0
    %2312 = vmatprep.subr.bf16.mxu0 0
    %2313 = vmatpush1.bf16.xpose.msra.mxu0 0
    %2314 = vmatprep.subr.bf16.mxu0 0
    %2315 = vmatpush1.bf16.xpose.msra.mxu0 %v2298
    %2316 = vmatprep.subr.bf16.mxu0 0
    %2317 = vmatpush2.bf16.xpose.msra.mxu0 0
    %2318 = vmatprep.subr.bf16.mxu0 0
    %2319 = vmatpush2.bf16.xpose.msra.mxu0 0
    %2320 = vmatprep.subr.bf16.mxu0 0
    %2321 = vmatpush2.bf16.xpose.msra.mxu0 0
    %2322 = vmatprep.subr.bf16.mxu0 0
    %2323 = vmatpush2.bf16.xpose.msra.mxu0 0
    %2324 = vmatprep.subr.bf16.mxu0 0
    %2325 = vmatpush2.bf16.xpose.msra.mxu0 0
    %2326 = vmatprep.subr.bf16.mxu0 0
    %2327 = vmatpush2.bf16.xpose.msra.mxu0 0
    %2328 = vmatprep.subr.bf16.mxu0 0
    %2329 = vmatpush2.bf16.xpose.msra.mxu0 0
    %2330 = vmatprep.subr.bf16.mxu0 0
    %2331 = vmatpush2.bf16.xpose.msra.mxu0 0
    %2332 = vmatprep.mubr.bf16.mxu0 0
    %2333 = vmatmul.mubr.bf16.gmra.mxu0 %v2295
    %v2334 = vpop.f32.mrf.mxu0
    %v2335 = vadd.f32 0.0, %v2334
    %v2336 = vpop.f32.mrf.mxu0
    %v2337 = vpop.f32.mrf.mxu0
    %v2338 = vadd.f32 0.0, %v2337
    %v2339 = vpop.f32.mrf.mxu0
    %2340 = vdwg.mxu0
    %2342 = vrot.lane.b32.xlu0 %v2137, 120
    %v2343 = vpop.permute.xlu0 %2342
    %v2345 = vsel %vm269, %v2137, 0
    %v2348 = vsel %vm269, %v2343, 0
    %2350 = vmatprep.subr.bf16.mxu0 0
    %2351 = vmatpush1.bf16.xpose.msra.mxu0 0
    %2352 = vmatprep.subr.bf16.mxu0 0
    %2353 = vmatpush1.bf16.xpose.msra.mxu0 0
    %2354 = vmatprep.subr.bf16.mxu0 0
    %2355 = vmatpush1.bf16.xpose.msra.mxu0 0
    %2356 = vmatprep.subr.bf16.mxu0 0
    %2357 = vmatpush1.bf16.xpose.msra.mxu0 0
    %2358 = vmatprep.subr.bf16.mxu0 0
    %2359 = vmatpush1.bf16.xpose.msra.mxu0 0
    %2360 = vmatprep.subr.bf16.mxu0 0
    %2361 = vmatpush1.bf16.xpose.msra.mxu0 0
    %2362 = vmatprep.subr.bf16.mxu0 0
    %2363 = vmatpush1.bf16.xpose.msra.mxu0 0
    %2364 = vmatprep.subr.bf16.mxu0 0
    %2365 = vmatpush1.bf16.xpose.msra.mxu0 %v2348
    %2366 = vmatprep.subr.bf16.mxu0 0
    %2367 = vmatpush2.bf16.xpose.msra.mxu0 0
    %2368 = vmatprep.subr.bf16.mxu0 0
    %2369 = vmatpush2.bf16.xpose.msra.mxu0 0
    %2370 = vmatprep.subr.bf16.mxu0 0
    %2371 = vmatpush2.bf16.xpose.msra.mxu0 0
    %2372 = vmatprep.subr.bf16.mxu0 0
    %2373 = vmatpush2.bf16.xpose.msra.mxu0 0
    %2374 = vmatprep.subr.bf16.mxu0 0
    %2375 = vmatpush2.bf16.xpose.msra.mxu0 0
    %2376 = vmatprep.subr.bf16.mxu0 0
    %2377 = vmatpush2.bf16.xpose.msra.mxu0 0
    %2378 = vmatprep.subr.bf16.mxu0 0
    %2379 = vmatpush2.bf16.xpose.msra.mxu0 0
    %2380 = vmatprep.subr.bf16.mxu0 0
    %2381 = vmatpush2.bf16.xpose.msra.mxu0 0
    %2382 = vmatprep.mubr.bf16.mxu0 0
    %2383 = vmatmul.mubr.bf16.gmra.mxu0 %v2345
    %v2384 = vpop.f32.mrf.mxu0
    %v2385 = vadd.f32 0.0, %v2384
    %v2386 = vpop.f32.mrf.mxu0
    %v2387 = vpop.f32.mrf.mxu0
    %v2388 = vadd.f32 0.0, %v2387
    %v2389 = vpop.f32.mrf.mxu0
    %2390 = vdwg.mxu0
    %2392 = vrot.lane.b32.xlu0 %v2138, 120
    %v2393 = vpop.permute.xlu0 %2392
    %v2395 = vsel %vm269, %v2138, 0
    %v2398 = vsel %vm269, %v2393, 0
    %2400 = vmatprep.subr.bf16.mxu0 0
    %2401 = vmatpush1.bf16.xpose.msra.mxu0 0
    %2402 = vmatprep.subr.bf16.mxu0 0
    %2403 = vmatpush1.bf16.xpose.msra.mxu0 0
    %2404 = vmatprep.subr.bf16.mxu0 0
    %2405 = vmatpush1.bf16.xpose.msra.mxu0 0
    %2406 = vmatprep.subr.bf16.mxu0 0
    %2407 = vmatpush1.bf16.xpose.msra.mxu0 0
    %2408 = vmatprep.subr.bf16.mxu0 0
    %2409 = vmatpush1.bf16.xpose.msra.mxu0 0
    %2410 = vmatprep.subr.bf16.mxu0 0
    %2411 = vmatpush1.bf16.xpose.msra.mxu0 0
    %2412 = vmatprep.subr.bf16.mxu0 0
    %2413 = vmatpush1.bf16.xpose.msra.mxu0 0
    %2414 = vmatprep.subr.bf16.mxu0 0
    %2415 = vmatpush1.bf16.xpose.msra.mxu0 %v2398
    %2416 = vmatprep.subr.bf16.mxu0 0
    %2417 = vmatpush2.bf16.xpose.msra.mxu0 0
    %2418 = vmatprep.subr.bf16.mxu0 0
    %2419 = vmatpush2.bf16.xpose.msra.mxu0 0
    %2420 = vmatprep.subr.bf16.mxu0 0
    %2421 = vmatpush2.bf16.xpose.msra.mxu0 0
    %2422 = vmatprep.subr.bf16.mxu0 0
    %2423 = vmatpush2.bf16.xpose.msra.mxu0 0
    %2424 = vmatprep.subr.bf16.mxu0 0
    %2425 = vmatpush2.bf16.xpose.msra.mxu0 0
    %2426 = vmatprep.subr.bf16.mxu0 0
    %2427 = vmatpush2.bf16.xpose.msra.mxu0 0
    %2428 = vmatprep.subr.bf16.mxu0 0
    %2429 = vmatpush2.bf16.xpose.msra.mxu0 0
    %2430 = vmatprep.subr.bf16.mxu0 0
    %2431 = vmatpush2.bf16.xpose.msra.mxu0 0
    %2432 = vmatprep.mubr.bf16.mxu0 0
    %2433 = vmatmul.mubr.bf16.gmra.mxu0 %v2395
    %v2434 = vpop.f32.mrf.mxu0
    %v2435 = vadd.f32 0.0, %v2434
    %v2436 = vpop.f32.mrf.mxu0
    %v2437 = vpop.f32.mrf.mxu0
    %v2438 = vadd.f32 0.0, %v2437
    %v2439 = vpop.f32.mrf.mxu0
    %2440 = vdwg.mxu0
    %2442 = vrot.lane.b32.xlu0 %v2139, 120
    %v2443 = vpop.permute.xlu0 %2442
    %v2445 = vsel %vm269, %v2139, 0
    %v2448 = vsel %vm269, %v2443, 0
    %2450 = vmatprep.subr.bf16.mxu0 0
    %2451 = vmatpush1.bf16.xpose.msra.mxu0 0
    %2452 = vmatprep.subr.bf16.mxu0 0
    %2453 = vmatpush1.bf16.xpose.msra.mxu0 0
    %2454 = vmatprep.subr.bf16.mxu0 0
    %2455 = vmatpush1.bf16.xpose.msra.mxu0 0
    %2456 = vmatprep.subr.bf16.mxu0 0
    %2457 = vmatpush1.bf16.xpose.msra.mxu0 0
    %2458 = vmatprep.subr.bf16.mxu0 0
    %2459 = vmatpush1.bf16.xpose.msra.mxu0 0
    %2460 = vmatprep.subr.bf16.mxu0 0
    %2461 = vmatpush1.bf16.xpose.msra.mxu0 0
    %2462 = vmatprep.subr.bf16.mxu0 0
    %2463 = vmatpush1.bf16.xpose.msra.mxu0 0
    %2464 = vmatprep.subr.bf16.mxu0 0
    %2465 = vmatpush1.bf16.xpose.msra.mxu0 %v2448
    %2466 = vmatprep.subr.bf16.mxu0 0
    %2467 = vmatpush2.bf16.xpose.msra.mxu0 0
    %2468 = vmatprep.subr.bf16.mxu0 0
    %2469 = vmatpush2.bf16.xpose.msra.mxu0 0
    %2470 = vmatprep.subr.bf16.mxu0 0
    %2471 = vmatpush2.bf16.xpose.msra.mxu0 0
    %2472 = vmatprep.subr.bf16.mxu0 0
    %2473 = vmatpush2.bf16.xpose.msra.mxu0 0
    %2474 = vmatprep.subr.bf16.mxu0 0
    %2475 = vmatpush2.bf16.xpose.msra.mxu0 0
    %2476 = vmatprep.subr.bf16.mxu0 0
    %2477 = vmatpush2.bf16.xpose.msra.mxu0 0
    %2478 = vmatprep.subr.bf16.mxu0 0
    %2479 = vmatpush2.bf16.xpose.msra.mxu0 0
    %2480 = vmatprep.subr.bf16.mxu0 0
    %2481 = vmatpush2.bf16.xpose.msra.mxu0 0
    %2482 = vmatprep.mubr.bf16.mxu0 0
    %2483 = vmatmul.mubr.bf16.gmra.mxu0 %v2445
    %v2484 = vpop.f32.mrf.mxu0
    %v2485 = vadd.f32 0.0, %v2484
    %v2486 = vpop.f32.mrf.mxu0
    %v2487 = vpop.f32.mrf.mxu0
    %v2488 = vadd.f32 0.0, %v2487
    %v2489 = vpop.f32.mrf.mxu0
    %2490 = vdwg.mxu0
    %2492 = vrot.lane.b32.xlu0 %v2140, 120
    %v2493 = vpop.permute.xlu0 %2492
    %v2495 = vsel %vm269, %v2140, 0
    %v2498 = vsel %vm269, %v2493, 0
    %2500 = vmatprep.subr.bf16.mxu0 0
    %2501 = vmatpush1.bf16.xpose.msra.mxu0 0
    %2502 = vmatprep.subr.bf16.mxu0 0
    %2503 = vmatpush1.bf16.xpose.msra.mxu0 0
    %2504 = vmatprep.subr.bf16.mxu0 0
    %2505 = vmatpush1.bf16.xpose.msra.mxu0 0
    %2506 = vmatprep.subr.bf16.mxu0 0
    %2507 = vmatpush1.bf16.xpose.msra.mxu0 0
    %2508 = vmatprep.subr.bf16.mxu0 0
    %2509 = vmatpush1.bf16.xpose.msra.mxu0 0
    %2510 = vmatprep.subr.bf16.mxu0 0
    %2511 = vmatpush1.bf16.xpose.msra.mxu0 0
    %2512 = vmatprep.subr.bf16.mxu0 0
    %2513 = vmatpush1.bf16.xpose.msra.mxu0 0
    %2514 = vmatprep.subr.bf16.mxu0 0
    %2515 = vmatpush1.bf16.xpose.msra.mxu0 %v2498
    %2516 = vmatprep.subr.bf16.mxu0 0
    %2517 = vmatpush2.bf16.xpose.msra.mxu0 0
    %2518 = vmatprep.subr.bf16.mxu0 0
    %2519 = vmatpush2.bf16.xpose.msra.mxu0 0
    %2520 = vmatprep.subr.bf16.mxu0 0
    %2521 = vmatpush2.bf16.xpose.msra.mxu0 0
    %2522 = vmatprep.subr.bf16.mxu0 0
    %2523 = vmatpush2.bf16.xpose.msra.mxu0 0
    %2524 = vmatprep.subr.bf16.mxu0 0
    %2525 = vmatpush2.bf16.xpose.msra.mxu0 0
    %2526 = vmatprep.subr.bf16.mxu0 0
    %2527 = vmatpush2.bf16.xpose.msra.mxu0 0
    %2528 = vmatprep.subr.bf16.mxu0 0
    %2529 = vmatpush2.bf16.xpose.msra.mxu0 0
    %2530 = vmatprep.subr.bf16.mxu0 0
    %2531 = vmatpush2.bf16.xpose.msra.mxu0 0
    %2532 = vmatprep.mubr.bf16.mxu0 0
    %2533 = vmatmul.mubr.bf16.gmra.mxu0 %v2495
    %v2534 = vpop.f32.mrf.mxu0
    %v2535 = vadd.f32 0.0, %v2534
    %v2536 = vpop.f32.mrf.mxu0
    %v2537 = vpop.f32.mrf.mxu0
    %v2538 = vadd.f32 0.0, %v2537
    %v2539 = vpop.f32.mrf.mxu0
    %2540 = vdwg.mxu0
    %v2541 = vmul.f32 %v2185, 0.35355338
    %v2542 = vmul.f32 %v2188, 0.35355338
    %v2543 = vmul.f32 %v2235, 0.35355338
    %v2544 = vmul.f32 %v2238, 0.35355338
    %v2545 = vmul.f32 %v2285, 0.35355338
    %v2546 = vmul.f32 %v2288, 0.35355338
    %v2547 = vmul.f32 %v2335, 0.35355338
    %v2548 = vmul.f32 %v2338, 0.35355338
    %v2549 = vmul.f32 %v2385, 0.35355338
    %v2550 = vmul.f32 %v2388, 0.35355338
    %v2551 = vmul.f32 %v2435, 0.35355338
    %v2552 = vmul.f32 %v2438, 0.35355338
    %v2553 = vmul.f32 %v2485, 0.35355338
    %v2554 = vmul.f32 %v2488, 0.35355338
    %v2555 = vmul.f32 %v2535, 0.35355338
    %v2556 = vmul.f32 %v2538, 0.35355338
    %v2557 = vsel %vm683, %v2541, -inf
    %2558 = vmax.xlane.f32.xlu0 %v2557
    %v2559 = vpop.xlane.xlu0 %2558
    %v2560 = vsel %vm683, %v2542, -inf
    %2561 = vmax.xlane.f32.xlu0 %v2560
    %v2562 = vpop.xlane.xlu0 %2561
    %v2563 = vsel %vm683, %v2543, -inf
    %2564 = vmax.xlane.f32.xlu0 %v2563
    %v2565 = vpop.xlane.xlu0 %2564
    %v2566 = vsel %vm683, %v2544, -inf
    %2567 = vmax.xlane.f32.xlu0 %v2566
    %v2568 = vpop.xlane.xlu0 %2567
    %v2569 = vsel %vm683, %v2545, -inf
    %2570 = vmax.xlane.f32.xlu0 %v2569
    %v2571 = vpop.xlane.xlu0 %2570
    %v2572 = vsel %vm683, %v2546, -inf
    %2573 = vmax.xlane.f32.xlu0 %v2572
    %v2574 = vpop.xlane.xlu0 %2573
    %v2575 = vsel %vm683, %v2547, -inf
    %2576 = vmax.xlane.f32.xlu0 %v2575
    %v2577 = vpop.xlane.xlu0 %2576
    %v2578 = vsel %vm683, %v2548, -inf
    %2579 = vmax.xlane.f32.xlu0 %v2578
    %v2580 = vpop.xlane.xlu0 %2579
    %v2581 = vsel %vm683, %v2549, -inf
    %2582 = vmax.xlane.f32.xlu0 %v2581
    %v2583 = vpop.xlane.xlu0 %2582
    %v2584 = vsel %vm683, %v2550, -inf
    %2585 = vmax.xlane.f32.xlu0 %v2584
    %v2586 = vpop.xlane.xlu0 %2585
    %v2587 = vsel %vm683, %v2551, -inf
    %2588 = vmax.xlane.f32.xlu0 %v2587
    %v2589 = vpop.xlane.xlu0 %2588
    %v2590 = vsel %vm683, %v2552, -inf
    %2591 = vmax.xlane.f32.xlu0 %v2590
    %v2592 = vpop.xlane.xlu0 %2591
    %v2593 = vsel %vm683, %v2553, -inf
    %2594 = vmax.xlane.f32.xlu0 %v2593
    %v2595 = vpop.xlane.xlu0 %2594
    %v2596 = vsel %vm683, %v2554, -inf
    %2597 = vmax.xlane.f32.xlu0 %v2596
    %v2598 = vpop.xlane.xlu0 %2597
    %v2599 = vsel %vm683, %v2555, -inf
    %2600 = vmax.xlane.f32.xlu0 %v2599
    %v2601 = vpop.xlane.xlu0 %2600
    %v2602 = vsel %vm683, %v2556, -inf
    %2603 = vmax.xlane.f32.xlu0 %v2602
    %v2604 = vpop.xlane.xlu0 %2603
    %v2605 = vsub.f32 %v2541, %v2559
    %v2606 = vsub.f32 %v2542, %v2562
    %v2607 = vsub.f32 %v2543, %v2565
    %v2608 = vsub.f32 %v2544, %v2568
    %v2609 = vsub.f32 %v2545, %v2571
    %v2610 = vsub.f32 %v2546, %v2574
    %v2611 = vsub.f32 %v2547, %v2577
    %v2612 = vsub.f32 %v2548, %v2580
    %v2613 = vsub.f32 %v2549, %v2583
    %v2614 = vsub.f32 %v2550, %v2586
    %v2615 = vsub.f32 %v2551, %v2589
    %v2616 = vsub.f32 %v2552, %v2592
    %v2617 = vsub.f32 %v2553, %v2595
    %v2618 = vsub.f32 %v2554, %v2598
    %v2619 = vsub.f32 %v2555, %v2601
    %v2620 = vsub.f32 %v2556, %v2604
    %v2621 = vmul.f32 %v2605, 1.442695
    %v2622 = vpow.pop %v2621
    %v2623 = vmul.f32 %v2606, 1.442695
    %v2624 = vpow.pop %v2623
    %v2625 = vmul.f32 %v2607, 1.442695
    %v2626 = vpow.pop %v2625
    %v2627 = vmul.f32 %v2608, 1.442695
    %v2628 = vpow.pop %v2627
    %v2629 = vmul.f32 %v2609, 1.442695
    %v2630 = vpow.pop %v2629
    %v2631 = vmul.f32 %v2610, 1.442695
    %v2632 = vpow.pop %v2631
    %v2633 = vmul.f32 %v2611, 1.442695
    %v2634 = vpow.pop %v2633
    %v2635 = vmul.f32 %v2612, 1.442695
    %v2636 = vpow.pop %v2635
    %v2637 = vmul.f32 %v2613, 1.442695
    %v2638 = vpow.pop %v2637
    %v2639 = vmul.f32 %v2614, 1.442695
    %v2640 = vpow.pop %v2639
    %v2641 = vmul.f32 %v2615, 1.442695
    %v2642 = vpow.pop %v2641
    %v2643 = vmul.f32 %v2616, 1.442695
    %v2644 = vpow.pop %v2643
    %v2645 = vmul.f32 %v2617, 1.442695
    %v2646 = vpow.pop %v2645
    %v2647 = vmul.f32 %v2618, 1.442695
    %v2648 = vpow.pop %v2647
    %v2649 = vmul.f32 %v2619, 1.442695
    %v2650 = vpow.pop %v2649
    %v2651 = vmul.f32 %v2620, 1.442695
    %v2652 = vpow.pop %v2651
    %v2653 = vsel %vm683, %v2622, 0.0
    %2654 = vadd.xlane.f32.xlu0 %v2653
    %v2655 = vpop.xlane.xlu0 %2654
    %v2656 = vsel %vm683, %v2624, 0.0
    %2657 = vadd.xlane.f32.xlu0 %v2656
    %v2658 = vpop.xlane.xlu0 %2657
    %v2659 = vsel %vm683, %v2626, 0.0
    %2660 = vadd.xlane.f32.xlu0 %v2659
    %v2661 = vpop.xlane.xlu0 %2660
    %v2662 = vsel %vm683, %v2628, 0.0
    %2663 = vadd.xlane.f32.xlu0 %v2662
    %v2664 = vpop.xlane.xlu0 %2663
    %v2665 = vsel %vm683, %v2630, 0.0
    %2666 = vadd.xlane.f32.xlu0 %v2665
    %v2667 = vpop.xlane.xlu0 %2666
    %v2668 = vsel %vm683, %v2632, 0.0
    %2669 = vadd.xlane.f32.xlu0 %v2668
    %v2670 = vpop.xlane.xlu0 %2669
    %v2671 = vsel %vm683, %v2634, 0.0
    %2672 = vadd.xlane.f32.xlu0 %v2671
    %v2673 = vpop.xlane.xlu0 %2672
    %v2674 = vsel %vm683, %v2636, 0.0
    %2675 = vadd.xlane.f32.xlu0 %v2674
    %v2676 = vpop.xlane.xlu0 %2675
    %v2677 = vsel %vm683, %v2638, 0.0
    %2678 = vadd.xlane.f32.xlu0 %v2677
    %v2679 = vpop.xlane.xlu0 %2678
    %v2680 = vsel %vm683, %v2640, 0.0
    %2681 = vadd.xlane.f32.xlu0 %v2680
    %v2682 = vpop.xlane.xlu0 %2681
    %v2683 = vsel %vm683, %v2642, 0.0
    %2684 = vadd.xlane.f32.xlu0 %v2683
    %v2685 = vpop.xlane.xlu0 %2684
    %v2686 = vsel %vm683, %v2644, 0.0
    %2687 = vadd.xlane.f32.xlu0 %v2686
    %v2688 = vpop.xlane.xlu0 %2687
    %v2689 = vsel %vm683, %v2646, 0.0
    %2690 = vadd.xlane.f32.xlu0 %v2689
    %v2691 = vpop.xlane.xlu0 %2690
    %v2692 = vsel %vm683, %v2648, 0.0
    %2693 = vadd.xlane.f32.xlu0 %v2692
    %v2694 = vpop.xlane.xlu0 %2693
    %v2695 = vsel %vm683, %v2650, 0.0
    %2696 = vadd.xlane.f32.xlu0 %v2695
    %v2697 = vpop.xlane.xlu0 %2696
    %v2698 = vsel %vm683, %v2652, 0.0
    %2699 = vadd.xlane.f32.xlu0 %v2698
    %v2700 = vpop.xlane.xlu0 %2699
    %v2701 = vrcp.pop %v2655
    %v2702 = vmul.f32 %v2622, %v2701
    %v2703 = vrcp.pop %v2658
    %v2704 = vmul.f32 %v2624, %v2703
    %v2705 = vrcp.pop %v2661
    %v2706 = vmul.f32 %v2626, %v2705
    %v2707 = vrcp.pop %v2664
    %v2708 = vmul.f32 %v2628, %v2707
    %v2709 = vrcp.pop %v2667
    %v2710 = vmul.f32 %v2630, %v2709
    %v2711 = vrcp.pop %v2670
    %v2712 = vmul.f32 %v2632, %v2711
    %v2713 = vrcp.pop %v2673
    %v2714 = vmul.f32 %v2634, %v2713
    %v2715 = vrcp.pop %v2676
    %v2716 = vmul.f32 %v2636, %v2715
    %v2717 = vrcp.pop %v2679
    %v2718 = vmul.f32 %v2638, %v2717
    %v2719 = vrcp.pop %v2682
    %v2720 = vmul.f32 %v2640, %v2719
    %v2721 = vrcp.pop %v2685
    %v2722 = vmul.f32 %v2642, %v2721
    %v2723 = vrcp.pop %v2688
    %v2724 = vmul.f32 %v2644, %v2723
    %v2725 = vrcp.pop %v2691
    %v2726 = vmul.f32 %v2646, %v2725
    %v2727 = vrcp.pop %v2694
    %v2728 = vmul.f32 %v2648, %v2727
    %v2729 = vrcp.pop %v2697
    %v2730 = vmul.f32 %v2650, %v2729
    %v2731 = vrcp.pop %v2700
    %v2732 = vmul.f32 %v2652, %v2731
    %v2733 = vpack.c.bf16 %v2704, %v2702
    %v2734 = vpack.c.bf16 %v2708, %v2706
    %v2735 = vpack.c.bf16 %v2712, %v2710
    %v2736 = vpack.c.bf16 %v2716, %v2714
    %v2737 = vpack.c.bf16 %v2720, %v2718
    %v2738 = vpack.c.bf16 %v2724, %v2722
    %v2739 = vpack.c.bf16 %v2728, %v2726
    %v2740 = vpack.c.bf16 %v2732, %v2730
    %2741 = vrot.lane.b32.xlu0 %v2133, 112
    %v2742 = vpop.permute.xlu0 %2741
    %v2745 = vsel %vm683, %v2733, 0
    %2747 = vmatprep.subr.bf16.mxu0 0
    %2748 = vmatpush1.bf16.msra.mxu0 0
    %2749 = vmatprep.subr.bf16.mxu0 0
    %2750 = vmatpush1.bf16.msra.mxu0 0
    %2751 = vmatprep.subr.bf16.mxu0 0
    %2752 = vmatpush1.bf16.msra.mxu0 0
    %2753 = vmatprep.subr.bf16.mxu0 0
    %2754 = vmatpush1.bf16.msra.mxu0 0
    %2755 = vmatprep.subr.bf16.mxu0 0
    %2756 = vmatpush1.bf16.msra.mxu0 0
    %2757 = vmatprep.subr.bf16.mxu0 0
    %2758 = vmatpush1.bf16.msra.mxu0 0
    %2759 = vmatprep.subr.bf16.mxu0 0
    %2760 = vmatpush1.bf16.msra.mxu0 0
    %2761 = vmatprep.subr.bf16.mxu0 0
    %2762 = vmatpush1.bf16.msra.mxu0 %v2742
    %2763 = vmatprep.subr.bf16.mxu0 0
    %2764 = vmatpush2.bf16.msra.mxu0 0
    %2765 = vmatprep.subr.bf16.mxu0 0
    %2766 = vmatpush2.bf16.msra.mxu0 0
    %2767 = vmatprep.subr.bf16.mxu0 0
    %2768 = vmatpush2.bf16.msra.mxu0 0
    %2769 = vmatprep.subr.bf16.mxu0 0
    %2770 = vmatpush2.bf16.msra.mxu0 0
    %2771 = vmatprep.subr.bf16.mxu0 0
    %2772 = vmatpush2.bf16.msra.mxu0 0
    %2773 = vmatprep.subr.bf16.mxu0 0
    %2774 = vmatpush2.bf16.msra.mxu0 0
    %2775 = vmatprep.subr.bf16.mxu0 0
    %2776 = vmatpush2.bf16.msra.mxu0 0
    %2777 = vmatprep.subr.bf16.mxu0 0
    %2778 = vmatpush2.bf16.msra.mxu0 0
    %2779 = vmatprep.mubr.bf16.mxu0 0
    %2780 = vmatmul.mubr.bf16.gmra.mxu0 %v2745
    %v2781 = vpop.f32.mrf.mxu0
    %v2782 = vadd.f32 0.0, %v2781
    %v2783 = vpop.f32.mrf.mxu0
    %v2784 = vpop.f32.mrf.mxu0
    %v2785 = vadd.f32 0.0, %v2784
    %v2786 = vpop.f32.mrf.mxu0
    %2787 = vdwg.mxu0
    %2788 = vrot.lane.b32.xlu0 %v2134, 112
    %v2789 = vpop.permute.xlu0 %2788
    %v2792 = vsel %vm683, %v2734, 0
    %2794 = vmatprep.subr.bf16.mxu0 0
    %2795 = vmatpush1.bf16.msra.mxu0 0
    %2796 = vmatprep.subr.bf16.mxu0 0
    %2797 = vmatpush1.bf16.msra.mxu0 0
    %2798 = vmatprep.subr.bf16.mxu0 0
    %2799 = vmatpush1.bf16.msra.mxu0 0
    %2800 = vmatprep.subr.bf16.mxu0 0
    %2801 = vmatpush1.bf16.msra.mxu0 0
    %2802 = vmatprep.subr.bf16.mxu0 0
    %2803 = vmatpush1.bf16.msra.mxu0 0
    %2804 = vmatprep.subr.bf16.mxu0 0
    %2805 = vmatpush1.bf16.msra.mxu0 0
    %2806 = vmatprep.subr.bf16.mxu0 0
    %2807 = vmatpush1.bf16.msra.mxu0 0
    %2808 = vmatprep.subr.bf16.mxu0 0
    %2809 = vmatpush1.bf16.msra.mxu0 %v2789
    %2810 = vmatprep.subr.bf16.mxu0 0
    %2811 = vmatpush2.bf16.msra.mxu0 0
    %2812 = vmatprep.subr.bf16.mxu0 0
    %2813 = vmatpush2.bf16.msra.mxu0 0
    %2814 = vmatprep.subr.bf16.mxu0 0
    %2815 = vmatpush2.bf16.msra.mxu0 0
    %2816 = vmatprep.subr.bf16.mxu0 0
    %2817 = vmatpush2.bf16.msra.mxu0 0
    %2818 = vmatprep.subr.bf16.mxu0 0
    %2819 = vmatpush2.bf16.msra.mxu0 0
    %2820 = vmatprep.subr.bf16.mxu0 0
    %2821 = vmatpush2.bf16.msra.mxu0 0
    %2822 = vmatprep.subr.bf16.mxu0 0
    %2823 = vmatpush2.bf16.msra.mxu0 0
    %2824 = vmatprep.subr.bf16.mxu0 0
    %2825 = vmatpush2.bf16.msra.mxu0 0
    %2826 = vmatprep.mubr.bf16.mxu0 0
    %2827 = vmatmul.mubr.bf16.gmra.mxu0 %v2792
    %v2828 = vpop.f32.mrf.mxu0
    %v2829 = vadd.f32 0.0, %v2828
    %v2830 = vpop.f32.mrf.mxu0
    %v2831 = vpop.f32.mrf.mxu0
    %v2832 = vadd.f32 0.0, %v2831
    %v2833 = vpop.f32.mrf.mxu0
    %2834 = vdwg.mxu0
    %2835 = vrot.lane.b32.xlu0 %v2135, 112
    %v2836 = vpop.permute.xlu0 %2835
    %v2839 = vsel %vm683, %v2735, 0
    %2841 = vmatprep.subr.bf16.mxu0 0
    %2842 = vmatpush1.bf16.msra.mxu0 0
    %2843 = vmatprep.subr.bf16.mxu0 0
    %2844 = vmatpush1.bf16.msra.mxu0 0
    %2845 = vmatprep.subr.bf16.mxu0 0
    %2846 = vmatpush1.bf16.msra.mxu0 0
    %2847 = vmatprep.subr.bf16.mxu0 0
    %2848 = vmatpush1.bf16.msra.mxu0 0
    %2849 = vmatprep.subr.bf16.mxu0 0
    %2850 = vmatpush1.bf16.msra.mxu0 0
    %2851 = vmatprep.subr.bf16.mxu0 0
    %2852 = vmatpush1.bf16.msra.mxu0 0
    %2853 = vmatprep.subr.bf16.mxu0 0
    %2854 = vmatpush1.bf16.msra.mxu0 0
    %2855 = vmatprep.subr.bf16.mxu0 0
    %2856 = vmatpush1.bf16.msra.mxu0 %v2836
    %2857 = vmatprep.subr.bf16.mxu0 0
    %2858 = vmatpush2.bf16.msra.mxu0 0
    %2859 = vmatprep.subr.bf16.mxu0 0
    %2860 = vmatpush2.bf16.msra.mxu0 0
    %2861 = vmatprep.subr.bf16.mxu0 0
    %2862 = vmatpush2.bf16.msra.mxu0 0
    %2863 = vmatprep.subr.bf16.mxu0 0
    %2864 = vmatpush2.bf16.msra.mxu0 0
    %2865 = vmatprep.subr.bf16.mxu0 0
    %2866 = vmatpush2.bf16.msra.mxu0 0
    %2867 = vmatprep.subr.bf16.mxu0 0
    %2868 = vmatpush2.bf16.msra.mxu0 0
    %2869 = vmatprep.subr.bf16.mxu0 0
    %2870 = vmatpush2.bf16.msra.mxu0 0
    %2871 = vmatprep.subr.bf16.mxu0 0
    %2872 = vmatpush2.bf16.msra.mxu0 0
    %2873 = vmatprep.mubr.bf16.mxu0 0
    %2874 = vmatmul.mubr.bf16.gmra.mxu0 %v2839
    %v2875 = vpop.f32.mrf.mxu0
    %v2876 = vadd.f32 0.0, %v2875
    %v2877 = vpop.f32.mrf.mxu0
    %v2878 = vpop.f32.mrf.mxu0
    %v2879 = vadd.f32 0.0, %v2878
    %v2880 = vpop.f32.mrf.mxu0
    %2881 = vdwg.mxu0
    %2882 = vrot.lane.b32.xlu0 %v2136, 112
    %v2883 = vpop.permute.xlu0 %2882
    %v2886 = vsel %vm683, %v2736, 0
    %2888 = vmatprep.subr.bf16.mxu0 0
    %2889 = vmatpush1.bf16.msra.mxu0 0
    %2890 = vmatprep.subr.bf16.mxu0 0
    %2891 = vmatpush1.bf16.msra.mxu0 0
    %2892 = vmatprep.subr.bf16.mxu0 0
    %2893 = vmatpush1.bf16.msra.mxu0 0
    %2894 = vmatprep.subr.bf16.mxu0 0
    %2895 = vmatpush1.bf16.msra.mxu0 0
    %2896 = vmatprep.subr.bf16.mxu0 0
    %2897 = vmatpush1.bf16.msra.mxu0 0
    %2898 = vmatprep.subr.bf16.mxu0 0
    %2899 = vmatpush1.bf16.msra.mxu0 0
    %2900 = vmatprep.subr.bf16.mxu0 0
    %2901 = vmatpush1.bf16.msra.mxu0 0
    %2902 = vmatprep.subr.bf16.mxu0 0
    %2903 = vmatpush1.bf16.msra.mxu0 %v2883
    %2904 = vmatprep.subr.bf16.mxu0 0
    %2905 = vmatpush2.bf16.msra.mxu0 0
    %2906 = vmatprep.subr.bf16.mxu0 0
    %2907 = vmatpush2.bf16.msra.mxu0 0
    %2908 = vmatprep.subr.bf16.mxu0 0
    %2909 = vmatpush2.bf16.msra.mxu0 0
    %2910 = vmatprep.subr.bf16.mxu0 0
    %2911 = vmatpush2.bf16.msra.mxu0 0
    %2912 = vmatprep.subr.bf16.mxu0 0
    %2913 = vmatpush2.bf16.msra.mxu0 0
    %2914 = vmatprep.subr.bf16.mxu0 0
    %2915 = vmatpush2.bf16.msra.mxu0 0
    %2916 = vmatprep.subr.bf16.mxu0 0
    %2917 = vmatpush2.bf16.msra.mxu0 0
    %2918 = vmatprep.subr.bf16.mxu0 0
    %2919 = vmatpush2.bf16.msra.mxu0 0
    %2920 = vmatprep.mubr.bf16.mxu0 0
    %2921 = vmatmul.mubr.bf16.gmra.mxu0 %v2886
    %v2922 = vpop.f32.mrf.mxu0
    %v2923 = vadd.f32 0.0, %v2922
    %v2924 = vpop.f32.mrf.mxu0
    %v2925 = vpop.f32.mrf.mxu0
    %v2926 = vadd.f32 0.0, %v2925
    %v2927 = vpop.f32.mrf.mxu0
    %2928 = vdwg.mxu0
    %2929 = vrot.lane.b32.xlu0 %v2137, 112
    %v2930 = vpop.permute.xlu0 %2929
    %v2933 = vsel %vm683, %v2737, 0
    %2935 = vmatprep.subr.bf16.mxu0 0
    %2936 = vmatpush1.bf16.msra.mxu0 0
    %2937 = vmatprep.subr.bf16.mxu0 0
    %2938 = vmatpush1.bf16.msra.mxu0 0
    %2939 = vmatprep.subr.bf16.mxu0 0
    %2940 = vmatpush1.bf16.msra.mxu0 0
    %2941 = vmatprep.subr.bf16.mxu0 0
    %2942 = vmatpush1.bf16.msra.mxu0 0
    %2943 = vmatprep.subr.bf16.mxu0 0
    %2944 = vmatpush1.bf16.msra.mxu0 0
    %2945 = vmatprep.subr.bf16.mxu0 0
    %2946 = vmatpush1.bf16.msra.mxu0 0
    %2947 = vmatprep.subr.bf16.mxu0 0
    %2948 = vmatpush1.bf16.msra.mxu0 0
    %2949 = vmatprep.subr.bf16.mxu0 0
    %2950 = vmatpush1.bf16.msra.mxu0 %v2930
    %2951 = vmatprep.subr.bf16.mxu0 0
    %2952 = vmatpush2.bf16.msra.mxu0 0
    %2953 = vmatprep.subr.bf16.mxu0 0
    %2954 = vmatpush2.bf16.msra.mxu0 0
    %2955 = vmatprep.subr.bf16.mxu0 0
    %2956 = vmatpush2.bf16.msra.mxu0 0
    %2957 = vmatprep.subr.bf16.mxu0 0
    %2958 = vmatpush2.bf16.msra.mxu0 0
    %2959 = vmatprep.subr.bf16.mxu0 0
    %2960 = vmatpush2.bf16.msra.mxu0 0
    %2961 = vmatprep.subr.bf16.mxu0 0
    %2962 = vmatpush2.bf16.msra.mxu0 0
    %2963 = vmatprep.subr.bf16.mxu0 0
    %2964 = vmatpush2.bf16.msra.mxu0 0
    %2965 = vmatprep.subr.bf16.mxu0 0
    %2966 = vmatpush2.bf16.msra.mxu0 0
    %2967 = vmatprep.mubr.bf16.mxu0 0
    %2968 = vmatmul.mubr.bf16.gmra.mxu0 %v2933
    %v2969 = vpop.f32.mrf.mxu0
    %v2970 = vadd.f32 0.0, %v2969
    %v2971 = vpop.f32.mrf.mxu0
    %v2972 = vpop.f32.mrf.mxu0
    %v2973 = vadd.f32 0.0, %v2972
    %v2974 = vpop.f32.mrf.mxu0
    %2975 = vdwg.mxu0
    %2976 = vrot.lane.b32.xlu0 %v2138, 112
    %v2977 = vpop.permute.xlu0 %2976
    %v2980 = vsel %vm683, %v2738, 0
    %2982 = vmatprep.subr.bf16.mxu0 0
    %2983 = vmatpush1.bf16.msra.mxu0 0
    %2984 = vmatprep.subr.bf16.mxu0 0
    %2985 = vmatpush1.bf16.msra.mxu0 0
    %2986 = vmatprep.subr.bf16.mxu0 0
    %2987 = vmatpush1.bf16.msra.mxu0 0
    %2988 = vmatprep.subr.bf16.mxu0 0
    %2989 = vmatpush1.bf16.msra.mxu0 0
    %2990 = vmatprep.subr.bf16.mxu0 0
    %2991 = vmatpush1.bf16.msra.mxu0 0
    %2992 = vmatprep.subr.bf16.mxu0 0
    %2993 = vmatpush1.bf16.msra.mxu0 0
    %2994 = vmatprep.subr.bf16.mxu0 0
    %2995 = vmatpush1.bf16.msra.mxu0 0
    %2996 = vmatprep.subr.bf16.mxu0 0
    %2997 = vmatpush1.bf16.msra.mxu0 %v2977
    %2998 = vmatprep.subr.bf16.mxu0 0
    %2999 = vmatpush2.bf16.msra.mxu0 0
    %3000 = vmatprep.subr.bf16.mxu0 0
    %3001 = vmatpush2.bf16.msra.mxu0 0
    %3002 = vmatprep.subr.bf16.mxu0 0
    %3003 = vmatpush2.bf16.msra.mxu0 0
    %3004 = vmatprep.subr.bf16.mxu0 0
    %3005 = vmatpush2.bf16.msra.mxu0 0
    %3006 = vmatprep.subr.bf16.mxu0 0
    %3007 = vmatpush2.bf16.msra.mxu0 0
    %3008 = vmatprep.subr.bf16.mxu0 0
    %3009 = vmatpush2.bf16.msra.mxu0 0
    %3010 = vmatprep.subr.bf16.mxu0 0
    %3011 = vmatpush2.bf16.msra.mxu0 0
    %3012 = vmatprep.subr.bf16.mxu0 0
    %3013 = vmatpush2.bf16.msra.mxu0 0
    %3014 = vmatprep.mubr.bf16.mxu0 0
    %3015 = vmatmul.mubr.bf16.gmra.mxu0 %v2980
    %v3016 = vpop.f32.mrf.mxu0
    %v3017 = vadd.f32 0.0, %v3016
    %v3018 = vpop.f32.mrf.mxu0
    %v3019 = vpop.f32.mrf.mxu0
    %v3020 = vadd.f32 0.0, %v3019
    %v3021 = vpop.f32.mrf.mxu0
    %3022 = vdwg.mxu0
    %3023 = vrot.lane.b32.xlu0 %v2139, 112
    %v3024 = vpop.permute.xlu0 %3023
    %v3027 = vsel %vm683, %v2739, 0
    %3029 = vmatprep.subr.bf16.mxu0 0
    %3030 = vmatpush1.bf16.msra.mxu0 0
    %3031 = vmatprep.subr.bf16.mxu0 0
    %3032 = vmatpush1.bf16.msra.mxu0 0
    %3033 = vmatprep.subr.bf16.mxu0 0
    %3034 = vmatpush1.bf16.msra.mxu0 0
    %3035 = vmatprep.subr.bf16.mxu0 0
    %3036 = vmatpush1.bf16.msra.mxu0 0
    %3037 = vmatprep.subr.bf16.mxu0 0
    %3038 = vmatpush1.bf16.msra.mxu0 0
    %3039 = vmatprep.subr.bf16.mxu0 0
    %3040 = vmatpush1.bf16.msra.mxu0 0
    %3041 = vmatprep.subr.bf16.mxu0 0
    %3042 = vmatpush1.bf16.msra.mxu0 0
    %3043 = vmatprep.subr.bf16.mxu0 0
    %3044 = vmatpush1.bf16.msra.mxu0 %v3024
    %3045 = vmatprep.subr.bf16.mxu0 0
    %3046 = vmatpush2.bf16.msra.mxu0 0
    %3047 = vmatprep.subr.bf16.mxu0 0
    %3048 = vmatpush2.bf16.msra.mxu0 0
    %3049 = vmatprep.subr.bf16.mxu0 0
    %3050 = vmatpush2.bf16.msra.mxu0 0
    %3051 = vmatprep.subr.bf16.mxu0 0
    %3052 = vmatpush2.bf16.msra.mxu0 0
    %3053 = vmatprep.subr.bf16.mxu0 0
    %3054 = vmatpush2.bf16.msra.mxu0 0
    %3055 = vmatprep.subr.bf16.mxu0 0
    %3056 = vmatpush2.bf16.msra.mxu0 0
    %3057 = vmatprep.subr.bf16.mxu0 0
    %3058 = vmatpush2.bf16.msra.mxu0 0
    %3059 = vmatprep.subr.bf16.mxu0 0
    %3060 = vmatpush2.bf16.msra.mxu0 0
    %3061 = vmatprep.mubr.bf16.mxu0 0
    %3062 = vmatmul.mubr.bf16.gmra.mxu0 %v3027
    %v3063 = vpop.f32.mrf.mxu0
    %v3064 = vadd.f32 0.0, %v3063
    %v3065 = vpop.f32.mrf.mxu0
    %v3066 = vpop.f32.mrf.mxu0
    %v3067 = vadd.f32 0.0, %v3066
    %v3068 = vpop.f32.mrf.mxu0
    %3069 = vdwg.mxu0
    %3070 = vrot.lane.b32.xlu0 %v2140, 112
    %v3071 = vpop.permute.xlu0 %3070
    %v3074 = vsel %vm683, %v2740, 0
    %3076 = vmatprep.subr.bf16.mxu0 0
    %3077 = vmatpush1.bf16.msra.mxu0 0
    %3078 = vmatprep.subr.bf16.mxu0 0
    %3079 = vmatpush1.bf16.msra.mxu0 0
    %3080 = vmatprep.subr.bf16.mxu0 0
    %3081 = vmatpush1.bf16.msra.mxu0 0
    %3082 = vmatprep.subr.bf16.mxu0 0
    %3083 = vmatpush1.bf16.msra.mxu0 0
    %3084 = vmatprep.subr.bf16.mxu0 0
    %3085 = vmatpush1.bf16.msra.mxu0 0
    %3086 = vmatprep.subr.bf16.mxu0 0
    %3087 = vmatpush1.bf16.msra.mxu0 0
    %3088 = vmatprep.subr.bf16.mxu0 0
    %3089 = vmatpush1.bf16.msra.mxu0 0
    %3090 = vmatprep.subr.bf16.mxu0 0
    %3091 = vmatpush1.bf16.msra.mxu0 %v3071
    %3092 = vmatprep.subr.bf16.mxu0 0
    %3093 = vmatpush2.bf16.msra.mxu0 0
    %3094 = vmatprep.subr.bf16.mxu0 0
    %3095 = vmatpush2.bf16.msra.mxu0 0
    %3096 = vmatprep.subr.bf16.mxu0 0
    %3097 = vmatpush2.bf16.msra.mxu0 0
    %3098 = vmatprep.subr.bf16.mxu0 0
    %3099 = vmatpush2.bf16.msra.mxu0 0
    %3100 = vmatprep.subr.bf16.mxu0 0
    %3101 = vmatpush2.bf16.msra.mxu0 0
    %3102 = vmatprep.subr.bf16.mxu0 0
    %3103 = vmatpush2.bf16.msra.mxu0 0
    %3104 = vmatprep.subr.bf16.mxu0 0
    %3105 = vmatpush2.bf16.msra.mxu0 0
    %3106 = vmatprep.subr.bf16.mxu0 0
    %3107 = vmatpush2.bf16.msra.mxu0 0
    %3108 = vmatprep.mubr.bf16.mxu0 0
    %3109 = vmatmul.mubr.bf16.gmra.mxu0 %v3074
    %v3110 = vpop.f32.mrf.mxu0
    %v3111 = vadd.f32 0.0, %v3110
    %v3112 = vpop.f32.mrf.mxu0
    %v3113 = vpop.f32.mrf.mxu0
    %v3114 = vadd.f32 0.0, %v3113
    %v3115 = vpop.f32.mrf.mxu0
    %3116 = vdwg.mxu0
    %v3117 = vpack.c.bf16 %v2785, %v2782
    %v3118 = vpack.c.bf16 %v2832, %v2829
    %v3119 = vpack.c.bf16 %v2879, %v2876
    %v3120 = vpack.c.bf16 %v2926, %v2923
    %v3121 = vpack.c.bf16 %v2973, %v2970
    %v3122 = vpack.c.bf16 %v3020, %v3017
    %v3123 = vpack.c.bf16 %v3067, %v3064
    %v3124 = vpack.c.bf16 %v3114, %v3111
    %s3125 = scalar_lea.vmem %s2, 32
    %v3126 = vld [vmem:[%s3125] sm:$0xf]
    %v3127 = vld [vmem:[%s3125 + $0x4] sm:$0xf]
    %v3128 = vld [vmem:[%s3125 + $0x8] sm:$0xf]
    %v3129 = vld [vmem:[%s3125 + $0xc] sm:$0xf]
    %v3130 = vld [vmem:[%s3125 + $0x10] sm:$0xf]
    %v3131 = vld [vmem:[%s3125 + $0x14] sm:$0xf]
    %v3132 = vld [vmem:[%s3125 + $0x18] sm:$0xf]
    %v3133 = vld [vmem:[%s3125 + $0x1c] sm:$0xf]
    %v3135 = vsel %vm269, %v3117, 0
    %v3138 = vsel %vm1263, %v3126, 0
    %3140 = vmatprep.subr.bf16.mxu0 0
    %3141 = vmatpush1.bf16.msra.mxu0 0
    %3142 = vmatprep.subr.bf16.mxu0 0
    %3143 = vmatpush1.bf16.msra.mxu0 0
    %3144 = vmatprep.subr.bf16.mxu0 0
    %3145 = vmatpush1.bf16.msra.mxu0 0
    %3146 = vmatprep.subr.bf16.mxu0 0
    %3147 = vmatpush1.bf16.msra.mxu0 0
    %3148 = vmatprep.subr.bf16.mxu0 0
    %3149 = vmatpush1.bf16.msra.mxu0 0
    %3150 = vmatprep.subr.bf16.mxu0 0
    %3151 = vmatpush1.bf16.msra.mxu0 0
    %3152 = vmatprep.subr.bf16.mxu0 0
    %3153 = vmatpush1.bf16.msra.mxu0 0
    %3154 = vmatprep.subr.bf16.mxu0 0
    %3155 = vmatpush1.bf16.msra.mxu0 %v3138
    %3156 = vmatprep.subr.bf16.mxu0 0
    %3157 = vmatpush2.bf16.msra.mxu0 0
    %3158 = vmatprep.subr.bf16.mxu0 0
    %3159 = vmatpush2.bf16.msra.mxu0 0
    %3160 = vmatprep.subr.bf16.mxu0 0
    %3161 = vmatpush2.bf16.msra.mxu0 0
    %3162 = vmatprep.subr.bf16.mxu0 0
    %3163 = vmatpush2.bf16.msra.mxu0 0
    %3164 = vmatprep.subr.bf16.mxu0 0
    %3165 = vmatpush2.bf16.msra.mxu0 0
    %3166 = vmatprep.subr.bf16.mxu0 0
    %3167 = vmatpush2.bf16.msra.mxu0 0
    %3168 = vmatprep.subr.bf16.mxu0 0
    %3169 = vmatpush2.bf16.msra.mxu0 0
    %3170 = vmatprep.subr.bf16.mxu0 0
    %3171 = vmatpush2.bf16.msra.mxu0 0
    %3172 = vmatprep.mubr.bf16.mxu0 0
    %3173 = vmatmul.mubr.bf16.gmra.mxu0 %v3135
    %v3174 = vpop.f32.mrf.mxu0
    %v3175 = vadd.f32 0.0, %v3174
    %v3176 = vpop.f32.mrf.mxu0
    %v3177 = vpop.f32.mrf.mxu0
    %v3178 = vadd.f32 0.0, %v3177
    %v3179 = vpop.f32.mrf.mxu0
    %3180 = vdwg.mxu0
    %v3182 = vsel %vm269, %v3118, 0
    %v3185 = vsel %vm1263, %v3127, 0
    %3187 = vmatprep.subr.bf16.mxu0 0
    %3188 = vmatpush1.bf16.msra.mxu0 0
    %3189 = vmatprep.subr.bf16.mxu0 0
    %3190 = vmatpush1.bf16.msra.mxu0 0
    %3191 = vmatprep.subr.bf16.mxu0 0
    %3192 = vmatpush1.bf16.msra.mxu0 0
    %3193 = vmatprep.subr.bf16.mxu0 0
    %3194 = vmatpush1.bf16.msra.mxu0 0
    %3195 = vmatprep.subr.bf16.mxu0 0
    %3196 = vmatpush1.bf16.msra.mxu0 0
    %3197 = vmatprep.subr.bf16.mxu0 0
    %3198 = vmatpush1.bf16.msra.mxu0 0
    %3199 = vmatprep.subr.bf16.mxu0 0
    %3200 = vmatpush1.bf16.msra.mxu0 0
    %3201 = vmatprep.subr.bf16.mxu0 0
    %3202 = vmatpush1.bf16.msra.mxu0 %v3185
    %3203 = vmatprep.subr.bf16.mxu0 0
    %3204 = vmatpush2.bf16.msra.mxu0 0
    %3205 = vmatprep.subr.bf16.mxu0 0
    %3206 = vmatpush2.bf16.msra.mxu0 0
    %3207 = vmatprep.subr.bf16.mxu0 0
    %3208 = vmatpush2.bf16.msra.mxu0 0
    %3209 = vmatprep.subr.bf16.mxu0 0
    %3210 = vmatpush2.bf16.msra.mxu0 0
    %3211 = vmatprep.subr.bf16.mxu0 0
    %3212 = vmatpush2.bf16.msra.mxu0 0
    %3213 = vmatprep.subr.bf16.mxu0 0
    %3214 = vmatpush2.bf16.msra.mxu0 0
    %3215 = vmatprep.subr.bf16.mxu0 0
    %3216 = vmatpush2.bf16.msra.mxu0 0
    %3217 = vmatprep.subr.bf16.mxu0 0
    %3218 = vmatpush2.bf16.msra.mxu0 0
    %3219 = vmatprep.mubr.bf16.mxu0 0
    %3220 = vmatmul.mubr.bf16.gmra.mxu0 %v3182
    %v3221 = vpop.f32.mrf.mxu0
    %v3222 = vadd.f32 0.0, %v3221
    %v3223 = vpop.f32.mrf.mxu0
    %v3224 = vpop.f32.mrf.mxu0
    %v3225 = vadd.f32 0.0, %v3224
    %v3226 = vpop.f32.mrf.mxu0
    %3227 = vdwg.mxu0
    %v3229 = vsel %vm269, %v3119, 0
    %v3232 = vsel %vm1263, %v3128, 0
    %3234 = vmatprep.subr.bf16.mxu0 0
    %3235 = vmatpush1.bf16.msra.mxu0 0
    %3236 = vmatprep.subr.bf16.mxu0 0
    %3237 = vmatpush1.bf16.msra.mxu0 0
    %3238 = vmatprep.subr.bf16.mxu0 0
    %3239 = vmatpush1.bf16.msra.mxu0 0
    %3240 = vmatprep.subr.bf16.mxu0 0
    %3241 = vmatpush1.bf16.msra.mxu0 0
    %3242 = vmatprep.subr.bf16.mxu0 0
    %3243 = vmatpush1.bf16.msra.mxu0 0
    %3244 = vmatprep.subr.bf16.mxu0 0
    %3245 = vmatpush1.bf16.msra.mxu0 0
    %3246 = vmatprep.subr.bf16.mxu0 0
    %3247 = vmatpush1.bf16.msra.mxu0 0
    %3248 = vmatprep.subr.bf16.mxu0 0
    %3249 = vmatpush1.bf16.msra.mxu0 %v3232
    %3250 = vmatprep.subr.bf16.mxu0 0
    %3251 = vmatpush2.bf16.msra.mxu0 0
    %3252 = vmatprep.subr.bf16.mxu0 0
    %3253 = vmatpush2.bf16.msra.mxu0 0
    %3254 = vmatprep.subr.bf16.mxu0 0
    %3255 = vmatpush2.bf16.msra.mxu0 0
    %3256 = vmatprep.subr.bf16.mxu0 0
    %3257 = vmatpush2.bf16.msra.mxu0 0
    %3258 = vmatprep.subr.bf16.mxu0 0
    %3259 = vmatpush2.bf16.msra.mxu0 0
    %3260 = vmatprep.subr.bf16.mxu0 0
    %3261 = vmatpush2.bf16.msra.mxu0 0
    %3262 = vmatprep.subr.bf16.mxu0 0
    %3263 = vmatpush2.bf16.msra.mxu0 0
    %3264 = vmatprep.subr.bf16.mxu0 0
    %3265 = vmatpush2.bf16.msra.mxu0 0
    %3266 = vmatprep.mubr.bf16.mxu0 0
    %3267 = vmatmul.mubr.bf16.gmra.mxu0 %v3229
    %v3268 = vpop.f32.mrf.mxu0
    %v3269 = vadd.f32 0.0, %v3268
    %v3270 = vpop.f32.mrf.mxu0
    %v3271 = vpop.f32.mrf.mxu0
    %v3272 = vadd.f32 0.0, %v3271
    %v3273 = vpop.f32.mrf.mxu0
    %3274 = vdwg.mxu0
    %v3276 = vsel %vm269, %v3120, 0
    %v3279 = vsel %vm1263, %v3129, 0
    %3281 = vmatprep.subr.bf16.mxu0 0
    %3282 = vmatpush1.bf16.msra.mxu0 0
    %3283 = vmatprep.subr.bf16.mxu0 0
    %3284 = vmatpush1.bf16.msra.mxu0 0
    %3285 = vmatprep.subr.bf16.mxu0 0
    %3286 = vmatpush1.bf16.msra.mxu0 0
    %3287 = vmatprep.subr.bf16.mxu0 0
    %3288 = vmatpush1.bf16.msra.mxu0 0
    %3289 = vmatprep.subr.bf16.mxu0 0
    %3290 = vmatpush1.bf16.msra.mxu0 0
    %3291 = vmatprep.subr.bf16.mxu0 0
    %3292 = vmatpush1.bf16.msra.mxu0 0
    %3293 = vmatprep.subr.bf16.mxu0 0
    %3294 = vmatpush1.bf16.msra.mxu0 0
    %3295 = vmatprep.subr.bf16.mxu0 0
    %3296 = vmatpush1.bf16.msra.mxu0 %v3279
    %3297 = vmatprep.subr.bf16.mxu0 0
    %3298 = vmatpush2.bf16.msra.mxu0 0
    %3299 = vmatprep.subr.bf16.mxu0 0
    %3300 = vmatpush2.bf16.msra.mxu0 0
    %3301 = vmatprep.subr.bf16.mxu0 0
    %3302 = vmatpush2.bf16.msra.mxu0 0
    %3303 = vmatprep.subr.bf16.mxu0 0
    %3304 = vmatpush2.bf16.msra.mxu0 0
    %3305 = vmatprep.subr.bf16.mxu0 0
    %3306 = vmatpush2.bf16.msra.mxu0 0
    %3307 = vmatprep.subr.bf16.mxu0 0
    %3308 = vmatpush2.bf16.msra.mxu0 0
    %3309 = vmatprep.subr.bf16.mxu0 0
    %3310 = vmatpush2.bf16.msra.mxu0 0
    %3311 = vmatprep.subr.bf16.mxu0 0
    %3312 = vmatpush2.bf16.msra.mxu0 0
    %3313 = vmatprep.mubr.bf16.mxu0 0
    %3314 = vmatmul.mubr.bf16.gmra.mxu0 %v3276
    %v3315 = vpop.f32.mrf.mxu0
    %v3316 = vadd.f32 0.0, %v3315
    %v3317 = vpop.f32.mrf.mxu0
    %v3318 = vpop.f32.mrf.mxu0
    %v3319 = vadd.f32 0.0, %v3318
    %v3320 = vpop.f32.mrf.mxu0
    %3321 = vdwg.mxu0
    %v3323 = vsel %vm269, %v3121, 0
    %v3326 = vsel %vm1263, %v3130, 0
    %3328 = vmatprep.subr.bf16.mxu0 0
    %3329 = vmatpush1.bf16.msra.mxu0 0
    %3330 = vmatprep.subr.bf16.mxu0 0
    %3331 = vmatpush1.bf16.msra.mxu0 0
    %3332 = vmatprep.subr.bf16.mxu0 0
    %3333 = vmatpush1.bf16.msra.mxu0 0
    %3334 = vmatprep.subr.bf16.mxu0 0
    %3335 = vmatpush1.bf16.msra.mxu0 0
    %3336 = vmatprep.subr.bf16.mxu0 0
    %3337 = vmatpush1.bf16.msra.mxu0 0
    %3338 = vmatprep.subr.bf16.mxu0 0
    %3339 = vmatpush1.bf16.msra.mxu0 0
    %3340 = vmatprep.subr.bf16.mxu0 0
    %3341 = vmatpush1.bf16.msra.mxu0 0
    %3342 = vmatprep.subr.bf16.mxu0 0
    %3343 = vmatpush1.bf16.msra.mxu0 %v3326
    %3344 = vmatprep.subr.bf16.mxu0 0
    %3345 = vmatpush2.bf16.msra.mxu0 0
    %3346 = vmatprep.subr.bf16.mxu0 0
    %3347 = vmatpush2.bf16.msra.mxu0 0
    %3348 = vmatprep.subr.bf16.mxu0 0
    %3349 = vmatpush2.bf16.msra.mxu0 0
    %3350 = vmatprep.subr.bf16.mxu0 0
    %3351 = vmatpush2.bf16.msra.mxu0 0
    %3352 = vmatprep.subr.bf16.mxu0 0
    %3353 = vmatpush2.bf16.msra.mxu0 0
    %3354 = vmatprep.subr.bf16.mxu0 0
    %3355 = vmatpush2.bf16.msra.mxu0 0
    %3356 = vmatprep.subr.bf16.mxu0 0
    %3357 = vmatpush2.bf16.msra.mxu0 0
    %3358 = vmatprep.subr.bf16.mxu0 0
    %3359 = vmatpush2.bf16.msra.mxu0 0
    %3360 = vmatprep.mubr.bf16.mxu0 0
    %3361 = vmatmul.mubr.bf16.gmra.mxu0 %v3323
    %v3362 = vpop.f32.mrf.mxu0
    %v3363 = vadd.f32 0.0, %v3362
    %v3364 = vpop.f32.mrf.mxu0
    %v3365 = vpop.f32.mrf.mxu0
    %v3366 = vadd.f32 0.0, %v3365
    %v3367 = vpop.f32.mrf.mxu0
    %3368 = vdwg.mxu0
    %v3370 = vsel %vm269, %v3122, 0
    %v3373 = vsel %vm1263, %v3131, 0
    %3375 = vmatprep.subr.bf16.mxu0 0
    %3376 = vmatpush1.bf16.msra.mxu0 0
    %3377 = vmatprep.subr.bf16.mxu0 0
    %3378 = vmatpush1.bf16.msra.mxu0 0
    %3379 = vmatprep.subr.bf16.mxu0 0
    %3380 = vmatpush1.bf16.msra.mxu0 0
    %3381 = vmatprep.subr.bf16.mxu0 0
    %3382 = vmatpush1.bf16.msra.mxu0 0
    %3383 = vmatprep.subr.bf16.mxu0 0
    %3384 = vmatpush1.bf16.msra.mxu0 0
    %3385 = vmatprep.subr.bf16.mxu0 0
    %3386 = vmatpush1.bf16.msra.mxu0 0
    %3387 = vmatprep.subr.bf16.mxu0 0
    %3388 = vmatpush1.bf16.msra.mxu0 0
    %3389 = vmatprep.subr.bf16.mxu0 0
    %3390 = vmatpush1.bf16.msra.mxu0 %v3373
    %3391 = vmatprep.subr.bf16.mxu0 0
    %3392 = vmatpush2.bf16.msra.mxu0 0
    %3393 = vmatprep.subr.bf16.mxu0 0
    %3394 = vmatpush2.bf16.msra.mxu0 0
    %3395 = vmatprep.subr.bf16.mxu0 0
    %3396 = vmatpush2.bf16.msra.mxu0 0
    %3397 = vmatprep.subr.bf16.mxu0 0
    %3398 = vmatpush2.bf16.msra.mxu0 0
    %3399 = vmatprep.subr.bf16.mxu0 0
    %3400 = vmatpush2.bf16.msra.mxu0 0
    %3401 = vmatprep.subr.bf16.mxu0 0
    %3402 = vmatpush2.bf16.msra.mxu0 0
    %3403 = vmatprep.subr.bf16.mxu0 0
    %3404 = vmatpush2.bf16.msra.mxu0 0
    %3405 = vmatprep.subr.bf16.mxu0 0
    %3406 = vmatpush2.bf16.msra.mxu0 0
    %3407 = vmatprep.mubr.bf16.mxu0 0
    %3408 = vmatmul.mubr.bf16.gmra.mxu0 %v3370
    %v3409 = vpop.f32.mrf.mxu0
    %v3410 = vadd.f32 0.0, %v3409
    %v3411 = vpop.f32.mrf.mxu0
    %v3412 = vpop.f32.mrf.mxu0
    %v3413 = vadd.f32 0.0, %v3412
    %v3414 = vpop.f32.mrf.mxu0
    %3415 = vdwg.mxu0
    %v3417 = vsel %vm269, %v3123, 0
    %v3420 = vsel %vm1263, %v3132, 0
    %3422 = vmatprep.subr.bf16.mxu0 0
    %3423 = vmatpush1.bf16.msra.mxu0 0
    %3424 = vmatprep.subr.bf16.mxu0 0
    %3425 = vmatpush1.bf16.msra.mxu0 0
    %3426 = vmatprep.subr.bf16.mxu0 0
    %3427 = vmatpush1.bf16.msra.mxu0 0
    %3428 = vmatprep.subr.bf16.mxu0 0
    %3429 = vmatpush1.bf16.msra.mxu0 0
    %3430 = vmatprep.subr.bf16.mxu0 0
    %3431 = vmatpush1.bf16.msra.mxu0 0
    %3432 = vmatprep.subr.bf16.mxu0 0
    %3433 = vmatpush1.bf16.msra.mxu0 0
    %3434 = vmatprep.subr.bf16.mxu0 0
    %3435 = vmatpush1.bf16.msra.mxu0 0
    %3436 = vmatprep.subr.bf16.mxu0 0
    %3437 = vmatpush1.bf16.msra.mxu0 %v3420
    %3438 = vmatprep.subr.bf16.mxu0 0
    %3439 = vmatpush2.bf16.msra.mxu0 0
    %3440 = vmatprep.subr.bf16.mxu0 0
    %3441 = vmatpush2.bf16.msra.mxu0 0
    %3442 = vmatprep.subr.bf16.mxu0 0
    %3443 = vmatpush2.bf16.msra.mxu0 0
    %3444 = vmatprep.subr.bf16.mxu0 0
    %3445 = vmatpush2.bf16.msra.mxu0 0
    %3446 = vmatprep.subr.bf16.mxu0 0
    %3447 = vmatpush2.bf16.msra.mxu0 0
    %3448 = vmatprep.subr.bf16.mxu0 0
    %3449 = vmatpush2.bf16.msra.mxu0 0
    %3450 = vmatprep.subr.bf16.mxu0 0
    %3451 = vmatpush2.bf16.msra.mxu0 0
    %3452 = vmatprep.subr.bf16.mxu0 0
    %3453 = vmatpush2.bf16.msra.mxu0 0
    %3454 = vmatprep.mubr.bf16.mxu0 0
    %3455 = vmatmul.mubr.bf16.gmra.mxu0 %v3417
    %v3456 = vpop.f32.mrf.mxu0
    %v3457 = vadd.f32 0.0, %v3456
    %v3458 = vpop.f32.mrf.mxu0
    %v3459 = vpop.f32.mrf.mxu0
    %v3460 = vadd.f32 0.0, %v3459
    %v3461 = vpop.f32.mrf.mxu0
    %3462 = vdwg.mxu0
    %v3464 = vsel %vm269, %v3124, 0
    %v3467 = vsel %vm1263, %v3133, 0
    %3469 = vmatprep.subr.bf16.mxu0 0
    %3470 = vmatpush1.bf16.msra.mxu0 0
    %3471 = vmatprep.subr.bf16.mxu0 0
    %3472 = vmatpush1.bf16.msra.mxu0 0
    %3473 = vmatprep.subr.bf16.mxu0 0
    %3474 = vmatpush1.bf16.msra.mxu0 0
    %3475 = vmatprep.subr.bf16.mxu0 0
    %3476 = vmatpush1.bf16.msra.mxu0 0
    %3477 = vmatprep.subr.bf16.mxu0 0
    %3478 = vmatpush1.bf16.msra.mxu0 0
    %3479 = vmatprep.subr.bf16.mxu0 0
    %3480 = vmatpush1.bf16.msra.mxu0 0
    %3481 = vmatprep.subr.bf16.mxu0 0
    %3482 = vmatpush1.bf16.msra.mxu0 0
    %3483 = vmatprep.subr.bf16.mxu0 0
    %3484 = vmatpush1.bf16.msra.mxu0 %v3467
    %3485 = vmatprep.subr.bf16.mxu0 0
    %3486 = vmatpush2.bf16.msra.mxu0 0
    %3487 = vmatprep.subr.bf16.mxu0 0
    %3488 = vmatpush2.bf16.msra.mxu0 0
    %3489 = vmatprep.subr.bf16.mxu0 0
    %3490 = vmatpush2.bf16.msra.mxu0 0
    %3491 = vmatprep.subr.bf16.mxu0 0
    %3492 = vmatpush2.bf16.msra.mxu0 0
    %3493 = vmatprep.subr.bf16.mxu0 0
    %3494 = vmatpush2.bf16.msra.mxu0 0
    %3495 = vmatprep.subr.bf16.mxu0 0
    %3496 = vmatpush2.bf16.msra.mxu0 0
    %3497 = vmatprep.subr.bf16.mxu0 0
    %3498 = vmatpush2.bf16.msra.mxu0 0
    %3499 = vmatprep.subr.bf16.mxu0 0
    %3500 = vmatpush2.bf16.msra.mxu0 0
    %3501 = vmatprep.mubr.bf16.mxu0 0
    %3502 = vmatmul.mubr.bf16.gmra.mxu0 %v3464
    %v3503 = vpop.f32.mrf.mxu0
    %v3504 = vadd.f32 0.0, %v3503
    %v3505 = vpop.f32.mrf.mxu0
    %v3506 = vpop.f32.mrf.mxu0
    %v3507 = vadd.f32 0.0, %v3506
    %v3508 = vpop.f32.mrf.mxu0
    %3509 = vdwg.mxu0
    %v3510 = vsel %vm75, %v3175, 0.0
    %v3511 = vsel %vm75, %v3269, 0.0
    %v3512 = vadd.f32 %v3510, %v3511
    %v3513 = vsel %vm75, %v3363, 0.0
    %v3514 = vadd.f32 %v3512, %v3513
    %v3515 = vsel %vm75, %v3457, 0.0
    %v3516 = vadd.f32 %v3514, %v3515
    %v3517 = vsel %vm75, %v3178, 0.0
    %v3518 = vsel %vm75, %v3272, 0.0
    %v3519 = vadd.f32 %v3517, %v3518
    %v3520 = vsel %vm75, %v3366, 0.0
    %v3521 = vadd.f32 %v3519, %v3520
    %v3522 = vsel %vm75, %v3460, 0.0
    %v3523 = vadd.f32 %v3521, %v3522
    %v3524 = vsel %vm75, %v3222, 0.0
    %v3525 = vsel %vm75, %v3316, 0.0
    %v3526 = vadd.f32 %v3524, %v3525
    %v3527 = vsel %vm75, %v3410, 0.0
    %v3528 = vadd.f32 %v3526, %v3527
    %v3529 = vsel %vm75, %v3504, 0.0
    %v3530 = vadd.f32 %v3528, %v3529
    %v3531 = vsel %vm75, %v3225, 0.0
    %v3532 = vsel %vm75, %v3319, 0.0
    %v3533 = vadd.f32 %v3531, %v3532
    %v3534 = vsel %vm75, %v3413, 0.0
    %v3535 = vadd.f32 %v3533, %v3534
    %v3536 = vsel %vm75, %v3507, 0.0
    %v3537 = vadd.f32 %v3535, %v3536
    %v3538 = vadd.f32 %v1945, %v3516
    %v3539 = vadd.f32 %v1946, %v3523
    %v3540 = vadd.f32 %v1947, %v3530
    %v3541 = vadd.f32 %v1948, %v3537
    %v3542 = vld [vmem:[#allocation7 + $0x8] sm:$0x1]
    %v3543 = vlaneseq
    %v3544 = vshrl.u32 %v3543, 7
    %v3545 = vsub.s32 0, %v3544
    %v3546 = vrot.slane %v3542, %v3545
    %v3547 = vadd.f32 %v3538, %v3546
    %v3548 = vadd.f32 %v3539, %v3546
    %v3549 = vadd.f32 %v3540, %v3546
    %v3550 = vadd.f32 %v3541, %v3546
    %v3551 = vld [vmem:[#allocation7 + $0x9] sm:$0x1]
    %v3552 = vld [vmem:[#allocation7 + $0xa] sm:$0x1]
    %v3553 = vsel %vm75, %v3547, 0.0
    %3554 = vadd.xlane.f32.xlu0 %v3553
    %v3555 = vpop.xlane.xlu0 %3554
    %v3556 = vsel %vm75, %v3548, 0.0
    %3557 = vadd.xlane.f32.xlu0 %v3556
    %v3558 = vpop.xlane.xlu0 %3557
    %v3559 = vsel %vm75, %v3549, 0.0
    %3560 = vadd.xlane.f32.xlu0 %v3559
    %v3561 = vpop.xlane.xlu0 %3560
    %v3562 = vsel %vm75, %v3550, 0.0
    %3563 = vadd.xlane.f32.xlu0 %v3562
    %v3564 = vpop.xlane.xlu0 %3563
    %v3565 = vmul.f32 %v3555, %v88
    %v3566 = vmul.f32 %v3558, %v88
    %v3567 = vmul.f32 %v3561, %v88
    %v3568 = vmul.f32 %v3564, %v88
    %v3569 = vsub.f32 %v3547, %v3565
    %v3570 = vsub.f32 %v3548, %v3566
    %v3571 = vsub.f32 %v3549, %v3567
    %v3572 = vsub.f32 %v3550, %v3568
    %v3573 = vmul.f32 %v3569, %v3569
    %v3574 = vmul.f32 %v3570, %v3570
    %v3575 = vmul.f32 %v3571, %v3571
    %v3576 = vmul.f32 %v3572, %v3572
    %v3577 = vsel %vm75, %v3573, 0.0
    %3578 = vadd.xlane.f32.xlu0 %v3577
    %v3579 = vpop.xlane.xlu0 %3578
    %v3580 = vsel %vm75, %v3574, 0.0
    %3581 = vadd.xlane.f32.xlu0 %v3580
    %v3582 = vpop.xlane.xlu0 %3581
    %v3583 = vsel %vm75, %v3575, 0.0
    %3584 = vadd.xlane.f32.xlu0 %v3583
    %v3585 = vpop.xlane.xlu0 %3584
    %v3586 = vsel %vm75, %v3576, 0.0
    %3587 = vadd.xlane.f32.xlu0 %v3586
    %v3588 = vpop.xlane.xlu0 %3587
    %v3589 = vmul.f32 %v3579, %v88
    %v3590 = vmul.f32 %v3582, %v88
    %v3591 = vmul.f32 %v3585, %v88
    %v3592 = vmul.f32 %v3588, %v88
    %v3593 = vadd.f32 %v3589, 1e-05
    %v3594 = vadd.f32 %v3590, 1e-05
    %v3595 = vadd.f32 %v3591, 1e-05
    %v3596 = vadd.f32 %v3592, 1e-05
    %v3597 = vrsqrt.pop %v3593
    %v3598 = vrsqrt.pop %v3594
    %v3599 = vrsqrt.pop %v3595
    %v3600 = vrsqrt.pop %v3596
    %v3601 = vmul.f32 %v3569, %v3597
    %v3602 = vmul.f32 %v3570, %v3598
    %v3603 = vmul.f32 %v3571, %v3599
    %v3604 = vmul.f32 %v3572, %v3600
    %v3605 = vlaneseq
    %v3606 = vshrl.u32 %v3605, 7
    %v3607 = vsub.s32 0, %v3606
    %v3608 = vrot.slane %v3551, %v3607
    %v3609 = vmul.f32 %v3601, %v3608
    %v3610 = vmul.f32 %v3602, %v3608
    %v3611 = vmul.f32 %v3603, %v3608
    %v3612 = vmul.f32 %v3604, %v3608
    %v3613 = vlaneseq
    %v3614 = vshrl.u32 %v3613, 7
    %v3615 = vsub.s32 0, %v3614
    %v3616 = vrot.slane %v3552, %v3615
    %v3617 = vadd.f32 %v3609, %v3616
    %v3618 = vadd.f32 %v3610, %v3616
    %v3619 = vadd.f32 %v3611, %v3616
    %v3620 = vadd.f32 %v3612, %v3616
    %v3621 = vpack.c.bf16 %v3618, %v3617
    %v3622 = vpack.c.bf16 %v3620, %v3619
    %s3623 = scalar_lea.vmem [#allocation5], 16
    %v3624 = vld [vmem:[%s3623] sm:$0xf]
    %v3625 = vld [vmem:[%s3623 + $0x4] sm:$0xf]
    %v3626 = vld [vmem:[%s3623 + $0x8] sm:$0xf]
    %v3627 = vld [vmem:[%s3623 + $0xc] sm:$0xf]
    %v3628 = vld [vmem:[%s6 + $0x1] sm:$0x1]
    %v3629 = vlaneseq
    %v3630 = vshrl.u32 %v3629, 7
    %v3631 = vsub.s32 0, %v3630
    %v3632 = vrot.slane %v3628, %v3631
    %v3637 = vunpack.c.l.b16 %v3624
    %v3638 = vunpack.c.l.b16 %v3625
    %v3639 = vunpack.c.l.b16 %v3626
    %v3640 = vunpack.c.l.b16 %v3627
    %v3641 = vpack.c.b16 %v3638, %v3637
    %v3642 = vpack.c.b16 %v3640, %v3639
    %v3646 = vsel %vm75, %v3621, 0
    %v3649 = vsel %vm75, %v3622, 0
    %3651 = vmatprep.subr.bf16.mxu0 0
    %3652 = vmatpush1.bf16.msra.mxu0 0
    %3653 = vmatprep.subr.bf16.mxu0 0
    %3654 = vmatpush1.bf16.msra.mxu0 0
    %3655 = vmatprep.subr.bf16.mxu0 0
    %3656 = vmatpush1.bf16.msra.mxu0 0
    %3657 = vmatprep.subr.bf16.mxu0 0
    %3658 = vmatpush1.bf16.msra.mxu0 0
    %3659 = vmatprep.subr.bf16.mxu0 0
    %3660 = vmatpush1.bf16.msra.mxu0 0
    %3661 = vmatprep.subr.bf16.mxu0 0
    %3662 = vmatpush1.bf16.msra.mxu0 0
    %3663 = vmatprep.subr.bf16.mxu0 0
    %3664 = vmatpush1.bf16.msra.mxu0 %v3642
    %3665 = vmatprep.subr.bf16.mxu0 0
    %3666 = vmatpush1.bf16.msra.mxu0 %v3641
    %3667 = vmatprep.subr.bf16.mxu0 0
    %3668 = vmatpush2.bf16.msra.mxu0 0
    %3669 = vmatprep.subr.bf16.mxu0 0
    %3670 = vmatpush2.bf16.msra.mxu0 0
    %3671 = vmatprep.subr.bf16.mxu0 0
    %3672 = vmatpush2.bf16.msra.mxu0 0
    %3673 = vmatprep.subr.bf16.mxu0 0
    %3674 = vmatpush2.bf16.msra.mxu0 0
    %3675 = vmatprep.subr.bf16.mxu0 0
    %3676 = vmatpush2.bf16.msra.mxu0 0
    %3677 = vmatprep.subr.bf16.mxu0 0
    %3678 = vmatpush2.bf16.msra.mxu0 0
    %3679 = vmatprep.subr.bf16.mxu0 0
    %3680 = vmatpush2.bf16.msra.mxu0 0
    %3681 = vmatprep.subr.bf16.mxu0 0
    %3682 = vmatpush2.bf16.msra.mxu0 0
    %3683 = vmatprep.mubr.bf16.mxu0 0
    %3684 = vmatmul.mubr.bf16.gmra.mxu0 %v3646
    %v3685 = vpop.f32.mrf.mxu0
    %v3686 = vadd.f32 %v3632, %v3685
    %v3687 = vpop.f32.mrf.mxu0
    %v3688 = vpop.f32.mrf.mxu0
    %v3689 = vadd.f32 %v3632, %v3688
    %v3690 = vpop.f32.mrf.mxu0
    %3691 = vmatprep.mubr.bf16.mxu0 0
    %3692 = vmatmul.mubr.bf16.gmra.mxu0 %v3649
    %v3693 = vpop.f32.mrf.mxu0
    %v3694 = vadd.f32 %v3632, %v3693
    %v3695 = vpop.f32.mrf.mxu0
    %v3696 = vpop.f32.mrf.mxu0
    %v3697 = vadd.f32 %v3632, %v3696
    %v3698 = vpop.f32.mrf.mxu0
    %3699 = vdwg.mxu0
    %v3700 = vmul.f32 %v3686, 0.5
    %v3701 = vmul.f32 %v3689, 0.5
    %v3702 = vmul.f32 %v3694, 0.5
    %v3703 = vmul.f32 %v3697, 0.5
    %v3704 = vmul.f32 %v3686, 0.70710677
    %v3705 = vmul.f32 %v3689, 0.70710677
    %v3706 = vmul.f32 %v3694, 0.70710677
    %v3707 = vmul.f32 %v3697, 0.70710677
    %v3708 = verf.f32.pop %v3704
    %v3709 = verf.f32.pop %v3705
    %v3710 = verf.f32.pop %v3706
    %v3711 = verf.f32.pop %v3707
    %v3712 = vadd.f32 %v3708, 1.0
    %v3713 = vadd.f32 %v3709, 1.0
    %v3714 = vadd.f32 %v3710, 1.0
    %v3715 = vadd.f32 %v3711, 1.0
    %v3716 = vmul.f32 %v3700, %v3712
    %v3717 = vmul.f32 %v3701, %v3713
    %v3718 = vmul.f32 %v3702, %v3714
    %v3719 = vmul.f32 %v3703, %v3715
    %v3720 = vpack.c.bf16 %v3717, %v3716
    %v3721 = vpack.c.bf16 %v3719, %v3718
    %s3722 = scalar_lea.vmem %s4, 32
    %v3723 = vld [vmem:[%s3722] sm:$0xf]
    %v3724 = vld [vmem:[%s3722 + $0x4] sm:$0xf]
    %v3725 = vld [vmem:[%s3722 + $0x8] sm:$0xf]
    %v3726 = vld [vmem:[%s3722 + $0xc] sm:$0xf]
    %v3727 = vld [vmem:[%s3722 + $0x10] sm:$0xf]
    %v3728 = vld [vmem:[%s3722 + $0x14] sm:$0xf]
    %v3729 = vld [vmem:[%s3722 + $0x18] sm:$0xf]
    %v3730 = vld [vmem:[%s3722 + $0x1c] sm:$0xf]
    %v3739 = vunpack.c.l.b16 %v3723
    %v3740 = vunpack.c.l.b16 %v3724
    %v3741 = vunpack.c.l.b16 %v3725
    %v3742 = vunpack.c.l.b16 %v3726
    %v3743 = vunpack.c.l.b16 %v3727
    %v3744 = vunpack.c.l.b16 %v3728
    %v3745 = vunpack.c.l.b16 %v3729
    %v3746 = vunpack.c.l.b16 %v3730
    %v3747 = vpack.c.b16 %v3740, %v3739
    %v3748 = vpack.c.b16 %v3742, %v3741
    %v3749 = vpack.c.b16 %v3744, %v3743
    %v3750 = vpack.c.b16 %v3746, %v3745
    %v3756 = vsel %vm1880, %v3720, 0
    %v3759 = vsel %vm1880, %v3721, 0
    %3761 = vmatprep.subr.bf16.mxu0 0
    %3762 = vmatpush1.bf16.msra.mxu0 0
    %3763 = vmatprep.subr.bf16.mxu0 0
    %3764 = vmatpush1.bf16.msra.mxu0 0
    %3765 = vmatprep.subr.bf16.mxu0 0
    %3766 = vmatpush1.bf16.msra.mxu0 0
    %3767 = vmatprep.subr.bf16.mxu0 0
    %3768 = vmatpush1.bf16.msra.mxu0 0
    %3769 = vmatprep.subr.bf16.mxu0 0
    %3770 = vmatpush1.bf16.msra.mxu0 %v3750
    %3771 = vmatprep.subr.bf16.mxu0 0
    %3772 = vmatpush1.bf16.msra.mxu0 %v3749
    %3773 = vmatprep.subr.bf16.mxu0 0
    %3774 = vmatpush1.bf16.msra.mxu0 %v3748
    %3775 = vmatprep.subr.bf16.mxu0 0
    %3776 = vmatpush1.bf16.msra.mxu0 %v3747
    %3777 = vmatprep.subr.bf16.mxu0 0
    %3778 = vmatpush2.bf16.msra.mxu0 0
    %3779 = vmatprep.subr.bf16.mxu0 0
    %3780 = vmatpush2.bf16.msra.mxu0 0
    %3781 = vmatprep.subr.bf16.mxu0 0
    %3782 = vmatpush2.bf16.msra.mxu0 0
    %3783 = vmatprep.subr.bf16.mxu0 0
    %3784 = vmatpush2.bf16.msra.mxu0 0
    %3785 = vmatprep.subr.bf16.mxu0 0
    %3786 = vmatpush2.bf16.msra.mxu0 0
    %3787 = vmatprep.subr.bf16.mxu0 0
    %3788 = vmatpush2.bf16.msra.mxu0 0
    %3789 = vmatprep.subr.bf16.mxu0 0
    %3790 = vmatpush2.bf16.msra.mxu0 0
    %3791 = vmatprep.subr.bf16.mxu0 0
    %3792 = vmatpush2.bf16.msra.mxu0 0
    %3793 = vmatprep.mubr.bf16.mxu0 0
    %3794 = vmatmul.mubr.bf16.gmra.mxu0 %v3756
    %v3795 = vpop.f32.mrf.mxu0
    %v3796 = vadd.f32 0.0, %v3795
    %v3797 = vpop.f32.mrf.mxu0
    %v3798 = vpop.f32.mrf.mxu0
    %v3799 = vadd.f32 0.0, %v3798
    %v3800 = vpop.f32.mrf.mxu0
    %3801 = vmatprep.mubr.bf16.mxu0 0
    %3802 = vmatmul.mubr.bf16.gmra.mxu0 %v3759
    %v3803 = vpop.f32.mrf.mxu0
    %v3804 = vadd.f32 0.0, %v3803
    %v3805 = vpop.f32.mrf.mxu0
    %v3806 = vpop.f32.mrf.mxu0
    %v3807 = vadd.f32 0.0, %v3806
    %v3808 = vpop.f32.mrf.mxu0
    %3809 = vdwg.mxu0
    %v3810 = vadd.f32 %v3547, %v3796
    %v3811 = vadd.f32 %v3548, %v3799
    %v3812 = vadd.f32 %v3549, %v3804
    %v3813 = vadd.f32 %v3550, %v3807
    %v3814 = vld [vmem:[#allocation7 + $0xb] sm:$0x1]
    %v3815 = vlaneseq
    %v3816 = vshrl.u32 %v3815, 7
    %v3817 = vsub.s32 0, %v3816
    %v3818 = vrot.slane %v3814, %v3817
    %v3819 = vadd.f32 %v3810, %v3818
    %v3820 = vadd.f32 %v3811, %v3818
    %v3821 = vadd.f32 %v3812, %v3818
    %v3822 = vadd.f32 %v3813, %v3818
    %v3823 = vld [vmem:[#allocation7 + $0xc] sm:$0x1]
    %v3824 = vld [vmem:[#allocation7 + $0xd] sm:$0x1]
    %v3825 = vsel %vm75, %v3819, 0.0
    %3826 = vadd.xlane.f32.xlu0 %v3825
    %v3827 = vpop.xlane.xlu0 %3826
    %v3828 = vsel %vm75, %v3820, 0.0
    %3829 = vadd.xlane.f32.xlu0 %v3828
    %v3830 = vpop.xlane.xlu0 %3829
    %v3831 = vsel %vm75, %v3821, 0.0
    %3832 = vadd.xlane.f32.xlu0 %v3831
    %v3833 = vpop.xlane.xlu0 %3832
    %v3834 = vsel %vm75, %v3822, 0.0
    %3835 = vadd.xlane.f32.xlu0 %v3834
    %v3836 = vpop.xlane.xlu0 %3835
    %v3837 = vmul.f32 %v3827, %v88
    %v3838 = vmul.f32 %v3830, %v88
    %v3839 = vmul.f32 %v3833, %v88
    %v3840 = vmul.f32 %v3836, %v88
    %v3841 = vsub.f32 %v3819, %v3837
    %v3842 = vsub.f32 %v3820, %v3838
    %v3843 = vsub.f32 %v3821, %v3839
    %v3844 = vsub.f32 %v3822, %v3840
    %v3845 = vmul.f32 %v3841, %v3841
    %v3846 = vmul.f32 %v3842, %v3842
    %v3847 = vmul.f32 %v3843, %v3843
    %v3848 = vmul.f32 %v3844, %v3844
    %v3849 = vsel %vm75, %v3845, 0.0
    %3850 = vadd.xlane.f32.xlu0 %v3849
    %v3851 = vpop.xlane.xlu0 %3850
    %v3852 = vsel %vm75, %v3846, 0.0
    %3853 = vadd.xlane.f32.xlu0 %v3852
    %v3854 = vpop.xlane.xlu0 %3853
    %v3855 = vsel %vm75, %v3847, 0.0
    %3856 = vadd.xlane.f32.xlu0 %v3855
    %v3857 = vpop.xlane.xlu0 %3856
    %v3858 = vsel %vm75, %v3848, 0.0
    %3859 = vadd.xlane.f32.xlu0 %v3858
    %v3860 = vpop.xlane.xlu0 %3859
    %v3861 = vmul.f32 %v3851, %v88
    %v3862 = vmul.f32 %v3854, %v88
    %v3863 = vmul.f32 %v3857, %v88
    %v3864 = vmul.f32 %v3860, %v88
    %v3865 = vadd.f32 %v3861, 1e-05
    %v3866 = vadd.f32 %v3862, 1e-05
    %v3867 = vadd.f32 %v3863, 1e-05
    %v3868 = vadd.f32 %v3864, 1e-05
    %v3869 = vrsqrt.pop %v3865
    %v3870 = vrsqrt.pop %v3866
    %v3871 = vrsqrt.pop %v3867
    %v3872 = vrsqrt.pop %v3868
    %v3873 = vmul.f32 %v3841, %v3869
    %v3874 = vmul.f32 %v3842, %v3870
    %v3875 = vmul.f32 %v3843, %v3871
    %v3876 = vmul.f32 %v3844, %v3872
    %v3877 = vlaneseq
    %v3878 = vshrl.u32 %v3877, 7
    %v3879 = vsub.s32 0, %v3878
    %v3880 = vrot.slane %v3823, %v3879
    %v3881 = vmul.f32 %v3873, %v3880
    %v3882 = vmul.f32 %v3874, %v3880
    %v3883 = vmul.f32 %v3875, %v3880
    %v3884 = vmul.f32 %v3876, %v3880
    %v3885 = vlaneseq
    %v3886 = vshrl.u32 %v3885, 7
    %v3887 = vsub.s32 0, %v3886
    %v3888 = vrot.slane %v3824, %v3887
    %v3889 = vadd.f32 %v3881, %v3888
    %v3890 = vadd.f32 %v3882, %v3888
    %v3891 = vadd.f32 %v3883, %v3888
    %v3892 = vadd.f32 %v3884, %v3888
    %3893 = vst.msk [vmem:[#allocation8] sm:$0xff] %vm75, %v3889
    %3894 = vst.msk [vmem:[#allocation8 + $0x8] sm:$0xff] %vm75, %v3890
    %3895 = vst.msk [vmem:[#allocation8 + $0x10] sm:$0xff] %vm75, %v3891
    %3896 = vst.msk [vmem:[#allocation8 + $0x18] sm:$0xff] %vm75, %v3892
    // Predicated region
    $region42: #{tpu_custom_call.1} parent=1 // pred_check
      _
    $region43: #{tpu_custom_call.1} parent=1 // pred_check_branch
      %3898 = sbr.rel (0) target = $region45
    $region44: #{tpu_custom_call.1} parent=1 // pred_region
      %s3900 = ssub.s32 512, 512
      %3901 = vsyncadd [#allocation4], %s3900
      %s3902 = sshll.u32 [#allocation8], 4
      %s3903 = int_to_ptr.vmem [resolvable:$true] %s3902
      %3908 = dma.vmem_to_hbm [thread:$0]  %s3903, 512, %s7, [#allocation4], 128, 128, 8
    $region45: #{tpu_custom_call.1} parent=1 // pred_fallthru
      _
    // Predicated region
    $region46: #{tpu_custom_call.1} parent=1 // pred_check
      _
    $region47: #{tpu_custom_call.1} parent=1 // pred_check_branch
      %3910 = sbr.rel (0) target = $region49
    $region48: #{tpu_custom_call.1} parent=1 // pred_region
      %3911 = dma.done [#allocation4], 512
    $region49: #{tpu_custom_call.1} parent=1 // pred_fallthru
      _
    %3912 = vsyncpa [#allocation3], 1
    %3913 = vsyncpa [#allocation6], 1
    %3914 = vsyncpa [#allocation4], 1

</llo_original>
